<compile_context>
chip_gen: v7x
topology: tpu7x:2x2x1
jax: 0.10.0
libtpu: 0.0.40
codegen_flags: <defaults>
</compile_context>

<pallas_src>
import jax
import jax.numpy as jnp
from jax.experimental import pallas as pl
from jax.experimental.pallas import tpu as pltpu

# ----------------------------- model dims (small) -----------------------------
SRC_VOCAB = 32
TRG_VOCAB = 32          # decoder.vocab_size
EMB_DIM = 16
HID_DIM = 32
SRC_LEN = 8
TRG_LEN = 8
BATCH = 8

VPAD = 128              # lane-dense padded logits / decoder one-hot width
NEG_INF = -1e9          # padded logit columns carry this bias -> never chosen by argmax


# ----------------------------- fused forward kernel -----------------------------
def seq2seq_kernel(src_oh_ref, trg_oh_ref, tf_ref,
                   enc_wi_ref, enc_bi_ref, enc_wh_ref, enc_bh_ref,
                   dec_tokw_ref, dec_wic_ref, dec_bi_ref, dec_wh_ref, dec_bh_ref,
                   fch_ref, fcc_ref, fcb_ref,
                   out_ref):
    f32 = jnp.float32
    H = HID_DIM
    T = trg_oh_ref.shape[0]
    B = trg_oh_ref.shape[1]
    L = src_oh_ref.shape[0] // B

    def gru(gi, gh, h):
        # gi/gh are (B, 3H) with gate order [r | z | n]; matches PyTorch GRU
        # (b_hn stays inside r * (h @ W_hn + b_hn)).
        r = jax.nn.sigmoid(gi[:, :H] + gh[:, :H])
        z = jax.nn.sigmoid(gi[:, H:2 * H] + gh[:, H:2 * H])
        n = jnp.tanh(gi[:, 2 * H:] + r * gh[:, 2 * H:])
        return (1.0 - z) * n + z * h

    # ---------------- encoder ----------------
    # All L*B input-gate projections in ONE batched matmul (embedding already folded
    # into enc_wi), so the serial recurrence only does h @ W_hh per step.
    gi_all = (jnp.dot(src_oh_ref[...], enc_wi_ref[...], preferred_element_type=f32)
              + enc_bi_ref[...])                                                # (L*B, 3H)

    enc_wh = enc_wh_ref[...]
    enc_bh_b = jnp.broadcast_to(enc_bh_ref[...], (B, 3 * H))

    h = jnp.zeros((B, H), f32)
    for t in range(L):                                   # tiny fully-unrolled recurrence
        gh = jnp.dot(h, enc_wh, preferred_element_type=f32) + enc_bh_b
        h = gru(gi_all[t * B:(t + 1) * B], gh, h)        # static sublane-aligned slices
    context = h                                                                  # (B, H)

    # ---------------- decoder: hoisted loop invariants ----------------
    dec_tokw = dec_tokw_ref[...]                          # (VPAD, 2*VPAD): [gates | logits]
    dec_wh = dec_wh_ref[...]
    dec_bh_b = jnp.broadcast_to(dec_bh_ref[...], (B, 3 * H))
    fch = fch_ref[...]

    # context never changes -> its gate/logit contributions are computed exactly once.
    gi_ctx = (jnp.dot(context, dec_wic_ref[...], preferred_element_type=f32)
              + dec_bi_ref[...])                                                # (B, 3H)
    fc_ctx = (jnp.dot(context, fcc_ref[...], preferred_element_type=f32)
              + fcb_ref[...])                                                   # (B, VPAD)

    ids = jax.lax.broadcasted_iota(jnp.int32, (B, VPAD), 1)
    pad_mask = jnp.where(ids < TRG_VOCAB, 0.0, NEG_INF).astype(f32)  # robust argmax mask

    out_ref[0] = jnp.zeros((B, VPAD), f32)       # outputs[0] stays zero (as in PyTorch)

    # ---------------- decoder: fused time loop ----------------
    def dec_step(t, carry):
        h, inp_oh = carry                                            # (B,H), (B,VPAD)

        # Single token-path matmul: one 256-wide MXU pass on v6e/v7x
        # (gates in lanes 0:96, logits in lanes 128:256).
        tok = jnp.dot(inp_oh, dec_tokw, preferred_element_type=f32)  # (B, 2*VPAD)

        gi = tok[:, :3 * H] + gi_ctx
        gh = jnp.dot(h, dec_wh, preferred_element_type=f32) + dec_bh_b
        h_new = gru(gi, gh, h)

        # fc_out on concat(emb, new_hidden, context); kept as a sum of dots so Mosaic
        # can accumulate in the MXU result buffer on v7x.
        logits = (tok[:, VPAD:]
                  + jnp.dot(h_new, fch, preferred_element_type=f32)
                  + fc_ctx)                                          # (B, VPAD)
        out_ref[t] = logits

        # greedy next token as a one-hot: first VALID index attaining the row max
        masked = logits + pad_mask
        mx = jnp.max(masked, axis=1, keepdims=True)                  # (B, 1)
        cand = jnp.where(masked >= mx, ids, jnp.int32(VPAD))
        top1 = jnp.min(cand, axis=1, keepdims=True)                  # (B, 1)
        top1_oh = (ids == top1).astype(f32)                          # (B, VPAD)

        # teacher forcing select (scalar flag from SMEM): single vselect
        tf_vec = jnp.broadcast_to(tf_ref[t], (B, VPAD))
        next_oh = jnp.where(tf_vec == 1, trg_oh_ref[t], top1_oh)
        return h_new, next_oh

    jax.lax.fori_loop(1, T, dec_step, (context, trg_oh_ref[0]), unroll=True)


# ----------------------------- parameters -----------------------------
def init_params(key):
    ks = iter(jax.random.split(key, 16))
    H, E, V, SV = HID_DIM, EMB_DIM, TRG_VOCAB, SRC_VOCAB
    s = 1.0 / jnp.sqrt(jnp.float32(H))

    def w(shape, scale=s):
        return jax.random.normal(next(ks), shape, jnp.float32) * scale

    # ---- "raw" module parameters (same parametrization as the PyTorch model) ----
    enc_emb = w((SV, E), 1.0)
    dec_emb = w((V, E), 1.0)
    enc_wi, enc_wh = w((E, 3 * H)), w((H, 3 * H))      # gate-fused [r | z | n]
    enc_bi, enc_bh = w((1, 3 * H)), w((1, 3 * H))
    dec_wie, dec_wic, dec_wh = w((E, 3 * H)), w((H, 3 * H)), w((H, 3 * H))
    dec_bi, dec_bh = w((1, 3 * H)), w((1, 3 * H))
    fce, fch, fcc, fcb = w((E, V)), w((H, V)), w((H, V)), w((1, V))

    # ---- offline folding / lane-padding into kernel-ready arrays ----
    p = {}
    # encoder: fold embedding into the input-gate weights -> (SV, 3H)
    p['enc_wi_f'] = enc_emb @ enc_wi
    p['enc_bi'], p['enc_wh'], p['enc_bh'] = enc_bi, enc_wh, enc_bh

    # decoder token path: fold embedding into gate & fc weights, concat along N.
    dec_emb_pad = jnp.zeros((VPAD, E), jnp.float32).at[:V].set(dec_emb)
    fce_pad = jnp.zeros((E, VPAD), jnp.float32).at[:, :V].set(fce)
    tok_gates = dec_emb_pad @ dec_wie                  # (VPAD, 3H)
    tok_logits = dec_emb_pad @ fce_pad                 # (VPAD, VPAD)
    dec_tok_w = jnp.zeros((VPAD, 2 * VPAD), jnp.float32)
    dec_tok_w = dec_tok_w.at[:, :3 * H].set(tok_gates).at[:, VPAD:].set(tok_logits)
    p['dec_tok_w'] = dec_tok_w

    p['dec_wic'], p['dec_bi'] = dec_wic, dec_bi
    p['dec_wh'], p['dec_bh'] = dec_wh, dec_bh

    # fc_out hidden / context weights, lane-padded to VPAD columns; padded bias = -1e9.
    p['fch'] = jnp.zeros((H, VPAD), jnp.float32).at[:, :V].set(fch)
    p['fcc'] = jnp.zeros((H, VPAD), jnp.float32).at[:, :V].set(fcc)
    p['fcb_pad'] = jnp.full((1, VPAD), NEG_INF, jnp.float32).at[:, :V].set(fcb)
    return p


# ----------------------------- Seq2Seq forward (wrapper) -----------------------------
def seq2seq_forward(src, trg, params, teacher_forcing_ratio=0.5, tf_key=None):
    if tf_key is None:
        tf_key = jax.random.PRNGKey(123)
    src_len, batch = src.shape
    trg_len, _ = trg.shape

    # one-time glue before the single kernel launch
    src_oh = jax.nn.one_hot(src.reshape(src_len * batch), SRC_VOCAB,
                            dtype=jnp.float32)                       # (L*B, SV)
    trg_oh = jax.nn.one_hot(trg, VPAD, dtype=jnp.float32)            # (T, B, VPAD)
    tf_flags = (jax.random.uniform(tf_key, (trg_len,))
                < teacher_forcing_ratio).astype(jnp.int32)           # (T,)

    args = [src_oh, trg_oh, tf_flags,
            params['enc_wi_f'], params['enc_bi'], params['enc_wh'], params['enc_bh'],
            params['dec_tok_w'], params['dec_wic'], params['dec_bi'],
            params['dec_wh'], params['dec_bh'],
            params['fch'], params['fcc'], params['fcb_pad']]

    vmem = pl.BlockSpec(memory_space=pltpu.MemorySpace.VMEM)
    smem = pl.BlockSpec(memory_space=pltpu.MemorySpace.SMEM)
    in_specs = [vmem, vmem, smem] + [vmem] * 12

    out_pad = pl.pallas_call(
        seq2seq_kernel,
        out_shape=jax.ShapeDtypeStruct((trg_len, batch, VPAD), jnp.float32),
        in_specs=in_specs,
        out_specs=pl.BlockSpec(memory_space=pltpu.MemorySpace.VMEM),
    )(*args)

    return out_pad[:, :, :TRG_VOCAB]                                 # (T, B, V)


# ----------------------------- main -----------------------------
if __name__ == "__main__":
    key = jax.random.PRNGKey(0)
    k_p, k_src, k_trg = jax.random.split(key, 3)

    params = init_params(k_p)
    src = jax.random.randint(k_src, (SRC_LEN, BATCH), 0, SRC_VOCAB, dtype=jnp.int32)
    trg = jax.random.randint(k_trg, (TRG_LEN, BATCH), 0, TRG_VOCAB, dtype=jnp.int32)

    fwd = jax.jit(seq2seq_forward)
    outputs = jax.block_until_ready(fwd(src, trg, params))

    assert outputs.shape == (TRG_LEN, BATCH, TRG_VOCAB)
    assert outputs.dtype == jnp.float32
    assert bool(jnp.all(outputs[0] == 0.0))
    assert bool(jnp.all(jnp.isfinite(outputs)))
    print("KERNEL_OK")
</pallas_src>

<mosaic_0001>
module attributes {stable_mosaic.version = 11 : i64} {
  func.func @seq2seq_kernel(%arg0: memref<64x32xf32, #tpu.memory_space<vmem>>, %arg1: memref<8x8x128xf32, #tpu.memory_space<vmem>>, %arg2: memref<8xi32, #tpu.memory_space<smem>>, %arg3: memref<32x96xf32, #tpu.memory_space<vmem>>, %arg4: memref<1x96xf32, #tpu.memory_space<vmem>>, %arg5: memref<32x96xf32, #tpu.memory_space<vmem>>, %arg6: memref<1x96xf32, #tpu.memory_space<vmem>>, %arg7: memref<128x256xf32, #tpu.memory_space<vmem>>, %arg8: memref<32x96xf32, #tpu.memory_space<vmem>>, %arg9: memref<1x96xf32, #tpu.memory_space<vmem>>, %arg10: memref<32x96xf32, #tpu.memory_space<vmem>>, %arg11: memref<1x96xf32, #tpu.memory_space<vmem>>, %arg12: memref<32x128xf32, #tpu.memory_space<vmem>>, %arg13: memref<32x128xf32, #tpu.memory_space<vmem>>, %arg14: memref<1x128xf32, #tpu.memory_space<vmem>>, %arg15: memref<8x8x128xf32, #tpu.memory_space<vmem>>) attributes {dimension_semantics = [], scalar_prefetch = 0 : i64, scratch_operands = 0 : i64, tpu.core_type = #tpu.core_type<tc>} {
    %c0 = arith.constant 0 : index
    %c0_0 = arith.constant 0 : index
    %0 = vector.load %arg0[%c0, %c0_0] : memref<64x32xf32, #tpu.memory_space<vmem>>, vector<64x32xf32>
    %c0_1 = arith.constant 0 : index
    %c0_2 = arith.constant 0 : index
    %1 = vector.load %arg3[%c0_1, %c0_2] : memref<32x96xf32, #tpu.memory_space<vmem>>, vector<32x96xf32>
    %cst = arith.constant dense<0.000000e+00> : vector<64x96xf32>
    %2 = tpu.matmul %0, %1, %cst {dimension_numbers = #tpu.dot_dimension_numbers<[1], [0], [0], [1], [0, 0, 1, 1], [], []>} : vector<64x32xf32>, vector<32x96xf32>, vector<64x96xf32> -> vector<64x96xf32>
    %c0_3 = arith.constant 0 : index
    %c0_4 = arith.constant 0 : index
    %3 = vector.load %arg4[%c0_3, %c0_4] : memref<1x96xf32, #tpu.memory_space<vmem>>, vector<1x96xf32>
    %4 = vector.broadcast %3 : vector<1x96xf32> to vector<64x96xf32>
    %5 = arith.addf %2, %4 : vector<64x96xf32>
    %c0_5 = arith.constant 0 : index
    %c0_6 = arith.constant 0 : index
    %6 = vector.load %arg5[%c0_5, %c0_6] : memref<32x96xf32, #tpu.memory_space<vmem>>, vector<32x96xf32>
    %c0_7 = arith.constant 0 : index
    %c0_8 = arith.constant 0 : index
    %7 = vector.load %arg6[%c0_7, %c0_8] : memref<1x96xf32, #tpu.memory_space<vmem>>, vector<1x96xf32>
    %8 = vector.shape_cast %7 : vector<1x96xf32> to vector<1x96xf32>
    %9 = vector.broadcast %8 : vector<1x96xf32> to vector<8x96xf32>
    %cst_9 = arith.constant 0.000000e+00 : f32
    %10 = vector.broadcast %cst_9 : f32 to vector<8x32xf32>
    %cst_10 = arith.constant dense<0.000000e+00> : vector<8x96xf32>
    %11 = tpu.matmul %10, %6, %cst_10 {dimension_numbers = #tpu.dot_dimension_numbers<[1], [0], [0], [1], [0, 0, 1, 1], [], []>} : vector<8x32xf32>, vector<32x96xf32>, vector<8x96xf32> -> vector<8x96xf32>
    %12 = arith.addf %11, %9 : vector<8x96xf32>
    %13 = vector.extract_strided_slice %5 {offsets = [0, 0], sizes = [8, 96], strides = [1, 1]} : vector<64x96xf32> to vector<8x96xf32>
    %14 = vector.extract_strided_slice %13 {offsets = [0, 0], sizes = [8, 32], strides = [1, 1]} : vector<8x96xf32> to vector<8x32xf32>
    %15 = vector.extract_strided_slice %12 {offsets = [0, 0], sizes = [8, 32], strides = [1, 1]} : vector<8x96xf32> to vector<8x32xf32>
    %16 = arith.addf %14, %15 : vector<8x32xf32>
    %17 = arith.negf %16 : vector<8x32xf32>
    %18 = math.exp %17 : vector<8x32xf32>
    %cst_11 = arith.constant 1.000000e+00 : f32
    %19 = vector.broadcast %cst_11 : f32 to vector<8x32xf32>
    %20 = arith.addf %19, %18 : vector<8x32xf32>
    %21 = arith.divf %19, %20 : vector<8x32xf32>
    %22 = vector.extract_strided_slice %13 {offsets = [0, 32], sizes = [8, 32], strides = [1, 1]} : vector<8x96xf32> to vector<8x32xf32>
    %23 = vector.extract_strided_slice %12 {offsets = [0, 32], sizes = [8, 32], strides = [1, 1]} : vector<8x96xf32> to vector<8x32xf32>
    %24 = arith.addf %22, %23 : vector<8x32xf32>
    %25 = arith.negf %24 : vector<8x32xf32>
    %26 = math.exp %25 : vector<8x32xf32>
    %cst_12 = arith.constant 1.000000e+00 : f32
    %27 = vector.broadcast %cst_12 : f32 to vector<8x32xf32>
    %28 = arith.addf %27, %26 : vector<8x32xf32>
    %29 = arith.divf %27, %28 : vector<8x32xf32>
    %30 = vector.extract_strided_slice %13 {offsets = [0, 64], sizes = [8, 32], strides = [1, 1]} : vector<8x96xf32> to vector<8x32xf32>
    %31 = vector.extract_strided_slice %12 {offsets = [0, 64], sizes = [8, 32], strides = [1, 1]} : vector<8x96xf32> to vector<8x32xf32>
    %32 = arith.mulf %21, %31 : vector<8x32xf32>
    %33 = arith.addf %30, %32 : vector<8x32xf32>
    %34 = math.tanh %33 : vector<8x32xf32>
    %cst_13 = arith.constant 1.000000e+00 : f32
    %35 = vector.broadcast %cst_13 : f32 to vector<8x32xf32>
    %36 = arith.subf %35, %29 : vector<8x32xf32>
    %37 = arith.mulf %36, %34 : vector<8x32xf32>
    %38 = arith.mulf %29, %10 : vector<8x32xf32>
    %39 = arith.addf %37, %38 : vector<8x32xf32>
    %cst_14 = arith.constant dense<0.000000e+00> : vector<8x96xf32>
    %40 = tpu.matmul %39, %6, %cst_14 {dimension_numbers = #tpu.dot_dimension_numbers<[1], [0], [0], [1], [0, 0, 1, 1], [], []>} : vector<8x32xf32>, vector<32x96xf32>, vector<8x96xf32> -> vector<8x96xf32>
    %41 = arith.addf %40, %9 : vector<8x96xf32>
    %42 = vector.extract_strided_slice %5 {offsets = [8, 0], sizes = [8, 96], strides = [1, 1]} : vector<64x96xf32> to vector<8x96xf32>
    %43 = vector.extract_strided_slice %42 {offsets = [0, 0], sizes = [8, 32], strides = [1, 1]} : vector<8x96xf32> to vector<8x32xf32>
    %44 = vector.extract_strided_slice %41 {offsets = [0, 0], sizes = [8, 32], strides = [1, 1]} : vector<8x96xf32> to vector<8x32xf32>
    %45 = arith.addf %43, %44 : vector<8x32xf32>
    %46 = arith.negf %45 : vector<8x32xf32>
    %47 = math.exp %46 : vector<8x32xf32>
    %cst_15 = arith.constant 1.000000e+00 : f32
    %48 = vector.broadcast %cst_15 : f32 to vector<8x32xf32>
    %49 = arith.addf %48, %47 : vector<8x32xf32>
    %50 = arith.divf %48, %49 : vector<8x32xf32>
    %51 = vector.extract_strided_slice %42 {offsets = [0, 32], sizes = [8, 32], strides = [1, 1]} : vector<8x96xf32> to vector<8x32xf32>
    %52 = vector.extract_strided_slice %41 {offsets = [0, 32], sizes = [8, 32], strides = [1, 1]} : vector<8x96xf32> to vector<8x32xf32>
    %53 = arith.addf %51, %52 : vector<8x32xf32>
    %54 = arith.negf %53 : vector<8x32xf32>
    %55 = math.exp %54 : vector<8x32xf32>
    %cst_16 = arith.constant 1.000000e+00 : f32
    %56 = vector.broadcast %cst_16 : f32 to vector<8x32xf32>
    %57 = arith.addf %56, %55 : vector<8x32xf32>
    %58 = arith.divf %56, %57 : vector<8x32xf32>
    %59 = vector.extract_strided_slice %42 {offsets = [0, 64], sizes = [8, 32], strides = [1, 1]} : vector<8x96xf32> to vector<8x32xf32>
    %60 = vector.extract_strided_slice %41 {offsets = [0, 64], sizes = [8, 32], strides = [1, 1]} : vector<8x96xf32> to vector<8x32xf32>
    %61 = arith.mulf %50, %60 : vector<8x32xf32>
    %62 = arith.addf %59, %61 : vector<8x32xf32>
    %63 = math.tanh %62 : vector<8x32xf32>
    %cst_17 = arith.constant 1.000000e+00 : f32
    %64 = vector.broadcast %cst_17 : f32 to vector<8x32xf32>
    %65 = arith.subf %64, %58 : vector<8x32xf32>
    %66 = arith.mulf %65, %63 : vector<8x32xf32>
    %67 = arith.mulf %58, %39 : vector<8x32xf32>
    %68 = arith.addf %66, %67 : vector<8x32xf32>
    %cst_18 = arith.constant dense<0.000000e+00> : vector<8x96xf32>
    %69 = tpu.matmul %68, %6, %cst_18 {dimension_numbers = #tpu.dot_dimension_numbers<[1], [0], [0], [1], [0, 0, 1, 1], [], []>} : vector<8x32xf32>, vector<32x96xf32>, vector<8x96xf32> -> vector<8x96xf32>
    %70 = arith.addf %69, %9 : vector<8x96xf32>
    %71 = vector.extract_strided_slice %5 {offsets = [16, 0], sizes = [8, 96], strides = [1, 1]} : vector<64x96xf32> to vector<8x96xf32>
    %72 = vector.extract_strided_slice %71 {offsets = [0, 0], sizes = [8, 32], strides = [1, 1]} : vector<8x96xf32> to vector<8x32xf32>
    %73 = vector.extract_strided_slice %70 {offsets = [0, 0], sizes = [8, 32], strides = [1, 1]} : vector<8x96xf32> to vector<8x32xf32>
    %74 = arith.addf %72, %73 : vector<8x32xf32>
    %75 = arith.negf %74 : vector<8x32xf32>
    %76 = math.exp %75 : vector<8x32xf32>
    %cst_19 = arith.constant 1.000000e+00 : f32
    %77 = vector.broadcast %cst_19 : f32 to vector<8x32xf32>
    %78 = arith.addf %77, %76 : vector<8x32xf32>
    %79 = arith.divf %77, %78 : vector<8x32xf32>
    %80 = vector.extract_strided_slice %71 {offsets = [0, 32], sizes = [8, 32], strides = [1, 1]} : vector<8x96xf32> to vector<8x32xf32>
    %81 = vector.extract_strided_slice %70 {offsets = [0, 32], sizes = [8, 32], strides = [1, 1]} : vector<8x96xf32> to vector<8x32xf32>
    %82 = arith.addf %80, %81 : vector<8x32xf32>
    %83 = arith.negf %82 : vector<8x32xf32>
    %84 = math.exp %83 : vector<8x32xf32>
    %cst_20 = arith.constant 1.000000e+00 : f32
    %85 = vector.broadcast %cst_20 : f32 to vector<8x32xf32>
    %86 = arith.addf %85, %84 : vector<8x32xf32>
    %87 = arith.divf %85, %86 : vector<8x32xf32>
    %88 = vector.extract_strided_slice %71 {offsets = [0, 64], sizes = [8, 32], strides = [1, 1]} : vector<8x96xf32> to vector<8x32xf32>
    %89 = vector.extract_strided_slice %70 {offsets = [0, 64], sizes = [8, 32], strides = [1, 1]} : vector<8x96xf32> to vector<8x32xf32>
    %90 = arith.mulf %79, %89 : vector<8x32xf32>
    %91 = arith.addf %88, %90 : vector<8x32xf32>
    %92 = math.tanh %91 : vector<8x32xf32>
    %cst_21 = arith.constant 1.000000e+00 : f32
    %93 = vector.broadcast %cst_21 : f32 to vector<8x32xf32>
    %94 = arith.subf %93, %87 : vector<8x32xf32>
    %95 = arith.mulf %94, %92 : vector<8x32xf32>
    %96 = arith.mulf %87, %68 : vector<8x32xf32>
    %97 = arith.addf %95, %96 : vector<8x32xf32>
    %cst_22 = arith.constant dense<0.000000e+00> : vector<8x96xf32>
    %98 = tpu.matmul %97, %6, %cst_22 {dimension_numbers = #tpu.dot_dimension_numbers<[1], [0], [0], [1], [0, 0, 1, 1], [], []>} : vector<8x32xf32>, vector<32x96xf32>, vector<8x96xf32> -> vector<8x96xf32>
    %99 = arith.addf %98, %9 : vector<8x96xf32>
    %100 = vector.extract_strided_slice %5 {offsets = [24, 0], sizes = [8, 96], strides = [1, 1]} : vector<64x96xf32> to vector<8x96xf32>
    %101 = vector.extract_strided_slice %100 {offsets = [0, 0], sizes = [8, 32], strides = [1, 1]} : vector<8x96xf32> to vector<8x32xf32>
    %102 = vector.extract_strided_slice %99 {offsets = [0, 0], sizes = [8, 32], strides = [1, 1]} : vector<8x96xf32> to vector<8x32xf32>
    %103 = arith.addf %101, %102 : vector<8x32xf32>
    %104 = arith.negf %103 : vector<8x32xf32>
    %105 = math.exp %104 : vector<8x32xf32>
    %cst_23 = arith.constant 1.000000e+00 : f32
    %106 = vector.broadcast %cst_23 : f32 to vector<8x32xf32>
    %107 = arith.addf %106, %105 : vector<8x32xf32>
    %108 = arith.divf %106, %107 : vector<8x32xf32>
    %109 = vector.extract_strided_slice %100 {offsets = [0, 32], sizes = [8, 32], strides = [1, 1]} : vector<8x96xf32> to vector<8x32xf32>
    %110 = vector.extract_strided_slice %99 {offsets = [0, 32], sizes = [8, 32], strides = [1, 1]} : vector<8x96xf32> to vector<8x32xf32>
    %111 = arith.addf %109, %110 : vector<8x32xf32>
    %112 = arith.negf %111 : vector<8x32xf32>
    %113 = math.exp %112 : vector<8x32xf32>
    %cst_24 = arith.constant 1.000000e+00 : f32
    %114 = vector.broadcast %cst_24 : f32 to vector<8x32xf32>
    %115 = arith.addf %114, %113 : vector<8x32xf32>
    %116 = arith.divf %114, %115 : vector<8x32xf32>
    %117 = vector.extract_strided_slice %100 {offsets = [0, 64], sizes = [8, 32], strides = [1, 1]} : vector<8x96xf32> to vector<8x32xf32>
    %118 = vector.extract_strided_slice %99 {offsets = [0, 64], sizes = [8, 32], strides = [1, 1]} : vector<8x96xf32> to vector<8x32xf32>
    %119 = arith.mulf %108, %118 : vector<8x32xf32>
    %120 = arith.addf %117, %119 : vector<8x32xf32>
    %121 = math.tanh %120 : vector<8x32xf32>
    %cst_25 = arith.constant 1.000000e+00 : f32
    %122 = vector.broadcast %cst_25 : f32 to vector<8x32xf32>
    %123 = arith.subf %122, %116 : vector<8x32xf32>
    %124 = arith.mulf %123, %121 : vector<8x32xf32>
    %125 = arith.mulf %116, %97 : vector<8x32xf32>
    %126 = arith.addf %124, %125 : vector<8x32xf32>
    %cst_26 = arith.constant dense<0.000000e+00> : vector<8x96xf32>
    %127 = tpu.matmul %126, %6, %cst_26 {dimension_numbers = #tpu.dot_dimension_numbers<[1], [0], [0], [1], [0, 0, 1, 1], [], []>} : vector<8x32xf32>, vector<32x96xf32>, vector<8x96xf32> -> vector<8x96xf32>
    %128 = arith.addf %127, %9 : vector<8x96xf32>
    %129 = vector.extract_strided_slice %5 {offsets = [32, 0], sizes = [8, 96], strides = [1, 1]} : vector<64x96xf32> to vector<8x96xf32>
    %130 = vector.extract_strided_slice %129 {offsets = [0, 0], sizes = [8, 32], strides = [1, 1]} : vector<8x96xf32> to vector<8x32xf32>
    %131 = vector.extract_strided_slice %128 {offsets = [0, 0], sizes = [8, 32], strides = [1, 1]} : vector<8x96xf32> to vector<8x32xf32>
    %132 = arith.addf %130, %131 : vector<8x32xf32>
    %133 = arith.negf %132 : vector<8x32xf32>
    %134 = math.exp %133 : vector<8x32xf32>
    %cst_27 = arith.constant 1.000000e+00 : f32
    %135 = vector.broadcast %cst_27 : f32 to vector<8x32xf32>
    %136 = arith.addf %135, %134 : vector<8x32xf32>
    %137 = arith.divf %135, %136 : vector<8x32xf32>
    %138 = vector.extract_strided_slice %129 {offsets = [0, 32], sizes = [8, 32], strides = [1, 1]} : vector<8x96xf32> to vector<8x32xf32>
    %139 = vector.extract_strided_slice %128 {offsets = [0, 32], sizes = [8, 32], strides = [1, 1]} : vector<8x96xf32> to vector<8x32xf32>
    %140 = arith.addf %138, %139 : vector<8x32xf32>
    %141 = arith.negf %140 : vector<8x32xf32>
    %142 = math.exp %141 : vector<8x32xf32>
    %cst_28 = arith.constant 1.000000e+00 : f32
    %143 = vector.broadcast %cst_28 : f32 to vector<8x32xf32>
    %144 = arith.addf %143, %142 : vector<8x32xf32>
    %145 = arith.divf %143, %144 : vector<8x32xf32>
    %146 = vector.extract_strided_slice %129 {offsets = [0, 64], sizes = [8, 32], strides = [1, 1]} : vector<8x96xf32> to vector<8x32xf32>
    %147 = vector.extract_strided_slice %128 {offsets = [0, 64], sizes = [8, 32], strides = [1, 1]} : vector<8x96xf32> to vector<8x32xf32>
    %148 = arith.mulf %137, %147 : vector<8x32xf32>
    %149 = arith.addf %146, %148 : vector<8x32xf32>
    %150 = math.tanh %149 : vector<8x32xf32>
    %cst_29 = arith.constant 1.000000e+00 : f32
    %151 = vector.broadcast %cst_29 : f32 to vector<8x32xf32>
    %152 = arith.subf %151, %145 : vector<8x32xf32>
    %153 = arith.mulf %152, %150 : vector<8x32xf32>
    %154 = arith.mulf %145, %126 : vector<8x32xf32>
    %155 = arith.addf %153, %154 : vector<8x32xf32>
    %cst_30 = arith.constant dense<0.000000e+00> : vector<8x96xf32>
    %156 = tpu.matmul %155, %6, %cst_30 {dimension_numbers = #tpu.dot_dimension_numbers<[1], [0], [0], [1], [0, 0, 1, 1], [], []>} : vector<8x32xf32>, vector<32x96xf32>, vector<8x96xf32> -> vector<8x96xf32>
    %157 = arith.addf %156, %9 : vector<8x96xf32>
    %158 = vector.extract_strided_slice %5 {offsets = [40, 0], sizes = [8, 96], strides = [1, 1]} : vector<64x96xf32> to vector<8x96xf32>
    %159 = vector.extract_strided_slice %158 {offsets = [0, 0], sizes = [8, 32], strides = [1, 1]} : vector<8x96xf32> to vector<8x32xf32>
    %160 = vector.extract_strided_slice %157 {offsets = [0, 0], sizes = [8, 32], strides = [1, 1]} : vector<8x96xf32> to vector<8x32xf32>
    %161 = arith.addf %159, %160 : vector<8x32xf32>
    %162 = arith.negf %161 : vector<8x32xf32>
    %163 = math.exp %162 : vector<8x32xf32>
    %cst_31 = arith.constant 1.000000e+00 : f32
    %164 = vector.broadcast %cst_31 : f32 to vector<8x32xf32>
    %165 = arith.addf %164, %163 : vector<8x32xf32>
    %166 = arith.divf %164, %165 : vector<8x32xf32>
    %167 = vector.extract_strided_slice %158 {offsets = [0, 32], sizes = [8, 32], strides = [1, 1]} : vector<8x96xf32> to vector<8x32xf32>
    %168 = vector.extract_strided_slice %157 {offsets = [0, 32], sizes = [8, 32], strides = [1, 1]} : vector<8x96xf32> to vector<8x32xf32>
    %169 = arith.addf %167, %168 : vector<8x32xf32>
    %170 = arith.negf %169 : vector<8x32xf32>
    %171 = math.exp %170 : vector<8x32xf32>
    %cst_32 = arith.constant 1.000000e+00 : f32
    %172 = vector.broadcast %cst_32 : f32 to vector<8x32xf32>
    %173 = arith.addf %172, %171 : vector<8x32xf32>
    %174 = arith.divf %172, %173 : vector<8x32xf32>
    %175 = vector.extract_strided_slice %158 {offsets = [0, 64], sizes = [8, 32], strides = [1, 1]} : vector<8x96xf32> to vector<8x32xf32>
    %176 = vector.extract_strided_slice %157 {offsets = [0, 64], sizes = [8, 32], strides = [1, 1]} : vector<8x96xf32> to vector<8x32xf32>
    %177 = arith.mulf %166, %176 : vector<8x32xf32>
    %178 = arith.addf %175, %177 : vector<8x32xf32>
    %179 = math.tanh %178 : vector<8x32xf32>
    %cst_33 = arith.constant 1.000000e+00 : f32
    %180 = vector.broadcast %cst_33 : f32 to vector<8x32xf32>
    %181 = arith.subf %180, %174 : vector<8x32xf32>
    %182 = arith.mulf %181, %179 : vector<8x32xf32>
    %183 = arith.mulf %174, %155 : vector<8x32xf32>
    %184 = arith.addf %182, %183 : vector<8x32xf32>
    %cst_34 = arith.constant dense<0.000000e+00> : vector<8x96xf32>
    %185 = tpu.matmul %184, %6, %cst_34 {dimension_numbers = #tpu.dot_dimension_numbers<[1], [0], [0], [1], [0, 0, 1, 1], [], []>} : vector<8x32xf32>, vector<32x96xf32>, vector<8x96xf32> -> vector<8x96xf32>
    %186 = arith.addf %185, %9 : vector<8x96xf32>
    %187 = vector.extract_strided_slice %5 {offsets = [48, 0], sizes = [8, 96], strides = [1, 1]} : vector<64x96xf32> to vector<8x96xf32>
    %188 = vector.extract_strided_slice %187 {offsets = [0, 0], sizes = [8, 32], strides = [1, 1]} : vector<8x96xf32> to vector<8x32xf32>
    %189 = vector.extract_strided_slice %186 {offsets = [0, 0], sizes = [8, 32], strides = [1, 1]} : vector<8x96xf32> to vector<8x32xf32>
    %190 = arith.addf %188, %189 : vector<8x32xf32>
    %191 = arith.negf %190 : vector<8x32xf32>
    %192 = math.exp %191 : vector<8x32xf32>
    %cst_35 = arith.constant 1.000000e+00 : f32
    %193 = vector.broadcast %cst_35 : f32 to vector<8x32xf32>
    %194 = arith.addf %193, %192 : vector<8x32xf32>
    %195 = arith.divf %193, %194 : vector<8x32xf32>
    %196 = vector.extract_strided_slice %187 {offsets = [0, 32], sizes = [8, 32], strides = [1, 1]} : vector<8x96xf32> to vector<8x32xf32>
    %197 = vector.extract_strided_slice %186 {offsets = [0, 32], sizes = [8, 32], strides = [1, 1]} : vector<8x96xf32> to vector<8x32xf32>
    %198 = arith.addf %196, %197 : vector<8x32xf32>
    %199 = arith.negf %198 : vector<8x32xf32>
    %200 = math.exp %199 : vector<8x32xf32>
    %cst_36 = arith.constant 1.000000e+00 : f32
    %201 = vector.broadcast %cst_36 : f32 to vector<8x32xf32>
    %202 = arith.addf %201, %200 : vector<8x32xf32>
    %203 = arith.divf %201, %202 : vector<8x32xf32>
    %204 = vector.extract_strided_slice %187 {offsets = [0, 64], sizes = [8, 32], strides = [1, 1]} : vector<8x96xf32> to vector<8x32xf32>
    %205 = vector.extract_strided_slice %186 {offsets = [0, 64], sizes = [8, 32], strides = [1, 1]} : vector<8x96xf32> to vector<8x32xf32>
    %206 = arith.mulf %195, %205 : vector<8x32xf32>
    %207 = arith.addf %204, %206 : vector<8x32xf32>
    %208 = math.tanh %207 : vector<8x32xf32>
    %cst_37 = arith.constant 1.000000e+00 : f32
    %209 = vector.broadcast %cst_37 : f32 to vector<8x32xf32>
    %210 = arith.subf %209, %203 : vector<8x32xf32>
    %211 = arith.mulf %210, %208 : vector<8x32xf32>
    %212 = arith.mulf %203, %184 : vector<8x32xf32>
    %213 = arith.addf %211, %212 : vector<8x32xf32>
    %cst_38 = arith.constant dense<0.000000e+00> : vector<8x96xf32>
    %214 = tpu.matmul %213, %6, %cst_38 {dimension_numbers = #tpu.dot_dimension_numbers<[1], [0], [0], [1], [0, 0, 1, 1], [], []>} : vector<8x32xf32>, vector<32x96xf32>, vector<8x96xf32> -> vector<8x96xf32>
    %215 = arith.addf %214, %9 : vector<8x96xf32>
    %216 = vector.extract_strided_slice %5 {offsets = [56, 0], sizes = [8, 96], strides = [1, 1]} : vector<64x96xf32> to vector<8x96xf32>
    %217 = vector.extract_strided_slice %216 {offsets = [0, 0], sizes = [8, 32], strides = [1, 1]} : vector<8x96xf32> to vector<8x32xf32>
    %218 = vector.extract_strided_slice %215 {offsets = [0, 0], sizes = [8, 32], strides = [1, 1]} : vector<8x96xf32> to vector<8x32xf32>
    %219 = arith.addf %217, %218 : vector<8x32xf32>
    %220 = arith.negf %219 : vector<8x32xf32>
    %221 = math.exp %220 : vector<8x32xf32>
    %cst_39 = arith.constant 1.000000e+00 : f32
    %222 = vector.broadcast %cst_39 : f32 to vector<8x32xf32>
    %223 = arith.addf %222, %221 : vector<8x32xf32>
    %224 = arith.divf %222, %223 : vector<8x32xf32>
    %225 = vector.extract_strided_slice %216 {offsets = [0, 32], sizes = [8, 32], strides = [1, 1]} : vector<8x96xf32> to vector<8x32xf32>
    %226 = vector.extract_strided_slice %215 {offsets = [0, 32], sizes = [8, 32], strides = [1, 1]} : vector<8x96xf32> to vector<8x32xf32>
    %227 = arith.addf %225, %226 : vector<8x32xf32>
    %228 = arith.negf %227 : vector<8x32xf32>
    %229 = math.exp %228 : vector<8x32xf32>
    %cst_40 = arith.constant 1.000000e+00 : f32
    %230 = vector.broadcast %cst_40 : f32 to vector<8x32xf32>
    %231 = arith.addf %230, %229 : vector<8x32xf32>
    %232 = arith.divf %230, %231 : vector<8x32xf32>
    %233 = vector.extract_strided_slice %216 {offsets = [0, 64], sizes = [8, 32], strides = [1, 1]} : vector<8x96xf32> to vector<8x32xf32>
    %234 = vector.extract_strided_slice %215 {offsets = [0, 64], sizes = [8, 32], strides = [1, 1]} : vector<8x96xf32> to vector<8x32xf32>
    %235 = arith.mulf %224, %234 : vector<8x32xf32>
    %236 = arith.addf %233, %235 : vector<8x32xf32>
    %237 = math.tanh %236 : vector<8x32xf32>
    %cst_41 = arith.constant 1.000000e+00 : f32
    %238 = vector.broadcast %cst_41 : f32 to vector<8x32xf32>
    %239 = arith.subf %238, %232 : vector<8x32xf32>
    %240 = arith.mulf %239, %237 : vector<8x32xf32>
    %241 = arith.mulf %232, %213 : vector<8x32xf32>
    %242 = arith.addf %240, %241 : vector<8x32xf32>
    %c0_42 = arith.constant 0 : index
    %c0_43 = arith.constant 0 : index
    %243 = vector.load %arg7[%c0_42, %c0_43] : memref<128x256xf32, #tpu.memory_space<vmem>>, vector<128x256xf32>
    %c0_44 = arith.constant 0 : index
    %c0_45 = arith.constant 0 : index
    %244 = vector.load %arg10[%c0_44, %c0_45] : memref<32x96xf32, #tpu.memory_space<vmem>>, vector<32x96xf32>
    %c0_46 = arith.constant 0 : index
    %c0_47 = arith.constant 0 : index
    %245 = vector.load %arg11[%c0_46, %c0_47] : memref<1x96xf32, #tpu.memory_space<vmem>>, vector<1x96xf32>
    %246 = vector.shape_cast %245 : vector<1x96xf32> to vector<1x96xf32>
    %247 = vector.broadcast %246 : vector<1x96xf32> to vector<8x96xf32>
    %c0_48 = arith.constant 0 : index
    %c0_49 = arith.constant 0 : index
    %248 = vector.load %arg12[%c0_48, %c0_49] : memref<32x128xf32, #tpu.memory_space<vmem>>, vector<32x128xf32>
    %c0_50 = arith.constant 0 : index
    %c0_51 = arith.constant 0 : index
    %249 = vector.load %arg8[%c0_50, %c0_51] : memref<32x96xf32, #tpu.memory_space<vmem>>, vector<32x96xf32>
    %cst_52 = arith.constant dense<0.000000e+00> : vector<8x96xf32>
    %250 = tpu.matmul %242, %249, %cst_52 {dimension_numbers = #tpu.dot_dimension_numbers<[1], [0], [0], [1], [0, 0, 1, 1], [], []>} : vector<8x32xf32>, vector<32x96xf32>, vector<8x96xf32> -> vector<8x96xf32>
    %c0_53 = arith.constant 0 : index
    %c0_54 = arith.constant 0 : index
    %251 = vector.load %arg9[%c0_53, %c0_54] : memref<1x96xf32, #tpu.memory_space<vmem>>, vector<1x96xf32>
    %252 = vector.broadcast %251 : vector<1x96xf32> to vector<8x96xf32>
    %253 = arith.addf %250, %252 : vector<8x96xf32>
    %c0_55 = arith.constant 0 : index
    %c0_56 = arith.constant 0 : index
    %254 = vector.load %arg13[%c0_55, %c0_56] : memref<32x128xf32, #tpu.memory_space<vmem>>, vector<32x128xf32>
    %cst_57 = arith.constant dense<0.000000e+00> : vector<8x128xf32>
    %255 = tpu.matmul %242, %254, %cst_57 {dimension_numbers = #tpu.dot_dimension_numbers<[1], [0], [0], [1], [0, 0, 1, 1], [], []>} : vector<8x32xf32>, vector<32x128xf32>, vector<8x128xf32> -> vector<8x128xf32>
    %c0_58 = arith.constant 0 : index
    %c0_59 = arith.constant 0 : index
    %256 = vector.load %arg14[%c0_58, %c0_59] : memref<1x128xf32, #tpu.memory_space<vmem>>, vector<1x128xf32>
    %257 = vector.broadcast %256 : vector<1x128xf32> to vector<8x128xf32>
    %258 = arith.addf %255, %257 : vector<8x128xf32>
    %259 = tpu.iota {dimensions = array<i32: 1>} : vector<8x128xi32>
    %c32_i32 = arith.constant 32 : i32
    %260 = vector.broadcast %c32_i32 : i32 to vector<8x128xi32>
    %261 = arith.cmpi slt, %259, %260 : vector<8x128xi32>
    %cst_60 = arith.constant 0.000000e+00 : f32
    %cst_61 = arith.constant -1.000000e+09 : f32
    %262 = vector.broadcast %cst_60 : f32 to vector<8x128xf32>
    %263 = vector.broadcast %cst_61 : f32 to vector<8x128xf32>
    %264 = arith.select %261, %262, %263 : vector<8x128xi1>, vector<8x128xf32>
    %cst_62 = arith.constant 0.000000e+00 : f32
    %265 = vector.broadcast %cst_62 : f32 to vector<8x128xf32>
    %c0_63 = arith.constant 0 : index
    %c0_64 = arith.constant 0 : index
    %c0_65 = arith.constant 0 : index
    %266 = vector.load %arg15[%c0_63, %c0_64, %c0_65] : memref<8x8x128xf32, #tpu.memory_space<vmem>>, vector<1x8x128xf32>
    %267 = vector.shape_cast %266 : vector<1x8x128xf32> to vector<8x128xf32>
    %268 = vector.shape_cast %265 : vector<8x128xf32> to vector<1x8x128xf32>
    tpu.vector_store %arg15[%c0_63, %c0_64, %c0_65], %268 {strides = array<i32>} : memref<8x8x128xf32, #tpu.memory_space<vmem>>, vector<1x8x128xf32>,
    %c0_66 = arith.constant 0 : index
    %c0_67 = arith.constant 0 : index
    %c0_68 = arith.constant 0 : index
    %269 = vector.load %arg1[%c0_66, %c0_67, %c0_68] : memref<8x8x128xf32, #tpu.memory_space<vmem>>, vector<1x8x128xf32>
    %270 = vector.shape_cast %269 : vector<1x8x128xf32> to vector<8x128xf32>
    %c1_i32 = arith.constant 1 : i32
    %cst_69 = arith.constant dense<0.000000e+00> : vector<8x256xf32>
    %271 = tpu.matmul %270, %243, %cst_69 {dimension_numbers = #tpu.dot_dimension_numbers<[1], [0], [0], [1], [0, 0, 1, 1], [], []>} : vector<8x128xf32>, vector<128x256xf32>, vector<8x256xf32> -> vector<8x256xf32>
    %272 = vector.extract_strided_slice %271 {offsets = [0, 0], sizes = [8, 96], strides = [1, 1]} : vector<8x256xf32> to vector<8x96xf32>
    %273 = arith.addf %272, %253 : vector<8x96xf32>
    %cst_70 = arith.constant dense<0.000000e+00> : vector<8x96xf32>
    %274 = tpu.matmul %242, %244, %cst_70 {dimension_numbers = #tpu.dot_dimension_numbers<[1], [0], [0], [1], [0, 0, 1, 1], [], []>} : vector<8x32xf32>, vector<32x96xf32>, vector<8x96xf32> -> vector<8x96xf32>
    %275 = arith.addf %274, %247 : vector<8x96xf32>
    %276 = vector.extract_strided_slice %273 {offsets = [0, 0], sizes = [8, 32], strides = [1, 1]} : vector<8x96xf32> to vector<8x32xf32>
    %277 = vector.extract_strided_slice %275 {offsets = [0, 0], sizes = [8, 32], strides = [1, 1]} : vector<8x96xf32> to vector<8x32xf32>
    %278 = arith.addf %276, %277 : vector<8x32xf32>
    %279 = arith.negf %278 : vector<8x32xf32>
    %280 = math.exp %279 : vector<8x32xf32>
    %cst_71 = arith.constant 1.000000e+00 : f32
    %281 = vector.broadcast %cst_71 : f32 to vector<8x32xf32>
    %282 = arith.addf %281, %280 : vector<8x32xf32>
    %283 = arith.divf %281, %282 : vector<8x32xf32>
    %284 = vector.extract_strided_slice %273 {offsets = [0, 32], sizes = [8, 32], strides = [1, 1]} : vector<8x96xf32> to vector<8x32xf32>
    %285 = vector.extract_strided_slice %275 {offsets = [0, 32], sizes = [8, 32], strides = [1, 1]} : vector<8x96xf32> to vector<8x32xf32>
    %286 = arith.addf %284, %285 : vector<8x32xf32>
    %287 = arith.negf %286 : vector<8x32xf32>
    %288 = math.exp %287 : vector<8x32xf32>
    %cst_72 = arith.constant 1.000000e+00 : f32
    %289 = vector.broadcast %cst_72 : f32 to vector<8x32xf32>
    %290 = arith.addf %289, %288 : vector<8x32xf32>
    %291 = arith.divf %289, %290 : vector<8x32xf32>
    %292 = vector.extract_strided_slice %273 {offsets = [0, 64], sizes = [8, 32], strides = [1, 1]} : vector<8x96xf32> to vector<8x32xf32>
    %293 = vector.extract_strided_slice %275 {offsets = [0, 64], sizes = [8, 32], strides = [1, 1]} : vector<8x96xf32> to vector<8x32xf32>
    %294 = arith.mulf %283, %293 : vector<8x32xf32>
    %295 = arith.addf %292, %294 : vector<8x32xf32>
    %296 = math.tanh %295 : vector<8x32xf32>
    %cst_73 = arith.constant 1.000000e+00 : f32
    %297 = vector.broadcast %cst_73 : f32 to vector<8x32xf32>
    %298 = arith.subf %297, %291 : vector<8x32xf32>
    %299 = arith.mulf %298, %296 : vector<8x32xf32>
    %300 = arith.mulf %291, %242 : vector<8x32xf32>
    %301 = arith.addf %299, %300 : vector<8x32xf32>
    %302 = vector.extract_strided_slice %271 {offsets = [0, 128], sizes = [8, 128], strides = [1, 1]} : vector<8x256xf32> to vector<8x128xf32>
    %cst_74 = arith.constant dense<0.000000e+00> : vector<8x128xf32>
    %303 = tpu.matmul %301, %248, %cst_74 {dimension_numbers = #tpu.dot_dimension_numbers<[1], [0], [0], [1], [0, 0, 1, 1], [], []>} : vector<8x32xf32>, vector<32x128xf32>, vector<8x128xf32> -> vector<8x128xf32>
    %304 = arith.addf %302, %303 : vector<8x128xf32>
    %305 = arith.addf %304, %258 : vector<8x128xf32>
    %306 = arith.index_cast %c1_i32 : i32 to index
    %c0_75 = arith.constant 0 : index
    %c0_76 = arith.constant 0 : index
    %307 = vector.load %arg15[%306, %c0_75, %c0_76] : memref<8x8x128xf32, #tpu.memory_space<vmem>>, vector<1x8x128xf32>
    %308 = vector.shape_cast %307 : vector<1x8x128xf32> to vector<8x128xf32>
    %309 = vector.shape_cast %305 : vector<8x128xf32> to vector<1x8x128xf32>
    tpu.vector_store %arg15[%306, %c0_75, %c0_76], %309 {strides = array<i32>} : memref<8x8x128xf32, #tpu.memory_space<vmem>>, vector<1x8x128xf32>,
    %310 = arith.addf %305, %264 : vector<8x128xf32>
    %cst_77 = arith.constant dense<0xFF800000> : vector<8xf32>
    %311 = vector.multi_reduction <maximumf>, %310, %cst_77 [1] : vector<8x128xf32> to vector<8xf32>
    %312 = vector.shape_cast %311 : vector<8xf32> to vector<8x1xf32>
    %313 = vector.broadcast %312 : vector<8x1xf32> to vector<8x128xf32>
    %314 = arith.cmpf oge, %310, %313 : vector<8x128xf32>
    %c128_i32 = arith.constant 128 : i32
    %315 = vector.broadcast %c128_i32 : i32 to vector<8x128xi32>
    %316 = arith.select %314, %259, %315 : vector<8x128xi1>, vector<8x128xi32>
    %cst_78 = arith.constant dense<2147483647> : vector<8xi32>
    %317 = vector.multi_reduction <minsi>, %316, %cst_78 [1] : vector<8x128xi32> to vector<8xi32>
    %318 = vector.shape_cast %317 : vector<8xi32> to vector<8x1xi32>
    %319 = vector.broadcast %318 : vector<8x1xi32> to vector<8x128xi32>
    %320 = arith.cmpi eq, %259, %319 : vector<8x128xi32>
    %321 = arith.extui %320 : vector<8x128xi1> to vector<8x128xi32>
    %322 = arith.sitofp %321 : vector<8x128xi32> to vector<8x128xf32>
    %323 = arith.index_cast %c1_i32 : i32 to index
    %324 = memref.load %arg2[%323] : memref<8xi32, #tpu.memory_space<smem>>
    %325 = vector.broadcast %324 : i32 to vector<8x128xi32>
    %c1_i32_79 = arith.constant 1 : i32
    %326 = vector.broadcast %c1_i32_79 : i32 to vector<8x128xi32>
    %327 = arith.cmpi eq, %325, %326 : vector<8x128xi32>
    %328 = arith.index_cast %c1_i32 : i32 to index
    %c0_80 = arith.constant 0 : index
    %c0_81 = arith.constant 0 : index
    %329 = vector.load %arg1[%328, %c0_80, %c0_81] : memref<8x8x128xf32, #tpu.memory_space<vmem>>, vector<1x8x128xf32>
    %330 = vector.shape_cast %329 : vector<1x8x128xf32> to vector<8x128xf32>
    %331 = arith.select %327, %330, %322 : vector<8x128xi1>, vector<8x128xf32>
    %c2_i32 = arith.constant 2 : i32
    %cst_82 = arith.constant dense<0.000000e+00> : vector<8x256xf32>
    %332 = tpu.matmul %331, %243, %cst_82 {dimension_numbers = #tpu.dot_dimension_numbers<[1], [0], [0], [1], [0, 0, 1, 1], [], []>} : vector<8x128xf32>, vector<128x256xf32>, vector<8x256xf32> -> vector<8x256xf32>
    %333 = vector.extract_strided_slice %332 {offsets = [0, 0], sizes = [8, 96], strides = [1, 1]} : vector<8x256xf32> to vector<8x96xf32>
    %334 = arith.addf %333, %253 : vector<8x96xf32>
    %cst_83 = arith.constant dense<0.000000e+00> : vector<8x96xf32>
    %335 = tpu.matmul %301, %244, %cst_83 {dimension_numbers = #tpu.dot_dimension_numbers<[1], [0], [0], [1], [0, 0, 1, 1], [], []>} : vector<8x32xf32>, vector<32x96xf32>, vector<8x96xf32> -> vector<8x96xf32>
    %336 = arith.addf %335, %247 : vector<8x96xf32>
    %337 = vector.extract_strided_slice %334 {offsets = [0, 0], sizes = [8, 32], strides = [1, 1]} : vector<8x96xf32> to vector<8x32xf32>
    %338 = vector.extract_strided_slice %336 {offsets = [0, 0], sizes = [8, 32], strides = [1, 1]} : vector<8x96xf32> to vector<8x32xf32>
    %339 = arith.addf %337, %338 : vector<8x32xf32>
    %340 = arith.negf %339 : vector<8x32xf32>
    %341 = math.exp %340 : vector<8x32xf32>
    %cst_84 = arith.constant 1.000000e+00 : f32
    %342 = vector.broadcast %cst_84 : f32 to vector<8x32xf32>
    %343 = arith.addf %342, %341 : vector<8x32xf32>
    %344 = arith.divf %342, %343 : vector<8x32xf32>
    %345 = vector.extract_strided_slice %334 {offsets = [0, 32], sizes = [8, 32], strides = [1, 1]} : vector<8x96xf32> to vector<8x32xf32>
    %346 = vector.extract_strided_slice %336 {offsets = [0, 32], sizes = [8, 32], strides = [1, 1]} : vector<8x96xf32> to vector<8x32xf32>
    %347 = arith.addf %345, %346 : vector<8x32xf32>
    %348 = arith.negf %347 : vector<8x32xf32>
    %349 = math.exp %348 : vector<8x32xf32>
    %cst_85 = arith.constant 1.000000e+00 : f32
    %350 = vector.broadcast %cst_85 : f32 to vector<8x32xf32>
    %351 = arith.addf %350, %349 : vector<8x32xf32>
    %352 = arith.divf %350, %351 : vector<8x32xf32>
    %353 = vector.extract_strided_slice %334 {offsets = [0, 64], sizes = [8, 32], strides = [1, 1]} : vector<8x96xf32> to vector<8x32xf32>
    %354 = vector.extract_strided_slice %336 {offsets = [0, 64], sizes = [8, 32], strides = [1, 1]} : vector<8x96xf32> to vector<8x32xf32>
    %355 = arith.mulf %344, %354 : vector<8x32xf32>
    %356 = arith.addf %353, %355 : vector<8x32xf32>
    %357 = math.tanh %356 : vector<8x32xf32>
    %cst_86 = arith.constant 1.000000e+00 : f32
    %358 = vector.broadcast %cst_86 : f32 to vector<8x32xf32>
    %359 = arith.subf %358, %352 : vector<8x32xf32>
    %360 = arith.mulf %359, %357 : vector<8x32xf32>
    %361 = arith.mulf %352, %301 : vector<8x32xf32>
    %362 = arith.addf %360, %361 : vector<8x32xf32>
    %363 = vector.extract_strided_slice %332 {offsets = [0, 128], sizes = [8, 128], strides = [1, 1]} : vector<8x256xf32> to vector<8x128xf32>
    %cst_87 = arith.constant dense<0.000000e+00> : vector<8x128xf32>
    %364 = tpu.matmul %362, %248, %cst_87 {dimension_numbers = #tpu.dot_dimension_numbers<[1], [0], [0], [1], [0, 0, 1, 1], [], []>} : vector<8x32xf32>, vector<32x128xf32>, vector<8x128xf32> -> vector<8x128xf32>
    %365 = arith.addf %363, %364 : vector<8x128xf32>
    %366 = arith.addf %365, %258 : vector<8x128xf32>
    %367 = arith.index_cast %c2_i32 : i32 to index
    %c0_88 = arith.constant 0 : index
    %c0_89 = arith.constant 0 : index
    %368 = vector.load %arg15[%367, %c0_88, %c0_89] : memref<8x8x128xf32, #tpu.memory_space<vmem>>, vector<1x8x128xf32>
    %369 = vector.shape_cast %368 : vector<1x8x128xf32> to vector<8x128xf32>
    %370 = vector.shape_cast %366 : vector<8x128xf32> to vector<1x8x128xf32>
    tpu.vector_store %arg15[%367, %c0_88, %c0_89], %370 {strides = array<i32>} : memref<8x8x128xf32, #tpu.memory_space<vmem>>, vector<1x8x128xf32>,
    %371 = arith.addf %366, %264 : vector<8x128xf32>
    %cst_90 = arith.constant dense<0xFF800000> : vector<8xf32>
    %372 = vector.multi_reduction <maximumf>, %371, %cst_90 [1] : vector<8x128xf32> to vector<8xf32>
    %373 = vector.shape_cast %372 : vector<8xf32> to vector<8x1xf32>
    %374 = vector.broadcast %373 : vector<8x1xf32> to vector<8x128xf32>
    %375 = arith.cmpf oge, %371, %374 : vector<8x128xf32>
    %c128_i32_91 = arith.constant 128 : i32
    %376 = vector.broadcast %c128_i32_91 : i32 to vector<8x128xi32>
    %377 = arith.select %375, %259, %376 : vector<8x128xi1>, vector<8x128xi32>
    %cst_92 = arith.constant dense<2147483647> : vector<8xi32>
    %378 = vector.multi_reduction <minsi>, %377, %cst_92 [1] : vector<8x128xi32> to vector<8xi32>
    %379 = vector.shape_cast %378 : vector<8xi32> to vector<8x1xi32>
    %380 = vector.broadcast %379 : vector<8x1xi32> to vector<8x128xi32>
    %381 = arith.cmpi eq, %259, %380 : vector<8x128xi32>
    %382 = arith.extui %381 : vector<8x128xi1> to vector<8x128xi32>
    %383 = arith.sitofp %382 : vector<8x128xi32> to vector<8x128xf32>
    %384 = arith.index_cast %c2_i32 : i32 to index
    %385 = memref.load %arg2[%384] : memref<8xi32, #tpu.memory_space<smem>>
    %386 = vector.broadcast %385 : i32 to vector<8x128xi32>
    %c1_i32_93 = arith.constant 1 : i32
    %387 = vector.broadcast %c1_i32_93 : i32 to vector<8x128xi32>
    %388 = arith.cmpi eq, %386, %387 : vector<8x128xi32>
    %389 = arith.index_cast %c2_i32 : i32 to index
    %c0_94 = arith.constant 0 : index
    %c0_95 = arith.constant 0 : index
    %390 = vector.load %arg1[%389, %c0_94, %c0_95] : memref<8x8x128xf32, #tpu.memory_space<vmem>>, vector<1x8x128xf32>
    %391 = vector.shape_cast %390 : vector<1x8x128xf32> to vector<8x128xf32>
    %392 = arith.select %388, %391, %383 : vector<8x128xi1>, vector<8x128xf32>
    %c3_i32 = arith.constant 3 : i32
    %cst_96 = arith.constant dense<0.000000e+00> : vector<8x256xf32>
    %393 = tpu.matmul %392, %243, %cst_96 {dimension_numbers = #tpu.dot_dimension_numbers<[1], [0], [0], [1], [0, 0, 1, 1], [], []>} : vector<8x128xf32>, vector<128x256xf32>, vector<8x256xf32> -> vector<8x256xf32>
    %394 = vector.extract_strided_slice %393 {offsets = [0, 0], sizes = [8, 96], strides = [1, 1]} : vector<8x256xf32> to vector<8x96xf32>
    %395 = arith.addf %394, %253 : vector<8x96xf32>
    %cst_97 = arith.constant dense<0.000000e+00> : vector<8x96xf32>
    %396 = tpu.matmul %362, %244, %cst_97 {dimension_numbers = #tpu.dot_dimension_numbers<[1], [0], [0], [1], [0, 0, 1, 1], [], []>} : vector<8x32xf32>, vector<32x96xf32>, vector<8x96xf32> -> vector<8x96xf32>
    %397 = arith.addf %396, %247 : vector<8x96xf32>
    %398 = vector.extract_strided_slice %395 {offsets = [0, 0], sizes = [8, 32], strides = [1, 1]} : vector<8x96xf32> to vector<8x32xf32>
    %399 = vector.extract_strided_slice %397 {offsets = [0, 0], sizes = [8, 32], strides = [1, 1]} : vector<8x96xf32> to vector<8x32xf32>
    %400 = arith.addf %398, %399 : vector<8x32xf32>
    %401 = arith.negf %400 : vector<8x32xf32>
    %402 = math.exp %401 : vector<8x32xf32>
    %cst_98 = arith.constant 1.000000e+00 : f32
    %403 = vector.broadcast %cst_98 : f32 to vector<8x32xf32>
    %404 = arith.addf %403, %402 : vector<8x32xf32>
    %405 = arith.divf %403, %404 : vector<8x32xf32>
    %406 = vector.extract_strided_slice %395 {offsets = [0, 32], sizes = [8, 32], strides = [1, 1]} : vector<8x96xf32> to vector<8x32xf32>
    %407 = vector.extract_strided_slice %397 {offsets = [0, 32], sizes = [8, 32], strides = [1, 1]} : vector<8x96xf32> to vector<8x32xf32>
    %408 = arith.addf %406, %407 : vector<8x32xf32>
    %409 = arith.negf %408 : vector<8x32xf32>
    %410 = math.exp %409 : vector<8x32xf32>
    %cst_99 = arith.constant 1.000000e+00 : f32
    %411 = vector.broadcast %cst_99 : f32 to vector<8x32xf32>
    %412 = arith.addf %411, %410 : vector<8x32xf32>
    %413 = arith.divf %411, %412 : vector<8x32xf32>
    %414 = vector.extract_strided_slice %395 {offsets = [0, 64], sizes = [8, 32], strides = [1, 1]} : vector<8x96xf32> to vector<8x32xf32>
    %415 = vector.extract_strided_slice %397 {offsets = [0, 64], sizes = [8, 32], strides = [1, 1]} : vector<8x96xf32> to vector<8x32xf32>
    %416 = arith.mulf %405, %415 : vector<8x32xf32>
    %417 = arith.addf %414, %416 : vector<8x32xf32>
    %418 = math.tanh %417 : vector<8x32xf32>
    %cst_100 = arith.constant 1.000000e+00 : f32
    %419 = vector.broadcast %cst_100 : f32 to vector<8x32xf32>
    %420 = arith.subf %419, %413 : vector<8x32xf32>
    %421 = arith.mulf %420, %418 : vector<8x32xf32>
    %422 = arith.mulf %413, %362 : vector<8x32xf32>
    %423 = arith.addf %421, %422 : vector<8x32xf32>
    %424 = vector.extract_strided_slice %393 {offsets = [0, 128], sizes = [8, 128], strides = [1, 1]} : vector<8x256xf32> to vector<8x128xf32>
    %cst_101 = arith.constant dense<0.000000e+00> : vector<8x128xf32>
    %425 = tpu.matmul %423, %248, %cst_101 {dimension_numbers = #tpu.dot_dimension_numbers<[1], [0], [0], [1], [0, 0, 1, 1], [], []>} : vector<8x32xf32>, vector<32x128xf32>, vector<8x128xf32> -> vector<8x128xf32>
    %426 = arith.addf %424, %425 : vector<8x128xf32>
    %427 = arith.addf %426, %258 : vector<8x128xf32>
    %428 = arith.index_cast %c3_i32 : i32 to index
    %c0_102 = arith.constant 0 : index
    %c0_103 = arith.constant 0 : index
    %429 = vector.load %arg15[%428, %c0_102, %c0_103] : memref<8x8x128xf32, #tpu.memory_space<vmem>>, vector<1x8x128xf32>
    %430 = vector.shape_cast %429 : vector<1x8x128xf32> to vector<8x128xf32>
    %431 = vector.shape_cast %427 : vector<8x128xf32> to vector<1x8x128xf32>
    tpu.vector_store %arg15[%428, %c0_102, %c0_103], %431 {strides = array<i32>} : memref<8x8x128xf32, #tpu.memory_space<vmem>>, vector<1x8x128xf32>,
    %432 = arith.addf %427, %264 : vector<8x128xf32>
    %cst_104 = arith.constant dense<0xFF800000> : vector<8xf32>
    %433 = vector.multi_reduction <maximumf>, %432, %cst_104 [1] : vector<8x128xf32> to vector<8xf32>
    %434 = vector.shape_cast %433 : vector<8xf32> to vector<8x1xf32>
    %435 = vector.broadcast %434 : vector<8x1xf32> to vector<8x128xf32>
    %436 = arith.cmpf oge, %432, %435 : vector<8x128xf32>
    %c128_i32_105 = arith.constant 128 : i32
    %437 = vector.broadcast %c128_i32_105 : i32 to vector<8x128xi32>
    %438 = arith.select %436, %259, %437 : vector<8x128xi1>, vector<8x128xi32>
    %cst_106 = arith.constant dense<2147483647> : vector<8xi32>
    %439 = vector.multi_reduction <minsi>, %438, %cst_106 [1] : vector<8x128xi32> to vector<8xi32>
    %440 = vector.shape_cast %439 : vector<8xi32> to vector<8x1xi32>
    %441 = vector.broadcast %440 : vector<8x1xi32> to vector<8x128xi32>
    %442 = arith.cmpi eq, %259, %441 : vector<8x128xi32>
    %443 = arith.extui %442 : vector<8x128xi1> to vector<8x128xi32>
    %444 = arith.sitofp %443 : vector<8x128xi32> to vector<8x128xf32>
    %445 = arith.index_cast %c3_i32 : i32 to index
    %446 = memref.load %arg2[%445] : memref<8xi32, #tpu.memory_space<smem>>
    %447 = vector.broadcast %446 : i32 to vector<8x128xi32>
    %c1_i32_107 = arith.constant 1 : i32
    %448 = vector.broadcast %c1_i32_107 : i32 to vector<8x128xi32>
    %449 = arith.cmpi eq, %447, %448 : vector<8x128xi32>
    %450 = arith.index_cast %c3_i32 : i32 to index
    %c0_108 = arith.constant 0 : index
    %c0_109 = arith.constant 0 : index
    %451 = vector.load %arg1[%450, %c0_108, %c0_109] : memref<8x8x128xf32, #tpu.memory_space<vmem>>, vector<1x8x128xf32>
    %452 = vector.shape_cast %451 : vector<1x8x128xf32> to vector<8x128xf32>
    %453 = arith.select %449, %452, %444 : vector<8x128xi1>, vector<8x128xf32>
    %c4_i32 = arith.constant 4 : i32
    %cst_110 = arith.constant dense<0.000000e+00> : vector<8x256xf32>
    %454 = tpu.matmul %453, %243, %cst_110 {dimension_numbers = #tpu.dot_dimension_numbers<[1], [0], [0], [1], [0, 0, 1, 1], [], []>} : vector<8x128xf32>, vector<128x256xf32>, vector<8x256xf32> -> vector<8x256xf32>
    %455 = vector.extract_strided_slice %454 {offsets = [0, 0], sizes = [8, 96], strides = [1, 1]} : vector<8x256xf32> to vector<8x96xf32>
    %456 = arith.addf %455, %253 : vector<8x96xf32>
    %cst_111 = arith.constant dense<0.000000e+00> : vector<8x96xf32>
    %457 = tpu.matmul %423, %244, %cst_111 {dimension_numbers = #tpu.dot_dimension_numbers<[1], [0], [0], [1], [0, 0, 1, 1], [], []>} : vector<8x32xf32>, vector<32x96xf32>, vector<8x96xf32> -> vector<8x96xf32>
    %458 = arith.addf %457, %247 : vector<8x96xf32>
    %459 = vector.extract_strided_slice %456 {offsets = [0, 0], sizes = [8, 32], strides = [1, 1]} : vector<8x96xf32> to vector<8x32xf32>
    %460 = vector.extract_strided_slice %458 {offsets = [0, 0], sizes = [8, 32], strides = [1, 1]} : vector<8x96xf32> to vector<8x32xf32>
    %461 = arith.addf %459, %460 : vector<8x32xf32>
    %462 = arith.negf %461 : vector<8x32xf32>
    %463 = math.exp %462 : vector<8x32xf32>
    %cst_112 = arith.constant 1.000000e+00 : f32
    %464 = vector.broadcast %cst_112 : f32 to vector<8x32xf32>
    %465 = arith.addf %464, %463 : vector<8x32xf32>
    %466 = arith.divf %464, %465 : vector<8x32xf32>
    %467 = vector.extract_strided_slice %456 {offsets = [0, 32], sizes = [8, 32], strides = [1, 1]} : vector<8x96xf32> to vector<8x32xf32>
    %468 = vector.extract_strided_slice %458 {offsets = [0, 32], sizes = [8, 32], strides = [1, 1]} : vector<8x96xf32> to vector<8x32xf32>
    %469 = arith.addf %467, %468 : vector<8x32xf32>
    %470 = arith.negf %469 : vector<8x32xf32>
    %471 = math.exp %470 : vector<8x32xf32>
    %cst_113 = arith.constant 1.000000e+00 : f32
    %472 = vector.broadcast %cst_113 : f32 to vector<8x32xf32>
    %473 = arith.addf %472, %471 : vector<8x32xf32>
    %474 = arith.divf %472, %473 : vector<8x32xf32>
    %475 = vector.extract_strided_slice %456 {offsets = [0, 64], sizes = [8, 32], strides = [1, 1]} : vector<8x96xf32> to vector<8x32xf32>
    %476 = vector.extract_strided_slice %458 {offsets = [0, 64], sizes = [8, 32], strides = [1, 1]} : vector<8x96xf32> to vector<8x32xf32>
    %477 = arith.mulf %466, %476 : vector<8x32xf32>
    %478 = arith.addf %475, %477 : vector<8x32xf32>
    %479 = math.tanh %478 : vector<8x32xf32>
    %cst_114 = arith.constant 1.000000e+00 : f32
    %480 = vector.broadcast %cst_114 : f32 to vector<8x32xf32>
    %481 = arith.subf %480, %474 : vector<8x32xf32>
    %482 = arith.mulf %481, %479 : vector<8x32xf32>
    %483 = arith.mulf %474, %423 : vector<8x32xf32>
    %484 = arith.addf %482, %483 : vector<8x32xf32>
    %485 = vector.extract_strided_slice %454 {offsets = [0, 128], sizes = [8, 128], strides = [1, 1]} : vector<8x256xf32> to vector<8x128xf32>
    %cst_115 = arith.constant dense<0.000000e+00> : vector<8x128xf32>
    %486 = tpu.matmul %484, %248, %cst_115 {dimension_numbers = #tpu.dot_dimension_numbers<[1], [0], [0], [1], [0, 0, 1, 1], [], []>} : vector<8x32xf32>, vector<32x128xf32>, vector<8x128xf32> -> vector<8x128xf32>
    %487 = arith.addf %485, %486 : vector<8x128xf32>
    %488 = arith.addf %487, %258 : vector<8x128xf32>
    %489 = arith.index_cast %c4_i32 : i32 to index
    %c0_116 = arith.constant 0 : index
    %c0_117 = arith.constant 0 : index
    %490 = vector.load %arg15[%489, %c0_116, %c0_117] : memref<8x8x128xf32, #tpu.memory_space<vmem>>, vector<1x8x128xf32>
    %491 = vector.shape_cast %490 : vector<1x8x128xf32> to vector<8x128xf32>
    %492 = vector.shape_cast %488 : vector<8x128xf32> to vector<1x8x128xf32>
    tpu.vector_store %arg15[%489, %c0_116, %c0_117], %492 {strides = array<i32>} : memref<8x8x128xf32, #tpu.memory_space<vmem>>, vector<1x8x128xf32>,
    %493 = arith.addf %488, %264 : vector<8x128xf32>
    %cst_118 = arith.constant dense<0xFF800000> : vector<8xf32>
    %494 = vector.multi_reduction <maximumf>, %493, %cst_118 [1] : vector<8x128xf32> to vector<8xf32>
    %495 = vector.shape_cast %494 : vector<8xf32> to vector<8x1xf32>
    %496 = vector.broadcast %495 : vector<8x1xf32> to vector<8x128xf32>
    %497 = arith.cmpf oge, %493, %496 : vector<8x128xf32>
    %c128_i32_119 = arith.constant 128 : i32
    %498 = vector.broadcast %c128_i32_119 : i32 to vector<8x128xi32>
    %499 = arith.select %497, %259, %498 : vector<8x128xi1>, vector<8x128xi32>
    %cst_120 = arith.constant dense<2147483647> : vector<8xi32>
    %500 = vector.multi_reduction <minsi>, %499, %cst_120 [1] : vector<8x128xi32> to vector<8xi32>
    %501 = vector.shape_cast %500 : vector<8xi32> to vector<8x1xi32>
    %502 = vector.broadcast %501 : vector<8x1xi32> to vector<8x128xi32>
    %503 = arith.cmpi eq, %259, %502 : vector<8x128xi32>
    %504 = arith.extui %503 : vector<8x128xi1> to vector<8x128xi32>
    %505 = arith.sitofp %504 : vector<8x128xi32> to vector<8x128xf32>
    %506 = arith.index_cast %c4_i32 : i32 to index
    %507 = memref.load %arg2[%506] : memref<8xi32, #tpu.memory_space<smem>>
    %508 = vector.broadcast %507 : i32 to vector<8x128xi32>
    %c1_i32_121 = arith.constant 1 : i32
    %509 = vector.broadcast %c1_i32_121 : i32 to vector<8x128xi32>
    %510 = arith.cmpi eq, %508, %509 : vector<8x128xi32>
    %511 = arith.index_cast %c4_i32 : i32 to index
    %c0_122 = arith.constant 0 : index
    %c0_123 = arith.constant 0 : index
    %512 = vector.load %arg1[%511, %c0_122, %c0_123] : memref<8x8x128xf32, #tpu.memory_space<vmem>>, vector<1x8x128xf32>
    %513 = vector.shape_cast %512 : vector<1x8x128xf32> to vector<8x128xf32>
    %514 = arith.select %510, %513, %505 : vector<8x128xi1>, vector<8x128xf32>
    %c5_i32 = arith.constant 5 : i32
    %cst_124 = arith.constant dense<0.000000e+00> : vector<8x256xf32>
    %515 = tpu.matmul %514, %243, %cst_124 {dimension_numbers = #tpu.dot_dimension_numbers<[1], [0], [0], [1], [0, 0, 1, 1], [], []>} : vector<8x128xf32>, vector<128x256xf32>, vector<8x256xf32> -> vector<8x256xf32>
    %516 = vector.extract_strided_slice %515 {offsets = [0, 0], sizes = [8, 96], strides = [1, 1]} : vector<8x256xf32> to vector<8x96xf32>
    %517 = arith.addf %516, %253 : vector<8x96xf32>
    %cst_125 = arith.constant dense<0.000000e+00> : vector<8x96xf32>
    %518 = tpu.matmul %484, %244, %cst_125 {dimension_numbers = #tpu.dot_dimension_numbers<[1], [0], [0], [1], [0, 0, 1, 1], [], []>} : vector<8x32xf32>, vector<32x96xf32>, vector<8x96xf32> -> vector<8x96xf32>
    %519 = arith.addf %518, %247 : vector<8x96xf32>
    %520 = vector.extract_strided_slice %517 {offsets = [0, 0], sizes = [8, 32], strides = [1, 1]} : vector<8x96xf32> to vector<8x32xf32>
    %521 = vector.extract_strided_slice %519 {offsets = [0, 0], sizes = [8, 32], strides = [1, 1]} : vector<8x96xf32> to vector<8x32xf32>
    %522 = arith.addf %520, %521 : vector<8x32xf32>
    %523 = arith.negf %522 : vector<8x32xf32>
    %524 = math.exp %523 : vector<8x32xf32>
    %cst_126 = arith.constant 1.000000e+00 : f32
    %525 = vector.broadcast %cst_126 : f32 to vector<8x32xf32>
    %526 = arith.addf %525, %524 : vector<8x32xf32>
    %527 = arith.divf %525, %526 : vector<8x32xf32>
    %528 = vector.extract_strided_slice %517 {offsets = [0, 32], sizes = [8, 32], strides = [1, 1]} : vector<8x96xf32> to vector<8x32xf32>
    %529 = vector.extract_strided_slice %519 {offsets = [0, 32], sizes = [8, 32], strides = [1, 1]} : vector<8x96xf32> to vector<8x32xf32>
    %530 = arith.addf %528, %529 : vector<8x32xf32>
    %531 = arith.negf %530 : vector<8x32xf32>
    %532 = math.exp %531 : vector<8x32xf32>
    %cst_127 = arith.constant 1.000000e+00 : f32
    %533 = vector.broadcast %cst_127 : f32 to vector<8x32xf32>
    %534 = arith.addf %533, %532 : vector<8x32xf32>
    %535 = arith.divf %533, %534 : vector<8x32xf32>
    %536 = vector.extract_strided_slice %517 {offsets = [0, 64], sizes = [8, 32], strides = [1, 1]} : vector<8x96xf32> to vector<8x32xf32>
    %537 = vector.extract_strided_slice %519 {offsets = [0, 64], sizes = [8, 32], strides = [1, 1]} : vector<8x96xf32> to vector<8x32xf32>
    %538 = arith.mulf %527, %537 : vector<8x32xf32>
    %539 = arith.addf %536, %538 : vector<8x32xf32>
    %540 = math.tanh %539 : vector<8x32xf32>
    %cst_128 = arith.constant 1.000000e+00 : f32
    %541 = vector.broadcast %cst_128 : f32 to vector<8x32xf32>
    %542 = arith.subf %541, %535 : vector<8x32xf32>
    %543 = arith.mulf %542, %540 : vector<8x32xf32>
    %544 = arith.mulf %535, %484 : vector<8x32xf32>
    %545 = arith.addf %543, %544 : vector<8x32xf32>
    %546 = vector.extract_strided_slice %515 {offsets = [0, 128], sizes = [8, 128], strides = [1, 1]} : vector<8x256xf32> to vector<8x128xf32>
    %cst_129 = arith.constant dense<0.000000e+00> : vector<8x128xf32>
    %547 = tpu.matmul %545, %248, %cst_129 {dimension_numbers = #tpu.dot_dimension_numbers<[1], [0], [0], [1], [0, 0, 1, 1], [], []>} : vector<8x32xf32>, vector<32x128xf32>, vector<8x128xf32> -> vector<8x128xf32>
    %548 = arith.addf %546, %547 : vector<8x128xf32>
    %549 = arith.addf %548, %258 : vector<8x128xf32>
    %550 = arith.index_cast %c5_i32 : i32 to index
    %c0_130 = arith.constant 0 : index
    %c0_131 = arith.constant 0 : index
    %551 = vector.load %arg15[%550, %c0_130, %c0_131] : memref<8x8x128xf32, #tpu.memory_space<vmem>>, vector<1x8x128xf32>
    %552 = vector.shape_cast %551 : vector<1x8x128xf32> to vector<8x128xf32>
    %553 = vector.shape_cast %549 : vector<8x128xf32> to vector<1x8x128xf32>
    tpu.vector_store %arg15[%550, %c0_130, %c0_131], %553 {strides = array<i32>} : memref<8x8x128xf32, #tpu.memory_space<vmem>>, vector<1x8x128xf32>,
    %554 = arith.addf %549, %264 : vector<8x128xf32>
    %cst_132 = arith.constant dense<0xFF800000> : vector<8xf32>
    %555 = vector.multi_reduction <maximumf>, %554, %cst_132 [1] : vector<8x128xf32> to vector<8xf32>
    %556 = vector.shape_cast %555 : vector<8xf32> to vector<8x1xf32>
    %557 = vector.broadcast %556 : vector<8x1xf32> to vector<8x128xf32>
    %558 = arith.cmpf oge, %554, %557 : vector<8x128xf32>
    %c128_i32_133 = arith.constant 128 : i32
    %559 = vector.broadcast %c128_i32_133 : i32 to vector<8x128xi32>
    %560 = arith.select %558, %259, %559 : vector<8x128xi1>, vector<8x128xi32>
    %cst_134 = arith.constant dense<2147483647> : vector<8xi32>
    %561 = vector.multi_reduction <minsi>, %560, %cst_134 [1] : vector<8x128xi32> to vector<8xi32>
    %562 = vector.shape_cast %561 : vector<8xi32> to vector<8x1xi32>
    %563 = vector.broadcast %562 : vector<8x1xi32> to vector<8x128xi32>
    %564 = arith.cmpi eq, %259, %563 : vector<8x128xi32>
    %565 = arith.extui %564 : vector<8x128xi1> to vector<8x128xi32>
    %566 = arith.sitofp %565 : vector<8x128xi32> to vector<8x128xf32>
    %567 = arith.index_cast %c5_i32 : i32 to index
    %568 = memref.load %arg2[%567] : memref<8xi32, #tpu.memory_space<smem>>
    %569 = vector.broadcast %568 : i32 to vector<8x128xi32>
    %c1_i32_135 = arith.constant 1 : i32
    %570 = vector.broadcast %c1_i32_135 : i32 to vector<8x128xi32>
    %571 = arith.cmpi eq, %569, %570 : vector<8x128xi32>
    %572 = arith.index_cast %c5_i32 : i32 to index
    %c0_136 = arith.constant 0 : index
    %c0_137 = arith.constant 0 : index
    %573 = vector.load %arg1[%572, %c0_136, %c0_137] : memref<8x8x128xf32, #tpu.memory_space<vmem>>, vector<1x8x128xf32>
    %574 = vector.shape_cast %573 : vector<1x8x128xf32> to vector<8x128xf32>
    %575 = arith.select %571, %574, %566 : vector<8x128xi1>, vector<8x128xf32>
    %c6_i32 = arith.constant 6 : i32
    %cst_138 = arith.constant dense<0.000000e+00> : vector<8x256xf32>
    %576 = tpu.matmul %575, %243, %cst_138 {dimension_numbers = #tpu.dot_dimension_numbers<[1], [0], [0], [1], [0, 0, 1, 1], [], []>} : vector<8x128xf32>, vector<128x256xf32>, vector<8x256xf32> -> vector<8x256xf32>
    %577 = vector.extract_strided_slice %576 {offsets = [0, 0], sizes = [8, 96], strides = [1, 1]} : vector<8x256xf32> to vector<8x96xf32>
    %578 = arith.addf %577, %253 : vector<8x96xf32>
    %cst_139 = arith.constant dense<0.000000e+00> : vector<8x96xf32>
    %579 = tpu.matmul %545, %244, %cst_139 {dimension_numbers = #tpu.dot_dimension_numbers<[1], [0], [0], [1], [0, 0, 1, 1], [], []>} : vector<8x32xf32>, vector<32x96xf32>, vector<8x96xf32> -> vector<8x96xf32>
    %580 = arith.addf %579, %247 : vector<8x96xf32>
    %581 = vector.extract_strided_slice %578 {offsets = [0, 0], sizes = [8, 32], strides = [1, 1]} : vector<8x96xf32> to vector<8x32xf32>
    %582 = vector.extract_strided_slice %580 {offsets = [0, 0], sizes = [8, 32], strides = [1, 1]} : vector<8x96xf32> to vector<8x32xf32>
    %583 = arith.addf %581, %582 : vector<8x32xf32>
    %584 = arith.negf %583 : vector<8x32xf32>
    %585 = math.exp %584 : vector<8x32xf32>
    %cst_140 = arith.constant 1.000000e+00 : f32
    %586 = vector.broadcast %cst_140 : f32 to vector<8x32xf32>
    %587 = arith.addf %586, %585 : vector<8x32xf32>
    %588 = arith.divf %586, %587 : vector<8x32xf32>
    %589 = vector.extract_strided_slice %578 {offsets = [0, 32], sizes = [8, 32], strides = [1, 1]} : vector<8x96xf32> to vector<8x32xf32>
    %590 = vector.extract_strided_slice %580 {offsets = [0, 32], sizes = [8, 32], strides = [1, 1]} : vector<8x96xf32> to vector<8x32xf32>
    %591 = arith.addf %589, %590 : vector<8x32xf32>
    %592 = arith.negf %591 : vector<8x32xf32>
    %593 = math.exp %592 : vector<8x32xf32>
    %cst_141 = arith.constant 1.000000e+00 : f32
    %594 = vector.broadcast %cst_141 : f32 to vector<8x32xf32>
    %595 = arith.addf %594, %593 : vector<8x32xf32>
    %596 = arith.divf %594, %595 : vector<8x32xf32>
    %597 = vector.extract_strided_slice %578 {offsets = [0, 64], sizes = [8, 32], strides = [1, 1]} : vector<8x96xf32> to vector<8x32xf32>
    %598 = vector.extract_strided_slice %580 {offsets = [0, 64], sizes = [8, 32], strides = [1, 1]} : vector<8x96xf32> to vector<8x32xf32>
    %599 = arith.mulf %588, %598 : vector<8x32xf32>
    %600 = arith.addf %597, %599 : vector<8x32xf32>
    %601 = math.tanh %600 : vector<8x32xf32>
    %cst_142 = arith.constant 1.000000e+00 : f32
    %602 = vector.broadcast %cst_142 : f32 to vector<8x32xf32>
    %603 = arith.subf %602, %596 : vector<8x32xf32>
    %604 = arith.mulf %603, %601 : vector<8x32xf32>
    %605 = arith.mulf %596, %545 : vector<8x32xf32>
    %606 = arith.addf %604, %605 : vector<8x32xf32>
    %607 = vector.extract_strided_slice %576 {offsets = [0, 128], sizes = [8, 128], strides = [1, 1]} : vector<8x256xf32> to vector<8x128xf32>
    %cst_143 = arith.constant dense<0.000000e+00> : vector<8x128xf32>
    %608 = tpu.matmul %606, %248, %cst_143 {dimension_numbers = #tpu.dot_dimension_numbers<[1], [0], [0], [1], [0, 0, 1, 1], [], []>} : vector<8x32xf32>, vector<32x128xf32>, vector<8x128xf32> -> vector<8x128xf32>
    %609 = arith.addf %607, %608 : vector<8x128xf32>
    %610 = arith.addf %609, %258 : vector<8x128xf32>
    %611 = arith.index_cast %c6_i32 : i32 to index
    %c0_144 = arith.constant 0 : index
    %c0_145 = arith.constant 0 : index
    %612 = vector.load %arg15[%611, %c0_144, %c0_145] : memref<8x8x128xf32, #tpu.memory_space<vmem>>, vector<1x8x128xf32>
    %613 = vector.shape_cast %612 : vector<1x8x128xf32> to vector<8x128xf32>
    %614 = vector.shape_cast %610 : vector<8x128xf32> to vector<1x8x128xf32>
    tpu.vector_store %arg15[%611, %c0_144, %c0_145], %614 {strides = array<i32>} : memref<8x8x128xf32, #tpu.memory_space<vmem>>, vector<1x8x128xf32>,
    %615 = arith.addf %610, %264 : vector<8x128xf32>
    %cst_146 = arith.constant dense<0xFF800000> : vector<8xf32>
    %616 = vector.multi_reduction <maximumf>, %615, %cst_146 [1] : vector<8x128xf32> to vector<8xf32>
    %617 = vector.shape_cast %616 : vector<8xf32> to vector<8x1xf32>
    %618 = vector.broadcast %617 : vector<8x1xf32> to vector<8x128xf32>
    %619 = arith.cmpf oge, %615, %618 : vector<8x128xf32>
    %c128_i32_147 = arith.constant 128 : i32
    %620 = vector.broadcast %c128_i32_147 : i32 to vector<8x128xi32>
    %621 = arith.select %619, %259, %620 : vector<8x128xi1>, vector<8x128xi32>
    %cst_148 = arith.constant dense<2147483647> : vector<8xi32>
    %622 = vector.multi_reduction <minsi>, %621, %cst_148 [1] : vector<8x128xi32> to vector<8xi32>
    %623 = vector.shape_cast %622 : vector<8xi32> to vector<8x1xi32>
    %624 = vector.broadcast %623 : vector<8x1xi32> to vector<8x128xi32>
    %625 = arith.cmpi eq, %259, %624 : vector<8x128xi32>
    %626 = arith.extui %625 : vector<8x128xi1> to vector<8x128xi32>
    %627 = arith.sitofp %626 : vector<8x128xi32> to vector<8x128xf32>
    %628 = arith.index_cast %c6_i32 : i32 to index
    %629 = memref.load %arg2[%628] : memref<8xi32, #tpu.memory_space<smem>>
    %630 = vector.broadcast %629 : i32 to vector<8x128xi32>
    %c1_i32_149 = arith.constant 1 : i32
    %631 = vector.broadcast %c1_i32_149 : i32 to vector<8x128xi32>
    %632 = arith.cmpi eq, %630, %631 : vector<8x128xi32>
    %633 = arith.index_cast %c6_i32 : i32 to index
    %c0_150 = arith.constant 0 : index
    %c0_151 = arith.constant 0 : index
    %634 = vector.load %arg1[%633, %c0_150, %c0_151] : memref<8x8x128xf32, #tpu.memory_space<vmem>>, vector<1x8x128xf32>
    %635 = vector.shape_cast %634 : vector<1x8x128xf32> to vector<8x128xf32>
    %636 = arith.select %632, %635, %627 : vector<8x128xi1>, vector<8x128xf32>
    %c7_i32 = arith.constant 7 : i32
    %cst_152 = arith.constant dense<0.000000e+00> : vector<8x256xf32>
    %637 = tpu.matmul %636, %243, %cst_152 {dimension_numbers = #tpu.dot_dimension_numbers<[1], [0], [0], [1], [0, 0, 1, 1], [], []>} : vector<8x128xf32>, vector<128x256xf32>, vector<8x256xf32> -> vector<8x256xf32>
    %638 = vector.extract_strided_slice %637 {offsets = [0, 0], sizes = [8, 96], strides = [1, 1]} : vector<8x256xf32> to vector<8x96xf32>
    %639 = arith.addf %638, %253 : vector<8x96xf32>
    %cst_153 = arith.constant dense<0.000000e+00> : vector<8x96xf32>
    %640 = tpu.matmul %606, %244, %cst_153 {dimension_numbers = #tpu.dot_dimension_numbers<[1], [0], [0], [1], [0, 0, 1, 1], [], []>} : vector<8x32xf32>, vector<32x96xf32>, vector<8x96xf32> -> vector<8x96xf32>
    %641 = arith.addf %640, %247 : vector<8x96xf32>
    %642 = vector.extract_strided_slice %639 {offsets = [0, 0], sizes = [8, 32], strides = [1, 1]} : vector<8x96xf32> to vector<8x32xf32>
    %643 = vector.extract_strided_slice %641 {offsets = [0, 0], sizes = [8, 32], strides = [1, 1]} : vector<8x96xf32> to vector<8x32xf32>
    %644 = arith.addf %642, %643 : vector<8x32xf32>
    %645 = arith.negf %644 : vector<8x32xf32>
    %646 = math.exp %645 : vector<8x32xf32>
    %cst_154 = arith.constant 1.000000e+00 : f32
    %647 = vector.broadcast %cst_154 : f32 to vector<8x32xf32>
    %648 = arith.addf %647, %646 : vector<8x32xf32>
    %649 = arith.divf %647, %648 : vector<8x32xf32>
    %650 = vector.extract_strided_slice %639 {offsets = [0, 32], sizes = [8, 32], strides = [1, 1]} : vector<8x96xf32> to vector<8x32xf32>
    %651 = vector.extract_strided_slice %641 {offsets = [0, 32], sizes = [8, 32], strides = [1, 1]} : vector<8x96xf32> to vector<8x32xf32>
    %652 = arith.addf %650, %651 : vector<8x32xf32>
    %653 = arith.negf %652 : vector<8x32xf32>
    %654 = math.exp %653 : vector<8x32xf32>
    %cst_155 = arith.constant 1.000000e+00 : f32
    %655 = vector.broadcast %cst_155 : f32 to vector<8x32xf32>
    %656 = arith.addf %655, %654 : vector<8x32xf32>
    %657 = arith.divf %655, %656 : vector<8x32xf32>
    %658 = vector.extract_strided_slice %639 {offsets = [0, 64], sizes = [8, 32], strides = [1, 1]} : vector<8x96xf32> to vector<8x32xf32>
    %659 = vector.extract_strided_slice %641 {offsets = [0, 64], sizes = [8, 32], strides = [1, 1]} : vector<8x96xf32> to vector<8x32xf32>
    %660 = arith.mulf %649, %659 : vector<8x32xf32>
    %661 = arith.addf %658, %660 : vector<8x32xf32>
    %662 = math.tanh %661 : vector<8x32xf32>
    %cst_156 = arith.constant 1.000000e+00 : f32
    %663 = vector.broadcast %cst_156 : f32 to vector<8x32xf32>
    %664 = arith.subf %663, %657 : vector<8x32xf32>
    %665 = arith.mulf %664, %662 : vector<8x32xf32>
    %666 = arith.mulf %657, %606 : vector<8x32xf32>
    %667 = arith.addf %665, %666 : vector<8x32xf32>
    %668 = vector.extract_strided_slice %637 {offsets = [0, 128], sizes = [8, 128], strides = [1, 1]} : vector<8x256xf32> to vector<8x128xf32>
    %cst_157 = arith.constant dense<0.000000e+00> : vector<8x128xf32>
    %669 = tpu.matmul %667, %248, %cst_157 {dimension_numbers = #tpu.dot_dimension_numbers<[1], [0], [0], [1], [0, 0, 1, 1], [], []>} : vector<8x32xf32>, vector<32x128xf32>, vector<8x128xf32> -> vector<8x128xf32>
    %670 = arith.addf %668, %669 : vector<8x128xf32>
    %671 = arith.addf %670, %258 : vector<8x128xf32>
    %672 = arith.index_cast %c7_i32 : i32 to index
    %c0_158 = arith.constant 0 : index
    %c0_159 = arith.constant 0 : index
    %673 = vector.load %arg15[%672, %c0_158, %c0_159] : memref<8x8x128xf32, #tpu.memory_space<vmem>>, vector<1x8x128xf32>
    %674 = vector.shape_cast %673 : vector<1x8x128xf32> to vector<8x128xf32>
    %675 = vector.shape_cast %671 : vector<8x128xf32> to vector<1x8x128xf32>
    tpu.vector_store %arg15[%672, %c0_158, %c0_159], %675 {strides = array<i32>} : memref<8x8x128xf32, #tpu.memory_space<vmem>>, vector<1x8x128xf32>,
    %676 = arith.addf %671, %264 : vector<8x128xf32>
    %cst_160 = arith.constant dense<0xFF800000> : vector<8xf32>
    %677 = vector.multi_reduction <maximumf>, %676, %cst_160 [1] : vector<8x128xf32> to vector<8xf32>
    %678 = vector.shape_cast %677 : vector<8xf32> to vector<8x1xf32>
    %679 = vector.broadcast %678 : vector<8x1xf32> to vector<8x128xf32>
    %680 = arith.cmpf oge, %676, %679 : vector<8x128xf32>
    %c128_i32_161 = arith.constant 128 : i32
    %681 = vector.broadcast %c128_i32_161 : i32 to vector<8x128xi32>
    %682 = arith.select %680, %259, %681 : vector<8x128xi1>, vector<8x128xi32>
    %cst_162 = arith.constant dense<2147483647> : vector<8xi32>
    %683 = vector.multi_reduction <minsi>, %682, %cst_162 [1] : vector<8x128xi32> to vector<8xi32>
    %684 = vector.shape_cast %683 : vector<8xi32> to vector<8x1xi32>
    %685 = vector.broadcast %684 : vector<8x1xi32> to vector<8x128xi32>
    %686 = arith.cmpi eq, %259, %685 : vector<8x128xi32>
    %687 = arith.extui %686 : vector<8x128xi1> to vector<8x128xi32>
    %688 = arith.sitofp %687 : vector<8x128xi32> to vector<8x128xf32>
    %689 = arith.index_cast %c7_i32 : i32 to index
    %690 = memref.load %arg2[%689] : memref<8xi32, #tpu.memory_space<smem>>
    %691 = vector.broadcast %690 : i32 to vector<8x128xi32>
    %c1_i32_163 = arith.constant 1 : i32
    %692 = vector.broadcast %c1_i32_163 : i32 to vector<8x128xi32>
    %693 = arith.cmpi eq, %691, %692 : vector<8x128xi32>
    %694 = arith.index_cast %c7_i32 : i32 to index
    %c0_164 = arith.constant 0 : index
    %c0_165 = arith.constant 0 : index
    %695 = vector.load %arg1[%694, %c0_164, %c0_165] : memref<8x8x128xf32, #tpu.memory_space<vmem>>, vector<1x8x128xf32>
    %696 = vector.shape_cast %695 : vector<1x8x128xf32> to vector<8x128xf32>
    %697 = arith.select %693, %696, %688 : vector<8x128xi1>, vector<8x128xf32>
    %c7_i32_166 = arith.constant 7 : i32
    return
  }
}

</mosaic_0001>

<llo_original>
// kernel: eq.1
$region0: #{eq.1}
  %s0 = inlined_call_operand.hbm [shape: s32[8,8], index: 0, kind: input, shape index: {}]
  %s1 = inlined_call_operand.vmem [shape: s32[64], index: 1, kind: output, shape index: {}]
  $region1: #{eq.1} parent=0
    #allocation0 [shape = 'u8[4096]{0}', space=vmem, size = 0x1000, scoped, tag = 'operand span for operand 0']
    #allocation1 [shape = 's32[1]{0}', space=sflag, size = 0x4, scoped, tag = 'scoped memory for eq.1']
    #allocation2 [shape = 'u8[4096]{0}', space=vmem, size = 0x1000, scoped, tag = 'scoped mem for output reshape']
    %2 = vsyncpa [#allocation1], 0
    %s4 = ssub.s32 128, 128
    %5 = vsyncadd [#allocation1], %s4
    %s7 = sshll.u32 [#allocation0], 4
    %s8 = int_to_ptr.vmem [resolvable:$true] %s7
    %10 = dma.hbm_to_vmem [thread:$0]  %s0, 128, %s8, [#allocation1]
    %11 = dma.done [#allocation1], 128
    %v12 = vld [vmem:[#allocation0] sm:$0x1]
    %vm13 = vcmask 64512
    %14 = vst.msk [vmem:[#allocation2] sm:$0x1] %vm13, %v12
    %s15 = scalar_lea.vmem [#allocation0], 7
    %v16 = vld [vmem:[%s15] sm:$0x1]
    %17 = vrot.lane.b32.xlu0 %v16, 56
    %v18 = vpop.permute.xlu0 %17
    %vm19 = vcmask 523712
    %20 = vst.msk [vmem:[#allocation2] sm:$0x1] %vm19, %v18
    %s21 = scalar_lea.vmem [#allocation0], 6
    %v22 = vld [vmem:[%s21] sm:$0x1]
    %23 = vrot.lane.b32.xlu0 %v22, 48
    %v24 = vpop.permute.xlu0 %23
    %vm25 = vcmask 458112
    %26 = vst.msk [vmem:[#allocation2] sm:$0x1] %vm25, %v24
    %s27 = scalar_lea.vmem [#allocation0], 5
    %v28 = vld [vmem:[%s27] sm:$0x1]
    %29 = vrot.lane.b32.xlu0 %v28, 40
    %v30 = vpop.permute.xlu0 %29
    %vm31 = vcmask 392512
    %32 = vst.msk [vmem:[#allocation2] sm:$0x1] %vm31, %v30
    %s33 = scalar_lea.vmem [#allocation0], 4
    %v34 = vld [vmem:[%s33] sm:$0x1]
    %35 = vrot.lane.b32.xlu0 %v34, 32
    %v36 = vpop.permute.xlu0 %35
    %vm37 = vcmask 326912
    %38 = vst.msk [vmem:[#allocation2] sm:$0x1] %vm37, %v36
    %s39 = scalar_lea.vmem [#allocation0], 3
    %v40 = vld [vmem:[%s39] sm:$0x1]
    %41 = vrot.lane.b32.xlu0 %v40, 24
    %v42 = vpop.permute.xlu0 %41
    %vm43 = vcmask 261312
    %44 = vst.msk [vmem:[#allocation2] sm:$0x1] %vm43, %v42
    %s45 = scalar_lea.vmem [#allocation0], 2
    %v46 = vld [vmem:[%s45] sm:$0x1]
    %47 = vrot.lane.b32.xlu0 %v46, 16
    %v48 = vpop.permute.xlu0 %47
    %vm49 = vcmask 195712
    %50 = vst.msk [vmem:[#allocation2] sm:$0x1] %vm49, %v48
    %s51 = scalar_lea.vmem [#allocation0], 1
    %v52 = vld [vmem:[%s51] sm:$0x1]
    %53 = vrot.lane.b32.xlu0 %v52, 8
    %v54 = vpop.permute.xlu0 %53
    %vm55 = vcmask 130112
    %56 = vst.msk [vmem:[#allocation2] sm:$0x1] %vm55, %v54
    %s58 = sshllo.u32 0, 1
    %v60 = vld [vmem:[#allocation2] sm:%s58]
    %s61 = sshllo.u32 0, 1
    %62 = vst [vmem:[%s1] sm:%s61] %v60
    %63 = vsyncpa [#allocation1], 1

// kernel: seq2seq_forward.1
$region0: #{seq2seq_forward.1}
  #allocation0 [shape = 'u32[]', space=smem, size = 0x4, offset = 0x4, fixed_abs, tag = 'smem constant byte address 0x4 - core index']
  #allocation1 [shape = 'u32[144,128]{1,0:T(1,128)}', space=vmem, size = 0x12000, scoped, tag = 'internal scratch']
  %s0 = inlined_call_operand.vmem [shape: f32[64,32], index: 0, kind: input, shape index: {}]
  %s1 = inlined_call_operand.vmem [shape: f32[8,8,128], index: 1, kind: input, shape index: {}]
  %s2 = inlined_call_operand.vmem [shape: s32[8], index: 2, kind: input, shape index: {}]
  %s3 = inlined_call_operand.vmem [shape: f32[32,96], index: 3, kind: input, shape index: {}]
  %s4 = inlined_call_operand.vmem [shape: f32[1,96], index: 4, kind: input, shape index: {}]
  %s5 = inlined_call_operand.vmem [shape: f32[32,96], index: 5, kind: input, shape index: {}]
  %s6 = inlined_call_operand.vmem [shape: f32[1,96], index: 6, kind: input, shape index: {}]
  %s7 = inlined_call_operand.hbm [shape: f32[128,256], index: 7, kind: input, shape index: {}]
  %s8 = inlined_call_operand.vmem [shape: f32[32,96], index: 8, kind: input, shape index: {}]
  %s9 = inlined_call_operand.vmem [shape: f32[1,96], index: 9, kind: input, shape index: {}]
  %s10 = inlined_call_operand.vmem [shape: f32[32,96], index: 10, kind: input, shape index: {}]
  %s11 = inlined_call_operand.hbm [shape: f32[1,96], index: 11, kind: input, shape index: {}]
  %s12 = inlined_call_operand.vmem [shape: f32[32,128], index: 12, kind: input, shape index: {}]
  %s13 = inlined_call_operand.vmem [shape: f32[32,128], index: 13, kind: input, shape index: {}]
  %s14 = inlined_call_operand.vmem [shape: f32[1,128], index: 14, kind: input, shape index: {}]
  %s15 = inlined_call_operand.hbm [shape: f32[8,8,128], index: 15, kind: output, shape index: {}]
  %s16 = sld [smem:[#allocation0]]
  $region82: #{seq2seq_forward.1} parent=0
    _
  %s18 = ssub.s32 1, %s16
  %s19 = scalar_select 0, %s18, %s16
  $region1: #{seq2seq_forward.1} parent=0
    #allocation2 [shape = 'u8[512]{0}', space=smem, size = 0x200, scoped, tag = 'input window, operand 2, single buffered']
    #allocation3 [shape = 's32[1]{0}', space=sflag, size = 0x4, scoped, tag = 'scoped memory for seq2seq_forward.1']
    #allocation4 [shape = 's32[1]{0}', space=sflag, size = 0x4, scoped, tag = 'scoped memory for seq2seq_forward.1']
    #allocation5 [shape = 's32[1]{0}', space=sflag, size = 0x4, scoped, tag = 'scoped memory for seq2seq_forward.1']
    #allocation6 [shape = 'u8[131072]{0}', space=vmem, size = 0x20000, scoped, tag = 'input window, operand 7, single buffered']
    #allocation7 [shape = 'u8[512]{0}', space=vmem, size = 0x400, scoped, tag = 'input window, operand 11, single buffered']
    #allocation8 [shape = 's32[1]{0}', space=sflag, size = 0x4, scoped, tag = 'scoped memory for seq2seq_forward.1']
    #allocation9 [shape = 'u8[32768]{0}', space=vmem, size = 0x8000, scoped, tag = 'output window, operand 0, single buffered']
    %20 = vsyncpa [#allocation5], 0
    %21 = vsyncpa [#allocation3], 0
    %22 = vsyncpa [#allocation8], 0
    %23 = vsyncpa [#allocation4], 0
    // Predicated region
    $region2: #{seq2seq_forward.1} parent=1 // pred_check
      _
    $region3: #{seq2seq_forward.1} parent=1 // pred_check_branch
      %25 = sbr.rel (0) target = $region5
    $region4: #{seq2seq_forward.1} parent=1 // pred_region
      _
    $region5: #{seq2seq_forward.1} parent=1 // pred_fallthru
      _
    // Predicated region
    $region6: #{seq2seq_forward.1} parent=1 // pred_check
      _
    $region7: #{seq2seq_forward.1} parent=1 // pred_check_branch
      %27 = sbr.rel (0) target = $region9
    $region8: #{seq2seq_forward.1} parent=1 // pred_region
      _
    $region9: #{seq2seq_forward.1} parent=1 // pred_fallthru
      _
    // Predicated region
    $region10: #{seq2seq_forward.1} parent=1 // pred_check
      _
    $region11: #{seq2seq_forward.1} parent=1 // pred_check_branch
      %29 = sbr.rel (0) target = $region13
    $region12: #{seq2seq_forward.1} parent=1 // pred_region
      %s31 = ssub.s32 16, 16
      %32 = vsyncadd [#allocation5], %s31
      %s34 = sshll.u32 %s2, 4
      %s35 = int_to_ptr.vmem [resolvable:$true] %s34
      %37 = dma.vmem_to_smem %s35, 16, [#allocation2], [#allocation5]
    $region13: #{seq2seq_forward.1} parent=1 // pred_fallthru
      _
    // Predicated region
    $region14: #{seq2seq_forward.1} parent=1 // pred_check
      _
    $region15: #{seq2seq_forward.1} parent=1 // pred_check_branch
      %39 = sbr.rel (0) target = $region17
    $region16: #{seq2seq_forward.1} parent=1 // pred_region
      _
    $region17: #{seq2seq_forward.1} parent=1 // pred_fallthru
      _
    // Predicated region
    $region18: #{seq2seq_forward.1} parent=1 // pred_check
      _
    $region19: #{seq2seq_forward.1} parent=1 // pred_check_branch
      %41 = sbr.rel (0) target = $region21
    $region20: #{seq2seq_forward.1} parent=1 // pred_region
      _
    $region21: #{seq2seq_forward.1} parent=1 // pred_fallthru
      _
    // Predicated region
    $region22: #{seq2seq_forward.1} parent=1 // pred_check
      _
    $region23: #{seq2seq_forward.1} parent=1 // pred_check_branch
      %43 = sbr.rel (0) target = $region25
    $region24: #{seq2seq_forward.1} parent=1 // pred_region
      _
    $region25: #{seq2seq_forward.1} parent=1 // pred_fallthru
      _
    // Predicated region
    $region26: #{seq2seq_forward.1} parent=1 // pred_check
      _
    $region27: #{seq2seq_forward.1} parent=1 // pred_check_branch
      %45 = sbr.rel (0) target = $region29
    $region28: #{seq2seq_forward.1} parent=1 // pred_region
      _
    $region29: #{seq2seq_forward.1} parent=1 // pred_fallthru
      _
    // Predicated region
    $region30: #{seq2seq_forward.1} parent=1 // pred_check
      _
    $region31: #{seq2seq_forward.1} parent=1 // pred_check_branch
      %47 = sbr.rel (0) target = $region33
    $region32: #{seq2seq_forward.1} parent=1 // pred_region
      %s49 = ssub.s32 4096, 4096
      %50 = vsyncadd [#allocation3], %s49
      %s51 = sshll.u32 [#allocation6], 4
      %s52 = int_to_ptr.vmem [resolvable:$true] %s51
      %57 = dma.hbm_to_vmem [thread:$0]  %s7, 4096, %s52, [#allocation3], 256, 256, 16
    $region33: #{seq2seq_forward.1} parent=1 // pred_fallthru
      _
    // Predicated region
    $region34: #{seq2seq_forward.1} parent=1 // pred_check
      _
    $region35: #{seq2seq_forward.1} parent=1 // pred_check_branch
      %59 = sbr.rel (0) target = $region37
    $region36: #{seq2seq_forward.1} parent=1 // pred_region
      _
    $region37: #{seq2seq_forward.1} parent=1 // pred_fallthru
      _
    // Predicated region
    $region38: #{seq2seq_forward.1} parent=1 // pred_check
      _
    $region39: #{seq2seq_forward.1} parent=1 // pred_check_branch
      %61 = sbr.rel (0) target = $region41
    $region40: #{seq2seq_forward.1} parent=1 // pred_region
      _
    $region41: #{seq2seq_forward.1} parent=1 // pred_fallthru
      _
    // Predicated region
    $region42: #{seq2seq_forward.1} parent=1 // pred_check
      _
    $region43: #{seq2seq_forward.1} parent=1 // pred_check_branch
      %63 = sbr.rel (0) target = $region45
    $region44: #{seq2seq_forward.1} parent=1 // pred_region
      _
    $region45: #{seq2seq_forward.1} parent=1 // pred_fallthru
      _
    // Predicated region
    $region46: #{seq2seq_forward.1} parent=1 // pred_check
      _
    $region47: #{seq2seq_forward.1} parent=1 // pred_check_branch
      %65 = sbr.rel (0) target = $region49
    $region48: #{seq2seq_forward.1} parent=1 // pred_region
      %s67 = ssub.s32 16, 16
      %68 = vsyncadd [#allocation8], %s67
      %s70 = sshll.u32 [#allocation7], 4
      %s71 = int_to_ptr.vmem [resolvable:$true] %s70
      %73 = dma.hbm_to_vmem [thread:$0]  %s11, 16, %s71, [#allocation8]
    $region49: #{seq2seq_forward.1} parent=1 // pred_fallthru
      _
    // Predicated region
    $region50: #{seq2seq_forward.1} parent=1 // pred_check
      _
    $region51: #{seq2seq_forward.1} parent=1 // pred_check_branch
      %75 = sbr.rel (0) target = $region53
    $region52: #{seq2seq_forward.1} parent=1 // pred_region
      _
    $region53: #{seq2seq_forward.1} parent=1 // pred_fallthru
      _
    // Predicated region
    $region54: #{seq2seq_forward.1} parent=1 // pred_check
      _
    $region55: #{seq2seq_forward.1} parent=1 // pred_check_branch
      %77 = sbr.rel (0) target = $region57
    $region56: #{seq2seq_forward.1} parent=1 // pred_region
      _
    $region57: #{seq2seq_forward.1} parent=1 // pred_fallthru
      _
    // Predicated region
    $region58: #{seq2seq_forward.1} parent=1 // pred_check
      _
    $region59: #{seq2seq_forward.1} parent=1 // pred_check_branch
      %79 = sbr.rel (0) target = $region61
    $region60: #{seq2seq_forward.1} parent=1 // pred_region
      _
    $region61: #{seq2seq_forward.1} parent=1 // pred_fallthru
      _
    // Predicated region
    $region62: #{seq2seq_forward.1} parent=1 // pred_check
      _
    $region63: #{seq2seq_forward.1} parent=1 // pred_check_branch
      %81 = sbr.rel (0) target = $region65
    $region64: #{seq2seq_forward.1} parent=1 // pred_region
      %82 = dma.done [#allocation5], 16
    $region65: #{seq2seq_forward.1} parent=1 // pred_fallthru
      _
    // Predicated region
    $region66: #{seq2seq_forward.1} parent=1 // pred_check
      _
    $region67: #{seq2seq_forward.1} parent=1 // pred_check_branch
      %84 = sbr.rel (0) target = $region69
    $region68: #{seq2seq_forward.1} parent=1 // pred_region
      %85 = dma.done [#allocation3], 4096
    $region69: #{seq2seq_forward.1} parent=1 // pred_fallthru
      _
    // Predicated region
    $region70: #{seq2seq_forward.1} parent=1 // pred_check
      _
    $region71: #{seq2seq_forward.1} parent=1 // pred_check_branch
      %87 = sbr.rel (0) target = $region73
    $region72: #{seq2seq_forward.1} parent=1 // pred_region
      %88 = dma.done [#allocation8], 16
    $region73: #{seq2seq_forward.1} parent=1 // pred_fallthru
      _
    %89 = sfence
    %v90 = vld [vmem:[%s0] sm:$0xff]
    %v91 = vld [vmem:[%s0 + $0x8] sm:$0xff]
    %v92 = vld [vmem:[%s0 + $0x10] sm:$0xff]
    %v93 = vld [vmem:[%s0 + $0x18] sm:$0xff]
    %v94 = vld [vmem:[%s0 + $0x20] sm:$0xff]
    %v95 = vld [vmem:[%s0 + $0x28] sm:$0xff]
    %v96 = vld [vmem:[%s0 + $0x30] sm:$0xff]
    %v97 = vld [vmem:[%s0 + $0x38] sm:$0xff]
    %v98 = vld [vmem:[%s3] sm:$0xff]
    %v99 = vld [vmem:[%s3 + $0x8] sm:$0xff]
    %v100 = vld [vmem:[%s3 + $0x10] sm:$0xff]
    %v101 = vld [vmem:[%s3 + $0x18] sm:$0xff]
    %v102 = vld [vmem:[%s4] sm:$0x1]
    %v104 = vlaneseq
    %v105 = vshrl.u32 %v104, 7
    %v106 = vsub.s32 0, %v105
    %v107 = vrot.slane %v102, %v106
    %vm109 = vcmask 261120
    %v111 = vsel %vm109, %v90, 0
    %v114 = vsel %vm109, %v91, 0
    %v117 = vsel %vm109, %v92, 0
    %v120 = vsel %vm109, %v93, 0
    %v123 = vsel %vm109, %v94, 0
    %v126 = vsel %vm109, %v95, 0
    %v129 = vsel %vm109, %v96, 0
    %v132 = vsel %vm109, %v97, 0
    %134 = vmatprep.subr.mxu0 0.0
    %135 = vmatpush1.msra.mxu0 %v98
    %136 = vmatprep.subr.mxu0 0.0
    %137 = vmatpush1.msra.mxu0 %v99
    %138 = vmatprep.subr.mxu0 0.0
    %139 = vmatpush1.msra.mxu0 %v100
    %140 = vmatprep.subr.mxu0 0.0
    %141 = vmatpush1.msra.mxu0 %v101
    %142 = vmatprep.subr.mxu0 0.0
    %143 = vmatpush1.msra.mxu0 0.0
    %144 = vmatprep.subr.mxu0 0.0
    %145 = vmatpush1.msra.mxu0 0.0
    %146 = vmatprep.subr.mxu0 0.0
    %147 = vmatpush1.msra.mxu0 0.0
    %148 = vmatprep.subr.mxu0 0.0
    %149 = vmatpush1.msra.mxu0 0.0
    %150 = vmatprep.subr.mxu0 0.0
    %151 = vmatpush1.msra.mxu0 0.0
    %152 = vmatprep.subr.mxu0 0.0
    %153 = vmatpush1.msra.mxu0 0.0
    %154 = vmatprep.subr.mxu0 0.0
    %155 = vmatpush1.msra.mxu0 0.0
    %156 = vmatprep.subr.mxu0 0.0
    %157 = vmatpush1.msra.mxu0 0.0
    %158 = vmatprep.subr.mxu0 0.0
    %159 = vmatpush1.msra.mxu0 0.0
    %160 = vmatprep.subr.mxu0 0.0
    %161 = vmatpush1.msra.mxu0 0.0
    %162 = vmatprep.subr.mxu0 0.0
    %163 = vmatpush1.msra.mxu0 0.0
    %164 = vmatprep.subr.mxu0 0.0
    %165 = vmatpush1.msra.mxu0 0.0
    %166 = vmatprep.subr.mxu0 0.0
    %167 = vmatpush1.msra.mxu0 0.0
    %168 = vmatprep.subr.mxu0 0.0
    %169 = vmatpush1.msra.mxu0 0.0
    %170 = vmatprep.subr.mxu0 0.0
    %171 = vmatpush1.msra.mxu0 0.0
    %172 = vmatprep.subr.mxu0 0.0
    %173 = vmatpush1.msra.mxu0 0.0
    %174 = vmatprep.subr.mxu0 0.0
    %175 = vmatpush1.msra.mxu0 0.0
    %176 = vmatprep.subr.mxu0 0.0
    %177 = vmatpush1.msra.mxu0 0.0
    %178 = vmatprep.subr.mxu0 0.0
    %179 = vmatpush1.msra.mxu0 0.0
    %180 = vmatprep.subr.mxu0 0.0
    %181 = vmatpush1.msra.mxu0 0.0
    %182 = vmatprep.subr.mxu0 0.0
    %183 = vmatpush1.msra.mxu0 0.0
    %184 = vmatprep.subr.mxu0 0.0
    %185 = vmatpush1.msra.mxu0 0.0
    %186 = vmatprep.subr.mxu0 0.0
    %187 = vmatpush1.msra.mxu0 0.0
    %188 = vmatprep.subr.mxu0 0.0
    %189 = vmatpush1.msra.mxu0 0.0
    %190 = vmatprep.subr.mxu0 0.0
    %191 = vmatpush1.msra.mxu0 0.0
    %192 = vmatprep.subr.mxu0 0.0
    %193 = vmatpush1.msra.mxu0 0.0
    %194 = vmatprep.subr.mxu0 0.0
    %195 = vmatpush1.msra.mxu0 0.0
    %196 = vmatprep.subr.mxu0 0.0
    %197 = vmatpush1.msra.mxu0 0.0
    %198 = vmatprep.mubr.f32.mxu0 0.0
    %199 = vmatmul.mubr.f32.gmra.mrb[0].mxu0 %v111
    %v200 = vpop.f32.mrb[0].mxu0
    %v201 = vadd.f32 %v107, %v200
    %v202 = vpop.f32.mrb[0].mxu0
    %203 = vmatprep.mubr.f32.mxu0 0.0
    %204 = vmatmul.mubr.f32.gmra.mrb[0].mxu0 %v114
    %v205 = vpop.f32.mrb[0].mxu0
    %v206 = vadd.f32 %v107, %v205
    %v207 = vpop.f32.mrb[0].mxu0
    %208 = vmatprep.mubr.f32.mxu0 0.0
    %209 = vmatmul.mubr.f32.gmra.mrb[0].mxu0 %v117
    %v210 = vpop.f32.mrb[0].mxu0
    %v211 = vadd.f32 %v107, %v210
    %v212 = vpop.f32.mrb[0].mxu0
    %213 = vmatprep.mubr.f32.mxu0 0.0
    %214 = vmatmul.mubr.f32.gmra.mrb[0].mxu0 %v120
    %v215 = vpop.f32.mrb[0].mxu0
    %v216 = vadd.f32 %v107, %v215
    %v217 = vpop.f32.mrb[0].mxu0
    %218 = vmatprep.mubr.f32.mxu0 0.0
    %219 = vmatmul.mubr.f32.gmra.mrb[0].mxu0 %v123
    %v220 = vpop.f32.mrb[0].mxu0
    %v221 = vadd.f32 %v107, %v220
    %v222 = vpop.f32.mrb[0].mxu0
    %223 = vmatprep.mubr.f32.mxu0 0.0
    %224 = vmatmul.mubr.f32.gmra.mrb[0].mxu0 %v126
    %v225 = vpop.f32.mrb[0].mxu0
    %v226 = vadd.f32 %v107, %v225
    %v227 = vpop.f32.mrb[0].mxu0
    %228 = vmatprep.mubr.f32.mxu0 0.0
    %229 = vmatmul.mubr.f32.gmra.mrb[0].mxu0 %v129
    %v230 = vpop.f32.mrb[0].mxu0
    %v231 = vadd.f32 %v107, %v230
    %v232 = vpop.f32.mrb[0].mxu0
    %233 = vmatprep.mubr.f32.mxu0 0.0
    %234 = vmatmul.mubr.f32.gmra.mrb[0].mxu0 %v132
    %v235 = vpop.f32.mrb[0].mxu0
    %v236 = vadd.f32 %v107, %v235
    %v237 = vpop.f32.mrb[0].mxu0
    %238 = vdwg.mxu0
    %v239 = vld [vmem:[%s5] sm:$0xff]
    %v240 = vld [vmem:[%s5 + $0x8] sm:$0xff]
    %v241 = vld [vmem:[%s5 + $0x10] sm:$0xff]
    %v242 = vld [vmem:[%s5 + $0x18] sm:$0xff]
    %v243 = vld [vmem:[%s6] sm:$0x1]
    %v245 = vlaneseq
    %v246 = vshrl.u32 %v245, 7
    %v247 = vsub.s32 0, %v246
    %v248 = vrot.slane %v243, %v247
    %v251 = vsel %vm109, 0.0, 0
    %253 = vmatprep.subr.mxu0 0.0
    %254 = vmatpush1.msra.mxu0 %v239
    %255 = vmatprep.subr.mxu0 0.0
    %256 = vmatpush1.msra.mxu0 %v240
    %257 = vmatprep.subr.mxu0 0.0
    %258 = vmatpush1.msra.mxu0 %v241
    %259 = vmatprep.subr.mxu0 0.0
    %260 = vmatpush1.msra.mxu0 %v242
    %261 = vmatprep.subr.mxu0 0.0
    %262 = vmatpush1.msra.mxu0 0.0
    %263 = vmatprep.subr.mxu0 0.0
    %264 = vmatpush1.msra.mxu0 0.0
    %265 = vmatprep.subr.mxu0 0.0
    %266 = vmatpush1.msra.mxu0 0.0
    %267 = vmatprep.subr.mxu0 0.0
    %268 = vmatpush1.msra.mxu0 0.0
    %269 = vmatprep.subr.mxu0 0.0
    %270 = vmatpush1.msra.mxu0 0.0
    %271 = vmatprep.subr.mxu0 0.0
    %272 = vmatpush1.msra.mxu0 0.0
    %273 = vmatprep.subr.mxu0 0.0
    %274 = vmatpush1.msra.mxu0 0.0
    %275 = vmatprep.subr.mxu0 0.0
    %276 = vmatpush1.msra.mxu0 0.0
    %277 = vmatprep.subr.mxu0 0.0
    %278 = vmatpush1.msra.mxu0 0.0
    %279 = vmatprep.subr.mxu0 0.0
    %280 = vmatpush1.msra.mxu0 0.0
    %281 = vmatprep.subr.mxu0 0.0
    %282 = vmatpush1.msra.mxu0 0.0
    %283 = vmatprep.subr.mxu0 0.0
    %284 = vmatpush1.msra.mxu0 0.0
    %285 = vmatprep.subr.mxu0 0.0
    %286 = vmatpush1.msra.mxu0 0.0
    %287 = vmatprep.subr.mxu0 0.0
    %288 = vmatpush1.msra.mxu0 0.0
    %289 = vmatprep.subr.mxu0 0.0
    %290 = vmatpush1.msra.mxu0 0.0
    %291 = vmatprep.subr.mxu0 0.0
    %292 = vmatpush1.msra.mxu0 0.0
    %293 = vmatprep.subr.mxu0 0.0
    %294 = vmatpush1.msra.mxu0 0.0
    %295 = vmatprep.subr.mxu0 0.0
    %296 = vmatpush1.msra.mxu0 0.0
    %297 = vmatprep.subr.mxu0 0.0
    %298 = vmatpush1.msra.mxu0 0.0
    %299 = vmatprep.subr.mxu0 0.0
    %300 = vmatpush1.msra.mxu0 0.0
    %301 = vmatprep.subr.mxu0 0.0
    %302 = vmatpush1.msra.mxu0 0.0
    %303 = vmatprep.subr.mxu0 0.0
    %304 = vmatpush1.msra.mxu0 0.0
    %305 = vmatprep.subr.mxu0 0.0
    %306 = vmatpush1.msra.mxu0 0.0
    %307 = vmatprep.subr.mxu0 0.0
    %308 = vmatpush1.msra.mxu0 0.0
    %309 = vmatprep.subr.mxu0 0.0
    %310 = vmatpush1.msra.mxu0 0.0
    %311 = vmatprep.subr.mxu0 0.0
    %312 = vmatpush1.msra.mxu0 0.0
    %313 = vmatprep.subr.mxu0 0.0
    %314 = vmatpush1.msra.mxu0 0.0
    %315 = vmatprep.subr.mxu0 0.0
    %316 = vmatpush1.msra.mxu0 0.0
    %317 = vmatprep.mubr.f32.mxu0 0.0
    %318 = vmatmul.mubr.f32.gmra.mrb[0].mxu0 %v251
    %v319 = vpop.f32.mrb[0].mxu0
    %v320 = vadd.f32 %v248, %v319
    %v321 = vpop.f32.mrb[0].mxu0
    %322 = vdwg.mxu0
    %v323 = vadd.f32 %v201, %v320
    %v324 = vxor.u32 %v323, 2147483648
    %v325 = vmul.f32 %v324, 1.442695
    %v326 = vpow.pop %v325
    %v327 = vadd.f32 %v326, 1.0
    %v328 = vrcp.pop %v327
    %v329 = vmul.f32 1.0, %v328
    %331 = vrot.lane.b32.xlu0 %v320, 64
    %v332 = vpop.permute.xlu0 %331
    %v334 = vmul.f32 %v329, %v332
    %336 = vrot.lane.b32.xlu0 %v334, 64
    %v337 = vpop.permute.xlu0 %336
    %v339 = vadd.f32 %v201, %v337
    %v340 = vtanh.pop %v339
    %v341 = vsub.f32 1.0, %v329
    %343 = vrot.lane.b32.xlu0 %v340, 96
    %v344 = vpop.permute.xlu0 %343
    %v346 = vmul.f32 %v341, %v344
    %v347 = vmul.f32 %v329, 0.0
    %v348 = vadd.f32 %v346, %v347
    %350 = vrot.lane.b32.xlu0 %v348, 96
    %v351 = vpop.permute.xlu0 %350
    %v352 = vsel %vm109, %v351, 0
    %354 = vmatprep.subr.mxu0 0.0
    %355 = vmatpush1.msra.mxu0 %v239
    %356 = vmatprep.subr.mxu0 0.0
    %357 = vmatpush1.msra.mxu0 %v240
    %358 = vmatprep.subr.mxu0 0.0
    %359 = vmatpush1.msra.mxu0 %v241
    %360 = vmatprep.subr.mxu0 0.0
    %361 = vmatpush1.msra.mxu0 %v242
    %362 = vmatprep.subr.mxu0 0.0
    %363 = vmatpush1.msra.mxu0 0.0
    %364 = vmatprep.subr.mxu0 0.0
    %365 = vmatpush1.msra.mxu0 0.0
    %366 = vmatprep.subr.mxu0 0.0
    %367 = vmatpush1.msra.mxu0 0.0
    %368 = vmatprep.subr.mxu0 0.0
    %369 = vmatpush1.msra.mxu0 0.0
    %370 = vmatprep.subr.mxu0 0.0
    %371 = vmatpush1.msra.mxu0 0.0
    %372 = vmatprep.subr.mxu0 0.0
    %373 = vmatpush1.msra.mxu0 0.0
    %374 = vmatprep.subr.mxu0 0.0
    %375 = vmatpush1.msra.mxu0 0.0
    %376 = vmatprep.subr.mxu0 0.0
    %377 = vmatpush1.msra.mxu0 0.0
    %378 = vmatprep.subr.mxu0 0.0
    %379 = vmatpush1.msra.mxu0 0.0
    %380 = vmatprep.subr.mxu0 0.0
    %381 = vmatpush1.msra.mxu0 0.0
    %382 = vmatprep.subr.mxu0 0.0
    %383 = vmatpush1.msra.mxu0 0.0
    %384 = vmatprep.subr.mxu0 0.0
    %385 = vmatpush1.msra.mxu0 0.0
    %386 = vmatprep.subr.mxu0 0.0
    %387 = vmatpush1.msra.mxu0 0.0
    %388 = vmatprep.subr.mxu0 0.0
    %389 = vmatpush1.msra.mxu0 0.0
    %390 = vmatprep.subr.mxu0 0.0
    %391 = vmatpush1.msra.mxu0 0.0
    %392 = vmatprep.subr.mxu0 0.0
    %393 = vmatpush1.msra.mxu0 0.0
    %394 = vmatprep.subr.mxu0 0.0
    %395 = vmatpush1.msra.mxu0 0.0
    %396 = vmatprep.subr.mxu0 0.0
    %397 = vmatpush1.msra.mxu0 0.0
    %398 = vmatprep.subr.mxu0 0.0
    %399 = vmatpush1.msra.mxu0 0.0
    %400 = vmatprep.subr.mxu0 0.0
    %401 = vmatpush1.msra.mxu0 0.0
    %402 = vmatprep.subr.mxu0 0.0
    %403 = vmatpush1.msra.mxu0 0.0
    %404 = vmatprep.subr.mxu0 0.0
    %405 = vmatpush1.msra.mxu0 0.0
    %406 = vmatprep.subr.mxu0 0.0
    %407 = vmatpush1.msra.mxu0 0.0
    %408 = vmatprep.subr.mxu0 0.0
    %409 = vmatpush1.msra.mxu0 0.0
    %410 = vmatprep.subr.mxu0 0.0
    %411 = vmatpush1.msra.mxu0 0.0
    %412 = vmatprep.subr.mxu0 0.0
    %413 = vmatpush1.msra.mxu0 0.0
    %414 = vmatprep.subr.mxu0 0.0
    %415 = vmatpush1.msra.mxu0 0.0
    %416 = vmatprep.subr.mxu0 0.0
    %417 = vmatpush1.msra.mxu0 0.0
    %418 = vmatprep.mubr.f32.mxu0 0.0
    %419 = vmatmul.mubr.f32.gmra.mrb[0].mxu0 %v352
    %v420 = vpop.f32.mrb[0].mxu0
    %v421 = vadd.f32 %v248, %v420
    %v422 = vpop.f32.mrb[0].mxu0
    %423 = vdwg.mxu0
    %v424 = vadd.f32 %v206, %v421
    %v425 = vxor.u32 %v424, 2147483648
    %v426 = vmul.f32 %v425, 1.442695
    %v427 = vpow.pop %v426
    %v428 = vadd.f32 %v427, 1.0
    %v429 = vrcp.pop %v428
    %v430 = vmul.f32 1.0, %v429
    %432 = vrot.lane.b32.xlu0 %v421, 64
    %v433 = vpop.permute.xlu0 %432
    %v435 = vmul.f32 %v430, %v433
    %437 = vrot.lane.b32.xlu0 %v435, 64
    %v438 = vpop.permute.xlu0 %437
    %v440 = vadd.f32 %v206, %v438
    %v441 = vtanh.pop %v440
    %v442 = vsub.f32 1.0, %v430
    %444 = vrot.lane.b32.xlu0 %v441, 96
    %v445 = vpop.permute.xlu0 %444
    %v447 = vmul.f32 %v442, %v445
    %v448 = vmul.f32 %v430, %v348
    %v449 = vadd.f32 %v447, %v448
    %451 = vrot.lane.b32.xlu0 %v449, 96
    %v452 = vpop.permute.xlu0 %451
    %v453 = vsel %vm109, %v452, 0
    %455 = vmatprep.subr.mxu0 0.0
    %456 = vmatpush1.msra.mxu0 %v239
    %457 = vmatprep.subr.mxu0 0.0
    %458 = vmatpush1.msra.mxu0 %v240
    %459 = vmatprep.subr.mxu0 0.0
    %460 = vmatpush1.msra.mxu0 %v241
    %461 = vmatprep.subr.mxu0 0.0
    %462 = vmatpush1.msra.mxu0 %v242
    %463 = vmatprep.subr.mxu0 0.0
    %464 = vmatpush1.msra.mxu0 0.0
    %465 = vmatprep.subr.mxu0 0.0
    %466 = vmatpush1.msra.mxu0 0.0
    %467 = vmatprep.subr.mxu0 0.0
    %468 = vmatpush1.msra.mxu0 0.0
    %469 = vmatprep.subr.mxu0 0.0
    %470 = vmatpush1.msra.mxu0 0.0
    %471 = vmatprep.subr.mxu0 0.0
    %472 = vmatpush1.msra.mxu0 0.0
    %473 = vmatprep.subr.mxu0 0.0
    %474 = vmatpush1.msra.mxu0 0.0
    %475 = vmatprep.subr.mxu0 0.0
    %476 = vmatpush1.msra.mxu0 0.0
    %477 = vmatprep.subr.mxu0 0.0
    %478 = vmatpush1.msra.mxu0 0.0
    %479 = vmatprep.subr.mxu0 0.0
    %480 = vmatpush1.msra.mxu0 0.0
    %481 = vmatprep.subr.mxu0 0.0
    %482 = vmatpush1.msra.mxu0 0.0
    %483 = vmatprep.subr.mxu0 0.0
    %484 = vmatpush1.msra.mxu0 0.0
    %485 = vmatprep.subr.mxu0 0.0
    %486 = vmatpush1.msra.mxu0 0.0
    %487 = vmatprep.subr.mxu0 0.0
    %488 = vmatpush1.msra.mxu0 0.0
    %489 = vmatprep.subr.mxu0 0.0
    %490 = vmatpush1.msra.mxu0 0.0
    %491 = vmatprep.subr.mxu0 0.0
    %492 = vmatpush1.msra.mxu0 0.0
    %493 = vmatprep.subr.mxu0 0.0
    %494 = vmatpush1.msra.mxu0 0.0
    %495 = vmatprep.subr.mxu0 0.0
    %496 = vmatpush1.msra.mxu0 0.0
    %497 = vmatprep.subr.mxu0 0.0
    %498 = vmatpush1.msra.mxu0 0.0
    %499 = vmatprep.subr.mxu0 0.0
    %500 = vmatpush1.msra.mxu0 0.0
    %501 = vmatprep.subr.mxu0 0.0
    %502 = vmatpush1.msra.mxu0 0.0
    %503 = vmatprep.subr.mxu0 0.0
    %504 = vmatpush1.msra.mxu0 0.0
    %505 = vmatprep.subr.mxu0 0.0
    %506 = vmatpush1.msra.mxu0 0.0
    %507 = vmatprep.subr.mxu0 0.0
    %508 = vmatpush1.msra.mxu0 0.0
    %509 = vmatprep.subr.mxu0 0.0
    %510 = vmatpush1.msra.mxu0 0.0
    %511 = vmatprep.subr.mxu0 0.0
    %512 = vmatpush1.msra.mxu0 0.0
    %513 = vmatprep.subr.mxu0 0.0
    %514 = vmatpush1.msra.mxu0 0.0
    %515 = vmatprep.subr.mxu0 0.0
    %516 = vmatpush1.msra.mxu0 0.0
    %517 = vmatprep.subr.mxu0 0.0
    %518 = vmatpush1.msra.mxu0 0.0
    %519 = vmatprep.mubr.f32.mxu0 0.0
    %520 = vmatmul.mubr.f32.gmra.mrb[0].mxu0 %v453
    %v521 = vpop.f32.mrb[0].mxu0
    %v522 = vadd.f32 %v248, %v521
    %v523 = vpop.f32.mrb[0].mxu0
    %524 = vdwg.mxu0
    %v525 = vadd.f32 %v211, %v522
    %v526 = vxor.u32 %v525, 2147483648
    %v527 = vmul.f32 %v526, 1.442695
    %v528 = vpow.pop %v527
    %v529 = vadd.f32 %v528, 1.0
    %v530 = vrcp.pop %v529
    %v531 = vmul.f32 1.0, %v530
    %533 = vrot.lane.b32.xlu0 %v522, 64
    %v534 = vpop.permute.xlu0 %533
    %v536 = vmul.f32 %v531, %v534
    %538 = vrot.lane.b32.xlu0 %v536, 64
    %v539 = vpop.permute.xlu0 %538
    %v541 = vadd.f32 %v211, %v539
    %v542 = vtanh.pop %v541
    %v543 = vsub.f32 1.0, %v531
    %545 = vrot.lane.b32.xlu0 %v542, 96
    %v546 = vpop.permute.xlu0 %545
    %v548 = vmul.f32 %v543, %v546
    %v549 = vmul.f32 %v531, %v449
    %v550 = vadd.f32 %v548, %v549
    %552 = vrot.lane.b32.xlu0 %v550, 96
    %v553 = vpop.permute.xlu0 %552
    %v554 = vsel %vm109, %v553, 0
    %556 = vmatprep.subr.mxu0 0.0
    %557 = vmatpush1.msra.mxu0 %v239
    %558 = vmatprep.subr.mxu0 0.0
    %559 = vmatpush1.msra.mxu0 %v240
    %560 = vmatprep.subr.mxu0 0.0
    %561 = vmatpush1.msra.mxu0 %v241
    %562 = vmatprep.subr.mxu0 0.0
    %563 = vmatpush1.msra.mxu0 %v242
    %564 = vmatprep.subr.mxu0 0.0
    %565 = vmatpush1.msra.mxu0 0.0
    %566 = vmatprep.subr.mxu0 0.0
    %567 = vmatpush1.msra.mxu0 0.0
    %568 = vmatprep.subr.mxu0 0.0
    %569 = vmatpush1.msra.mxu0 0.0
    %570 = vmatprep.subr.mxu0 0.0
    %571 = vmatpush1.msra.mxu0 0.0
    %572 = vmatprep.subr.mxu0 0.0
    %573 = vmatpush1.msra.mxu0 0.0
    %574 = vmatprep.subr.mxu0 0.0
    %575 = vmatpush1.msra.mxu0 0.0
    %576 = vmatprep.subr.mxu0 0.0
    %577 = vmatpush1.msra.mxu0 0.0
    %578 = vmatprep.subr.mxu0 0.0
    %579 = vmatpush1.msra.mxu0 0.0
    %580 = vmatprep.subr.mxu0 0.0
    %581 = vmatpush1.msra.mxu0 0.0
    %582 = vmatprep.subr.mxu0 0.0
    %583 = vmatpush1.msra.mxu0 0.0
    %584 = vmatprep.subr.mxu0 0.0
    %585 = vmatpush1.msra.mxu0 0.0
    %586 = vmatprep.subr.mxu0 0.0
    %587 = vmatpush1.msra.mxu0 0.0
    %588 = vmatprep.subr.mxu0 0.0
    %589 = vmatpush1.msra.mxu0 0.0
    %590 = vmatprep.subr.mxu0 0.0
    %591 = vmatpush1.msra.mxu0 0.0
    %592 = vmatprep.subr.mxu0 0.0
    %593 = vmatpush1.msra.mxu0 0.0
    %594 = vmatprep.subr.mxu0 0.0
    %595 = vmatpush1.msra.mxu0 0.0
    %596 = vmatprep.subr.mxu0 0.0
    %597 = vmatpush1.msra.mxu0 0.0
    %598 = vmatprep.subr.mxu0 0.0
    %599 = vmatpush1.msra.mxu0 0.0
    %600 = vmatprep.subr.mxu0 0.0
    %601 = vmatpush1.msra.mxu0 0.0
    %602 = vmatprep.subr.mxu0 0.0
    %603 = vmatpush1.msra.mxu0 0.0
    %604 = vmatprep.subr.mxu0 0.0
    %605 = vmatpush1.msra.mxu0 0.0
    %606 = vmatprep.subr.mxu0 0.0
    %607 = vmatpush1.msra.mxu0 0.0
    %608 = vmatprep.subr.mxu0 0.0
    %609 = vmatpush1.msra.mxu0 0.0
    %610 = vmatprep.subr.mxu0 0.0
    %611 = vmatpush1.msra.mxu0 0.0
    %612 = vmatprep.subr.mxu0 0.0
    %613 = vmatpush1.msra.mxu0 0.0
    %614 = vmatprep.subr.mxu0 0.0
    %615 = vmatpush1.msra.mxu0 0.0
    %616 = vmatprep.subr.mxu0 0.0
    %617 = vmatpush1.msra.mxu0 0.0
    %618 = vmatprep.subr.mxu0 0.0
    %619 = vmatpush1.msra.mxu0 0.0
    %620 = vmatprep.mubr.f32.mxu0 0.0
    %621 = vmatmul.mubr.f32.gmra.mrb[0].mxu0 %v554
    %v622 = vpop.f32.mrb[0].mxu0
    %v623 = vadd.f32 %v248, %v622
    %v624 = vpop.f32.mrb[0].mxu0
    %625 = vdwg.mxu0
    %v626 = vadd.f32 %v216, %v623
    %v627 = vxor.u32 %v626, 2147483648
    %v628 = vmul.f32 %v627, 1.442695
    %v629 = vpow.pop %v628
    %v630 = vadd.f32 %v629, 1.0
    %v631 = vrcp.pop %v630
    %v632 = vmul.f32 1.0, %v631
    %634 = vrot.lane.b32.xlu0 %v623, 64
    %v635 = vpop.permute.xlu0 %634
    %v637 = vmul.f32 %v632, %v635
    %639 = vrot.lane.b32.xlu0 %v637, 64
    %v640 = vpop.permute.xlu0 %639
    %v642 = vadd.f32 %v216, %v640
    %v643 = vtanh.pop %v642
    %v644 = vsub.f32 1.0, %v632
    %646 = vrot.lane.b32.xlu0 %v643, 96
    %v647 = vpop.permute.xlu0 %646
    %v649 = vmul.f32 %v644, %v647
    %v650 = vmul.f32 %v632, %v550
    %v651 = vadd.f32 %v649, %v650
    %653 = vrot.lane.b32.xlu0 %v651, 96
    %v654 = vpop.permute.xlu0 %653
    %v655 = vsel %vm109, %v654, 0
    %657 = vmatprep.subr.mxu0 0.0
    %658 = vmatpush1.msra.mxu0 %v239
    %659 = vmatprep.subr.mxu0 0.0
    %660 = vmatpush1.msra.mxu0 %v240
    %661 = vmatprep.subr.mxu0 0.0
    %662 = vmatpush1.msra.mxu0 %v241
    %663 = vmatprep.subr.mxu0 0.0
    %664 = vmatpush1.msra.mxu0 %v242
    %665 = vmatprep.subr.mxu0 0.0
    %666 = vmatpush1.msra.mxu0 0.0
    %667 = vmatprep.subr.mxu0 0.0
    %668 = vmatpush1.msra.mxu0 0.0
    %669 = vmatprep.subr.mxu0 0.0
    %670 = vmatpush1.msra.mxu0 0.0
    %671 = vmatprep.subr.mxu0 0.0
    %672 = vmatpush1.msra.mxu0 0.0
    %673 = vmatprep.subr.mxu0 0.0
    %674 = vmatpush1.msra.mxu0 0.0
    %675 = vmatprep.subr.mxu0 0.0
    %676 = vmatpush1.msra.mxu0 0.0
    %677 = vmatprep.subr.mxu0 0.0
    %678 = vmatpush1.msra.mxu0 0.0
    %679 = vmatprep.subr.mxu0 0.0
    %680 = vmatpush1.msra.mxu0 0.0
    %681 = vmatprep.subr.mxu0 0.0
    %682 = vmatpush1.msra.mxu0 0.0
    %683 = vmatprep.subr.mxu0 0.0
    %684 = vmatpush1.msra.mxu0 0.0
    %685 = vmatprep.subr.mxu0 0.0
    %686 = vmatpush1.msra.mxu0 0.0
    %687 = vmatprep.subr.mxu0 0.0
    %688 = vmatpush1.msra.mxu0 0.0
    %689 = vmatprep.subr.mxu0 0.0
    %690 = vmatpush1.msra.mxu0 0.0
    %691 = vmatprep.subr.mxu0 0.0
    %692 = vmatpush1.msra.mxu0 0.0
    %693 = vmatprep.subr.mxu0 0.0
    %694 = vmatpush1.msra.mxu0 0.0
    %695 = vmatprep.subr.mxu0 0.0
    %696 = vmatpush1.msra.mxu0 0.0
    %697 = vmatprep.subr.mxu0 0.0
    %698 = vmatpush1.msra.mxu0 0.0
    %699 = vmatprep.subr.mxu0 0.0
    %700 = vmatpush1.msra.mxu0 0.0
    %701 = vmatprep.subr.mxu0 0.0
    %702 = vmatpush1.msra.mxu0 0.0
    %703 = vmatprep.subr.mxu0 0.0
    %704 = vmatpush1.msra.mxu0 0.0
    %705 = vmatprep.subr.mxu0 0.0
    %706 = vmatpush1.msra.mxu0 0.0
    %707 = vmatprep.subr.mxu0 0.0
    %708 = vmatpush1.msra.mxu0 0.0
    %709 = vmatprep.subr.mxu0 0.0
    %710 = vmatpush1.msra.mxu0 0.0
    %711 = vmatprep.subr.mxu0 0.0
    %712 = vmatpush1.msra.mxu0 0.0
    %713 = vmatprep.subr.mxu0 0.0
    %714 = vmatpush1.msra.mxu0 0.0
    %715 = vmatprep.subr.mxu0 0.0
    %716 = vmatpush1.msra.mxu0 0.0
    %717 = vmatprep.subr.mxu0 0.0
    %718 = vmatpush1.msra.mxu0 0.0
    %719 = vmatprep.subr.mxu0 0.0
    %720 = vmatpush1.msra.mxu0 0.0
    %721 = vmatprep.mubr.f32.mxu0 0.0
    %722 = vmatmul.mubr.f32.gmra.mrb[0].mxu0 %v655
    %v723 = vpop.f32.mrb[0].mxu0
    %v724 = vadd.f32 %v248, %v723
    %v725 = vpop.f32.mrb[0].mxu0
    %726 = vdwg.mxu0
    %v727 = vadd.f32 %v221, %v724
    %v728 = vxor.u32 %v727, 2147483648
    %v729 = vmul.f32 %v728, 1.442695
    %v730 = vpow.pop %v729
    %v731 = vadd.f32 %v730, 1.0
    %v732 = vrcp.pop %v731
    %v733 = vmul.f32 1.0, %v732
    %735 = vrot.lane.b32.xlu0 %v724, 64
    %v736 = vpop.permute.xlu0 %735
    %v738 = vmul.f32 %v733, %v736
    %740 = vrot.lane.b32.xlu0 %v738, 64
    %v741 = vpop.permute.xlu0 %740
    %v743 = vadd.f32 %v221, %v741
    %v744 = vtanh.pop %v743
    %v745 = vsub.f32 1.0, %v733
    %747 = vrot.lane.b32.xlu0 %v744, 96
    %v748 = vpop.permute.xlu0 %747
    %v750 = vmul.f32 %v745, %v748
    %v751 = vmul.f32 %v733, %v651
    %v752 = vadd.f32 %v750, %v751
    %754 = vrot.lane.b32.xlu0 %v752, 96
    %v755 = vpop.permute.xlu0 %754
    %v756 = vsel %vm109, %v755, 0
    %758 = vmatprep.subr.mxu0 0.0
    %759 = vmatpush1.msra.mxu0 %v239
    %760 = vmatprep.subr.mxu0 0.0
    %761 = vmatpush1.msra.mxu0 %v240
    %762 = vmatprep.subr.mxu0 0.0
    %763 = vmatpush1.msra.mxu0 %v241
    %764 = vmatprep.subr.mxu0 0.0
    %765 = vmatpush1.msra.mxu0 %v242
    %766 = vmatprep.subr.mxu0 0.0
    %767 = vmatpush1.msra.mxu0 0.0
    %768 = vmatprep.subr.mxu0 0.0
    %769 = vmatpush1.msra.mxu0 0.0
    %770 = vmatprep.subr.mxu0 0.0
    %771 = vmatpush1.msra.mxu0 0.0
    %772 = vmatprep.subr.mxu0 0.0
    %773 = vmatpush1.msra.mxu0 0.0
    %774 = vmatprep.subr.mxu0 0.0
    %775 = vmatpush1.msra.mxu0 0.0
    %776 = vmatprep.subr.mxu0 0.0
    %777 = vmatpush1.msra.mxu0 0.0
    %778 = vmatprep.subr.mxu0 0.0
    %779 = vmatpush1.msra.mxu0 0.0
    %780 = vmatprep.subr.mxu0 0.0
    %781 = vmatpush1.msra.mxu0 0.0
    %782 = vmatprep.subr.mxu0 0.0
    %783 = vmatpush1.msra.mxu0 0.0
    %784 = vmatprep.subr.mxu0 0.0
    %785 = vmatpush1.msra.mxu0 0.0
    %786 = vmatprep.subr.mxu0 0.0
    %787 = vmatpush1.msra.mxu0 0.0
    %788 = vmatprep.subr.mxu0 0.0
    %789 = vmatpush1.msra.mxu0 0.0
    %790 = vmatprep.subr.mxu0 0.0
    %791 = vmatpush1.msra.mxu0 0.0
    %792 = vmatprep.subr.mxu0 0.0
    %793 = vmatpush1.msra.mxu0 0.0
    %794 = vmatprep.subr.mxu0 0.0
    %795 = vmatpush1.msra.mxu0 0.0
    %796 = vmatprep.subr.mxu0 0.0
    %797 = vmatpush1.msra.mxu0 0.0
    %798 = vmatprep.subr.mxu0 0.0
    %799 = vmatpush1.msra.mxu0 0.0
    %800 = vmatprep.subr.mxu0 0.0
    %801 = vmatpush1.msra.mxu0 0.0
    %802 = vmatprep.subr.mxu0 0.0
    %803 = vmatpush1.msra.mxu0 0.0
    %804 = vmatprep.subr.mxu0 0.0
    %805 = vmatpush1.msra.mxu0 0.0
    %806 = vmatprep.subr.mxu0 0.0
    %807 = vmatpush1.msra.mxu0 0.0
    %808 = vmatprep.subr.mxu0 0.0
    %809 = vmatpush1.msra.mxu0 0.0
    %810 = vmatprep.subr.mxu0 0.0
    %811 = vmatpush1.msra.mxu0 0.0
    %812 = vmatprep.subr.mxu0 0.0
    %813 = vmatpush1.msra.mxu0 0.0
    %814 = vmatprep.subr.mxu0 0.0
    %815 = vmatpush1.msra.mxu0 0.0
    %816 = vmatprep.subr.mxu0 0.0
    %817 = vmatpush1.msra.mxu0 0.0
    %818 = vmatprep.subr.mxu0 0.0
    %819 = vmatpush1.msra.mxu0 0.0
    %820 = vmatprep.subr.mxu0 0.0
    %821 = vmatpush1.msra.mxu0 0.0
    %822 = vmatprep.mubr.f32.mxu0 0.0
    %823 = vmatmul.mubr.f32.gmra.mrb[0].mxu0 %v756
    %v824 = vpop.f32.mrb[0].mxu0
    %v825 = vadd.f32 %v248, %v824
    %v826 = vpop.f32.mrb[0].mxu0
    %827 = vdwg.mxu0
    %v828 = vadd.f32 %v226, %v825
    %v829 = vxor.u32 %v828, 2147483648
    %v830 = vmul.f32 %v829, 1.442695
    %v831 = vpow.pop %v830
    %v832 = vadd.f32 %v831, 1.0
    %v833 = vrcp.pop %v832
    %v834 = vmul.f32 1.0, %v833
    %836 = vrot.lane.b32.xlu0 %v825, 64
    %v837 = vpop.permute.xlu0 %836
    %v839 = vmul.f32 %v834, %v837
    %841 = vrot.lane.b32.xlu0 %v839, 64
    %v842 = vpop.permute.xlu0 %841
    %v844 = vadd.f32 %v226, %v842
    %v845 = vtanh.pop %v844
    %v846 = vsub.f32 1.0, %v834
    %848 = vrot.lane.b32.xlu0 %v845, 96
    %v849 = vpop.permute.xlu0 %848
    %v851 = vmul.f32 %v846, %v849
    %v852 = vmul.f32 %v834, %v752
    %v853 = vadd.f32 %v851, %v852
    %855 = vrot.lane.b32.xlu0 %v853, 96
    %v856 = vpop.permute.xlu0 %855
    %v857 = vsel %vm109, %v856, 0
    %859 = vmatprep.subr.mxu0 0.0
    %860 = vmatpush1.msra.mxu0 %v239
    %861 = vmatprep.subr.mxu0 0.0
    %862 = vmatpush1.msra.mxu0 %v240
    %863 = vmatprep.subr.mxu0 0.0
    %864 = vmatpush1.msra.mxu0 %v241
    %865 = vmatprep.subr.mxu0 0.0
    %866 = vmatpush1.msra.mxu0 %v242
    %867 = vmatprep.subr.mxu0 0.0
    %868 = vmatpush1.msra.mxu0 0.0
    %869 = vmatprep.subr.mxu0 0.0
    %870 = vmatpush1.msra.mxu0 0.0
    %871 = vmatprep.subr.mxu0 0.0
    %872 = vmatpush1.msra.mxu0 0.0
    %873 = vmatprep.subr.mxu0 0.0
    %874 = vmatpush1.msra.mxu0 0.0
    %875 = vmatprep.subr.mxu0 0.0
    %876 = vmatpush1.msra.mxu0 0.0
    %877 = vmatprep.subr.mxu0 0.0
    %878 = vmatpush1.msra.mxu0 0.0
    %879 = vmatprep.subr.mxu0 0.0
    %880 = vmatpush1.msra.mxu0 0.0
    %881 = vmatprep.subr.mxu0 0.0
    %882 = vmatpush1.msra.mxu0 0.0
    %883 = vmatprep.subr.mxu0 0.0
    %884 = vmatpush1.msra.mxu0 0.0
    %885 = vmatprep.subr.mxu0 0.0
    %886 = vmatpush1.msra.mxu0 0.0
    %887 = vmatprep.subr.mxu0 0.0
    %888 = vmatpush1.msra.mxu0 0.0
    %889 = vmatprep.subr.mxu0 0.0
    %890 = vmatpush1.msra.mxu0 0.0
    %891 = vmatprep.subr.mxu0 0.0
    %892 = vmatpush1.msra.mxu0 0.0
    %893 = vmatprep.subr.mxu0 0.0
    %894 = vmatpush1.msra.mxu0 0.0
    %895 = vmatprep.subr.mxu0 0.0
    %896 = vmatpush1.msra.mxu0 0.0
    %897 = vmatprep.subr.mxu0 0.0
    %898 = vmatpush1.msra.mxu0 0.0
    %899 = vmatprep.subr.mxu0 0.0
    %900 = vmatpush1.msra.mxu0 0.0
    %901 = vmatprep.subr.mxu0 0.0
    %902 = vmatpush1.msra.mxu0 0.0
    %903 = vmatprep.subr.mxu0 0.0
    %904 = vmatpush1.msra.mxu0 0.0
    %905 = vmatprep.subr.mxu0 0.0
    %906 = vmatpush1.msra.mxu0 0.0
    %907 = vmatprep.subr.mxu0 0.0
    %908 = vmatpush1.msra.mxu0 0.0
    %909 = vmatprep.subr.mxu0 0.0
    %910 = vmatpush1.msra.mxu0 0.0
    %911 = vmatprep.subr.mxu0 0.0
    %912 = vmatpush1.msra.mxu0 0.0
    %913 = vmatprep.subr.mxu0 0.0
    %914 = vmatpush1.msra.mxu0 0.0
    %915 = vmatprep.subr.mxu0 0.0
    %916 = vmatpush1.msra.mxu0 0.0
    %917 = vmatprep.subr.mxu0 0.0
    %918 = vmatpush1.msra.mxu0 0.0
    %919 = vmatprep.subr.mxu0 0.0
    %920 = vmatpush1.msra.mxu0 0.0
    %921 = vmatprep.subr.mxu0 0.0
    %922 = vmatpush1.msra.mxu0 0.0
    %923 = vmatprep.mubr.f32.mxu0 0.0
    %924 = vmatmul.mubr.f32.gmra.mrb[0].mxu0 %v857
    %v925 = vpop.f32.mrb[0].mxu0
    %v926 = vadd.f32 %v248, %v925
    %v927 = vpop.f32.mrb[0].mxu0
    %928 = vdwg.mxu0
    %v929 = vadd.f32 %v231, %v926
    %v930 = vxor.u32 %v929, 2147483648
    %v931 = vmul.f32 %v930, 1.442695
    %v932 = vpow.pop %v931
    %v933 = vadd.f32 %v932, 1.0
    %v934 = vrcp.pop %v933
    %v935 = vmul.f32 1.0, %v934
    %937 = vrot.lane.b32.xlu0 %v926, 64
    %v938 = vpop.permute.xlu0 %937
    %v940 = vmul.f32 %v935, %v938
    %942 = vrot.lane.b32.xlu0 %v940, 64
    %v943 = vpop.permute.xlu0 %942
    %v945 = vadd.f32 %v231, %v943
    %v946 = vtanh.pop %v945
    %v947 = vsub.f32 1.0, %v935
    %949 = vrot.lane.b32.xlu0 %v946, 96
    %v950 = vpop.permute.xlu0 %949
    %v952 = vmul.f32 %v947, %v950
    %v953 = vmul.f32 %v935, %v853
    %v954 = vadd.f32 %v952, %v953
    %956 = vrot.lane.b32.xlu0 %v954, 96
    %v957 = vpop.permute.xlu0 %956
    %v958 = vsel %vm109, %v957, 0
    %960 = vmatprep.subr.mxu0 0.0
    %961 = vmatpush1.msra.mxu0 %v239
    %962 = vmatprep.subr.mxu0 0.0
    %963 = vmatpush1.msra.mxu0 %v240
    %964 = vmatprep.subr.mxu0 0.0
    %965 = vmatpush1.msra.mxu0 %v241
    %966 = vmatprep.subr.mxu0 0.0
    %967 = vmatpush1.msra.mxu0 %v242
    %968 = vmatprep.subr.mxu0 0.0
    %969 = vmatpush1.msra.mxu0 0.0
    %970 = vmatprep.subr.mxu0 0.0
    %971 = vmatpush1.msra.mxu0 0.0
    %972 = vmatprep.subr.mxu0 0.0
    %973 = vmatpush1.msra.mxu0 0.0
    %974 = vmatprep.subr.mxu0 0.0
    %975 = vmatpush1.msra.mxu0 0.0
    %976 = vmatprep.subr.mxu0 0.0
    %977 = vmatpush1.msra.mxu0 0.0
    %978 = vmatprep.subr.mxu0 0.0
    %979 = vmatpush1.msra.mxu0 0.0
    %980 = vmatprep.subr.mxu0 0.0
    %981 = vmatpush1.msra.mxu0 0.0
    %982 = vmatprep.subr.mxu0 0.0
    %983 = vmatpush1.msra.mxu0 0.0
    %984 = vmatprep.subr.mxu0 0.0
    %985 = vmatpush1.msra.mxu0 0.0
    %986 = vmatprep.subr.mxu0 0.0
    %987 = vmatpush1.msra.mxu0 0.0
    %988 = vmatprep.subr.mxu0 0.0
    %989 = vmatpush1.msra.mxu0 0.0
    %990 = vmatprep.subr.mxu0 0.0
    %991 = vmatpush1.msra.mxu0 0.0
    %992 = vmatprep.subr.mxu0 0.0
    %993 = vmatpush1.msra.mxu0 0.0
    %994 = vmatprep.subr.mxu0 0.0
    %995 = vmatpush1.msra.mxu0 0.0
    %996 = vmatprep.subr.mxu0 0.0
    %997 = vmatpush1.msra.mxu0 0.0
    %998 = vmatprep.subr.mxu0 0.0
    %999 = vmatpush1.msra.mxu0 0.0
    %1000 = vmatprep.subr.mxu0 0.0
    %1001 = vmatpush1.msra.mxu0 0.0
    %1002 = vmatprep.subr.mxu0 0.0
    %1003 = vmatpush1.msra.mxu0 0.0
    %1004 = vmatprep.subr.mxu0 0.0
    %1005 = vmatpush1.msra.mxu0 0.0
    %1006 = vmatprep.subr.mxu0 0.0
    %1007 = vmatpush1.msra.mxu0 0.0
    %1008 = vmatprep.subr.mxu0 0.0
    %1009 = vmatpush1.msra.mxu0 0.0
    %1010 = vmatprep.subr.mxu0 0.0
    %1011 = vmatpush1.msra.mxu0 0.0
    %1012 = vmatprep.subr.mxu0 0.0
    %1013 = vmatpush1.msra.mxu0 0.0
    %1014 = vmatprep.subr.mxu0 0.0
    %1015 = vmatpush1.msra.mxu0 0.0
    %1016 = vmatprep.subr.mxu0 0.0
    %1017 = vmatpush1.msra.mxu0 0.0
    %1018 = vmatprep.subr.mxu0 0.0
    %1019 = vmatpush1.msra.mxu0 0.0
    %1020 = vmatprep.subr.mxu0 0.0
    %1021 = vmatpush1.msra.mxu0 0.0
    %1022 = vmatprep.subr.mxu0 0.0
    %1023 = vmatpush1.msra.mxu0 0.0
    %1024 = vmatprep.mubr.f32.mxu0 0.0
    %1025 = vmatmul.mubr.f32.gmra.mrb[0].mxu0 %v958
    %v1026 = vpop.f32.mrb[0].mxu0
    %v1027 = vadd.f32 %v248, %v1026
    %v1028 = vpop.f32.mrb[0].mxu0
    %1029 = vdwg.mxu0
    %v1030 = vadd.f32 %v236, %v1027
    %v1031 = vxor.u32 %v1030, 2147483648
    %v1032 = vmul.f32 %v1031, 1.442695
    %v1033 = vpow.pop %v1032
    %v1034 = vadd.f32 %v1033, 1.0
    %v1035 = vrcp.pop %v1034
    %v1036 = vmul.f32 1.0, %v1035
    %1038 = vrot.lane.b32.xlu0 %v1027, 64
    %v1039 = vpop.permute.xlu0 %1038
    %v1041 = vmul.f32 %v1036, %v1039
    %1043 = vrot.lane.b32.xlu0 %v1041, 64
    %v1044 = vpop.permute.xlu0 %1043
    %v1046 = vadd.f32 %v236, %v1044
    %v1047 = vtanh.pop %v1046
    %v1048 = vsub.f32 1.0, %v1036
    %1050 = vrot.lane.b32.xlu0 %v1047, 96
    %v1051 = vpop.permute.xlu0 %1050
    %v1053 = vmul.f32 %v1048, %v1051
    %v1054 = vmul.f32 %v1036, %v954
    %v1055 = vadd.f32 %v1053, %v1054
    %v1056 = vld [vmem:[#allocation6] sm:$0xff]
    %v1057 = vld [vmem:[#allocation6 + $0x8] sm:$0xff]
    %v1058 = vld [vmem:[#allocation6 + $0x10] sm:$0xff]
    %v1059 = vld [vmem:[#allocation6 + $0x18] sm:$0xff]
    %v1060 = vld [vmem:[#allocation6 + $0x20] sm:$0xff]
    %v1061 = vld [vmem:[#allocation6 + $0x28] sm:$0xff]
    %v1062 = vld [vmem:[#allocation6 + $0x30] sm:$0xff]
    %v1063 = vld [vmem:[#allocation6 + $0x38] sm:$0xff]
    %v1064 = vld [vmem:[#allocation6 + $0x40] sm:$0xff]
    %v1065 = vld [vmem:[#allocation6 + $0x48] sm:$0xff]
    %v1066 = vld [vmem:[#allocation6 + $0x50] sm:$0xff]
    %v1067 = vld [vmem:[#allocation6 + $0x58] sm:$0xff]
    %v1068 = vld [vmem:[#allocation6 + $0x60] sm:$0xff]
    %v1069 = vld [vmem:[#allocation6 + $0x68] sm:$0xff]
    %v1070 = vld [vmem:[#allocation6 + $0x70] sm:$0xff]
    %v1071 = vld [vmem:[#allocation6 + $0x78] sm:$0xff]
    %v1072 = vld [vmem:[#allocation6 + $0x80] sm:$0xff]
    %v1073 = vld [vmem:[#allocation6 + $0x88] sm:$0xff]
    %v1074 = vld [vmem:[#allocation6 + $0x90] sm:$0xff]
    %v1075 = vld [vmem:[#allocation6 + $0x98] sm:$0xff]
    %v1076 = vld [vmem:[#allocation6 + $0xa0] sm:$0xff]
    %v1077 = vld [vmem:[#allocation6 + $0xa8] sm:$0xff]
    %v1078 = vld [vmem:[#allocation6 + $0xb0] sm:$0xff]
    %v1079 = vld [vmem:[#allocation6 + $0xb8] sm:$0xff]
    %v1080 = vld [vmem:[#allocation6 + $0xc0] sm:$0xff]
    %v1081 = vld [vmem:[#allocation6 + $0xc8] sm:$0xff]
    %v1082 = vld [vmem:[#allocation6 + $0xd0] sm:$0xff]
    %v1083 = vld [vmem:[#allocation6 + $0xd8] sm:$0xff]
    %v1084 = vld [vmem:[#allocation6 + $0xe0] sm:$0xff]
    %v1085 = vld [vmem:[#allocation6 + $0xe8] sm:$0xff]
    %v1086 = vld [vmem:[#allocation6 + $0xf0] sm:$0xff]
    %v1087 = vld [vmem:[#allocation6 + $0xf8] sm:$0xff]
    %v1088 = vld [vmem:[%s10] sm:$0xff]
    %v1089 = vld [vmem:[%s10 + $0x8] sm:$0xff]
    %v1090 = vld [vmem:[%s10 + $0x10] sm:$0xff]
    %v1091 = vld [vmem:[%s10 + $0x18] sm:$0xff]
    %v1092 = vld [vmem:[#allocation7] sm:$0x1]
    %v1094 = vlaneseq
    %v1095 = vshrl.u32 %v1094, 7
    %v1096 = vsub.s32 0, %v1095
    %v1097 = vrot.slane %v1092, %v1096
    %v1099 = vld [vmem:[%s12] sm:$0xff]
    %v1100 = vld [vmem:[%s12 + $0x8] sm:$0xff]
    %v1101 = vld [vmem:[%s12 + $0x10] sm:$0xff]
    %v1102 = vld [vmem:[%s12 + $0x18] sm:$0xff]
    %v1103 = vld [vmem:[%s8] sm:$0xff]
    %v1104 = vld [vmem:[%s8 + $0x8] sm:$0xff]
    %v1105 = vld [vmem:[%s8 + $0x10] sm:$0xff]
    %v1106 = vld [vmem:[%s8 + $0x18] sm:$0xff]
    %v1107 = vld [vmem:[%s9] sm:$0x1]
    %v1109 = vlaneseq
    %v1110 = vshrl.u32 %v1109, 7
    %v1111 = vsub.s32 0, %v1110
    %v1112 = vrot.slane %v1107, %v1111
    %1115 = vrot.lane.b32.xlu0 %v1055, 96
    %v1116 = vpop.permute.xlu0 %1115
    %v1117 = vsel %vm109, %v1116, 0
    %1119 = vmatprep.subr.mxu0 0.0
    %1120 = vmatpush1.msra.mxu0 %v1103
    %1121 = vmatprep.subr.mxu0 0.0
    %1122 = vmatpush1.msra.mxu0 %v1104
    %1123 = vmatprep.subr.mxu0 0.0
    %1124 = vmatpush1.msra.mxu0 %v1105
    %1125 = vmatprep.subr.mxu0 0.0
    %1126 = vmatpush1.msra.mxu0 %v1106
    %1127 = vmatprep.subr.mxu0 0.0
    %1128 = vmatpush1.msra.mxu0 0.0
    %1129 = vmatprep.subr.mxu0 0.0
    %1130 = vmatpush1.msra.mxu0 0.0
    %1131 = vmatprep.subr.mxu0 0.0
    %1132 = vmatpush1.msra.mxu0 0.0
    %1133 = vmatprep.subr.mxu0 0.0
    %1134 = vmatpush1.msra.mxu0 0.0
    %1135 = vmatprep.subr.mxu0 0.0
    %1136 = vmatpush1.msra.mxu0 0.0
    %1137 = vmatprep.subr.mxu0 0.0
    %1138 = vmatpush1.msra.mxu0 0.0
    %1139 = vmatprep.subr.mxu0 0.0
    %1140 = vmatpush1.msra.mxu0 0.0
    %1141 = vmatprep.subr.mxu0 0.0
    %1142 = vmatpush1.msra.mxu0 0.0
    %1143 = vmatprep.subr.mxu0 0.0
    %1144 = vmatpush1.msra.mxu0 0.0
    %1145 = vmatprep.subr.mxu0 0.0
    %1146 = vmatpush1.msra.mxu0 0.0
    %1147 = vmatprep.subr.mxu0 0.0
    %1148 = vmatpush1.msra.mxu0 0.0
    %1149 = vmatprep.subr.mxu0 0.0
    %1150 = vmatpush1.msra.mxu0 0.0
    %1151 = vmatprep.subr.mxu0 0.0
    %1152 = vmatpush1.msra.mxu0 0.0
    %1153 = vmatprep.subr.mxu0 0.0
    %1154 = vmatpush1.msra.mxu0 0.0
    %1155 = vmatprep.subr.mxu0 0.0
    %1156 = vmatpush1.msra.mxu0 0.0
    %1157 = vmatprep.subr.mxu0 0.0
    %1158 = vmatpush1.msra.mxu0 0.0
    %1159 = vmatprep.subr.mxu0 0.0
    %1160 = vmatpush1.msra.mxu0 0.0
    %1161 = vmatprep.subr.mxu0 0.0
    %1162 = vmatpush1.msra.mxu0 0.0
    %1163 = vmatprep.subr.mxu0 0.0
    %1164 = vmatpush1.msra.mxu0 0.0
    %1165 = vmatprep.subr.mxu0 0.0
    %1166 = vmatpush1.msra.mxu0 0.0
    %1167 = vmatprep.subr.mxu0 0.0
    %1168 = vmatpush1.msra.mxu0 0.0
    %1169 = vmatprep.subr.mxu0 0.0
    %1170 = vmatpush1.msra.mxu0 0.0
    %1171 = vmatprep.subr.mxu0 0.0
    %1172 = vmatpush1.msra.mxu0 0.0
    %1173 = vmatprep.subr.mxu0 0.0
    %1174 = vmatpush1.msra.mxu0 0.0
    %1175 = vmatprep.subr.mxu0 0.0
    %1176 = vmatpush1.msra.mxu0 0.0
    %1177 = vmatprep.subr.mxu0 0.0
    %1178 = vmatpush1.msra.mxu0 0.0
    %1179 = vmatprep.subr.mxu0 0.0
    %1180 = vmatpush1.msra.mxu0 0.0
    %1181 = vmatprep.subr.mxu0 0.0
    %1182 = vmatpush1.msra.mxu0 0.0
    %1183 = vmatprep.mubr.f32.mxu0 0.0
    %1184 = vmatmul.mubr.f32.gmra.mrb[0].mxu0 %v1117
    %v1185 = vpop.f32.mrb[0].mxu0
    %v1186 = vadd.f32 %v1112, %v1185
    %v1187 = vpop.f32.mrb[0].mxu0
    %1188 = vdwg.mxu0
    %v1189 = vld [vmem:[%s13] sm:$0xff]
    %v1190 = vld [vmem:[%s13 + $0x8] sm:$0xff]
    %v1191 = vld [vmem:[%s13 + $0x10] sm:$0xff]
    %v1192 = vld [vmem:[%s13 + $0x18] sm:$0xff]
    %v1193 = vld [vmem:[%s14] sm:$0x1]
    %v1195 = vlaneseq
    %v1196 = vshrl.u32 %v1195, 7
    %v1197 = vsub.s32 0, %v1196
    %v1198 = vrot.slane %v1193, %v1197
    %1200 = vmatprep.subr.mxu0 0.0
    %1201 = vmatpush1.msra.mxu0 %v1189
    %1202 = vmatprep.subr.mxu0 0.0
    %1203 = vmatpush1.msra.mxu0 %v1190
    %1204 = vmatprep.subr.mxu0 0.0
    %1205 = vmatpush1.msra.mxu0 %v1191
    %1206 = vmatprep.subr.mxu0 0.0
    %1207 = vmatpush1.msra.mxu0 %v1192
    %1208 = vmatprep.subr.mxu0 0.0
    %1209 = vmatpush1.msra.mxu0 0.0
    %1210 = vmatprep.subr.mxu0 0.0
    %1211 = vmatpush1.msra.mxu0 0.0
    %1212 = vmatprep.subr.mxu0 0.0
    %1213 = vmatpush1.msra.mxu0 0.0
    %1214 = vmatprep.subr.mxu0 0.0
    %1215 = vmatpush1.msra.mxu0 0.0
    %1216 = vmatprep.subr.mxu0 0.0
    %1217 = vmatpush1.msra.mxu0 0.0
    %1218 = vmatprep.subr.mxu0 0.0
    %1219 = vmatpush1.msra.mxu0 0.0
    %1220 = vmatprep.subr.mxu0 0.0
    %1221 = vmatpush1.msra.mxu0 0.0
    %1222 = vmatprep.subr.mxu0 0.0
    %1223 = vmatpush1.msra.mxu0 0.0
    %1224 = vmatprep.subr.mxu0 0.0
    %1225 = vmatpush1.msra.mxu0 0.0
    %1226 = vmatprep.subr.mxu0 0.0
    %1227 = vmatpush1.msra.mxu0 0.0
    %1228 = vmatprep.subr.mxu0 0.0
    %1229 = vmatpush1.msra.mxu0 0.0
    %1230 = vmatprep.subr.mxu0 0.0
    %1231 = vmatpush1.msra.mxu0 0.0
    %1232 = vmatprep.subr.mxu0 0.0
    %1233 = vmatpush1.msra.mxu0 0.0
    %1234 = vmatprep.subr.mxu0 0.0
    %1235 = vmatpush1.msra.mxu0 0.0
    %1236 = vmatprep.subr.mxu0 0.0
    %1237 = vmatpush1.msra.mxu0 0.0
    %1238 = vmatprep.subr.mxu0 0.0
    %1239 = vmatpush1.msra.mxu0 0.0
    %1240 = vmatprep.subr.mxu0 0.0
    %1241 = vmatpush1.msra.mxu0 0.0
    %1242 = vmatprep.subr.mxu0 0.0
    %1243 = vmatpush1.msra.mxu0 0.0
    %1244 = vmatprep.subr.mxu0 0.0
    %1245 = vmatpush1.msra.mxu0 0.0
    %1246 = vmatprep.subr.mxu0 0.0
    %1247 = vmatpush1.msra.mxu0 0.0
    %1248 = vmatprep.subr.mxu0 0.0
    %1249 = vmatpush1.msra.mxu0 0.0
    %1250 = vmatprep.subr.mxu0 0.0
    %1251 = vmatpush1.msra.mxu0 0.0
    %1252 = vmatprep.subr.mxu0 0.0
    %1253 = vmatpush1.msra.mxu0 0.0
    %1254 = vmatprep.subr.mxu0 0.0
    %1255 = vmatpush1.msra.mxu0 0.0
    %1256 = vmatprep.subr.mxu0 0.0
    %1257 = vmatpush1.msra.mxu0 0.0
    %1258 = vmatprep.subr.mxu0 0.0
    %1259 = vmatpush1.msra.mxu0 0.0
    %1260 = vmatprep.subr.mxu0 0.0
    %1261 = vmatpush1.msra.mxu0 0.0
    %1262 = vmatprep.subr.mxu0 0.0
    %1263 = vmatpush1.msra.mxu0 0.0
    %1264 = vmatprep.mubr.f32.mxu0 0.0
    %1265 = vmatmul.mubr.f32.gmra.mrb[0].mxu0 %v1117
    %v1266 = vpop.f32.mrb[0].mxu0
    %v1267 = vadd.f32 %v1198, %v1266
    %v1268 = vpop.f32.mrb[0].mxu0
    %1269 = vdwg.mxu0
    %v1270 = vlaneseq
    %v1271 = vand.u32 %v1270, 127
    %vm1272 = vcmp.lt.s32.totalorder %v1271, 32
    %v1273 = vsel %vm1272, 0.0, -1e+09
    %1274 = vst [vmem:[#allocation9] sm:$0xff] 0.0
    %v1275 = vld [vmem:[%s1] sm:$0xff]
    %1276 = vmatprep.subr.mxu0 %v1057
    %1277 = vmatpush1.msra.mxu0 %v1056
    %1278 = vmatprep.subr.mxu0 %v1059
    %1279 = vmatpush1.msra.mxu0 %v1058
    %1280 = vmatprep.subr.mxu0 %v1061
    %1281 = vmatpush1.msra.mxu0 %v1060
    %1282 = vmatprep.subr.mxu0 %v1063
    %1283 = vmatpush1.msra.mxu0 %v1062
    %1284 = vmatprep.subr.mxu0 %v1065
    %1285 = vmatpush1.msra.mxu0 %v1064
    %1286 = vmatprep.subr.mxu0 %v1067
    %1287 = vmatpush1.msra.mxu0 %v1066
    %1288 = vmatprep.subr.mxu0 %v1069
    %1289 = vmatpush1.msra.mxu0 %v1068
    %1290 = vmatprep.subr.mxu0 %v1071
    %1291 = vmatpush1.msra.mxu0 %v1070
    %1292 = vmatprep.subr.mxu0 %v1073
    %1293 = vmatpush1.msra.mxu0 %v1072
    %1294 = vmatprep.subr.mxu0 %v1075
    %1295 = vmatpush1.msra.mxu0 %v1074
    %1296 = vmatprep.subr.mxu0 %v1077
    %1297 = vmatpush1.msra.mxu0 %v1076
    %1298 = vmatprep.subr.mxu0 %v1079
    %1299 = vmatpush1.msra.mxu0 %v1078
    %1300 = vmatprep.subr.mxu0 %v1081
    %1301 = vmatpush1.msra.mxu0 %v1080
    %1302 = vmatprep.subr.mxu0 %v1083
    %1303 = vmatpush1.msra.mxu0 %v1082
    %1304 = vmatprep.subr.mxu0 %v1085
    %1305 = vmatpush1.msra.mxu0 %v1084
    %1306 = vmatprep.subr.mxu0 %v1087
    %1307 = vmatpush1.msra.mxu0 %v1086
    %1308 = vmatprep.subr.mxu0 0.0
    %1309 = vmatpush1.msra.mxu0 0.0
    %1310 = vmatprep.subr.mxu0 0.0
    %1311 = vmatpush1.msra.mxu0 0.0
    %1312 = vmatprep.subr.mxu0 0.0
    %1313 = vmatpush1.msra.mxu0 0.0
    %1314 = vmatprep.subr.mxu0 0.0
    %1315 = vmatpush1.msra.mxu0 0.0
    %1316 = vmatprep.subr.mxu0 0.0
    %1317 = vmatpush1.msra.mxu0 0.0
    %1318 = vmatprep.subr.mxu0 0.0
    %1319 = vmatpush1.msra.mxu0 0.0
    %1320 = vmatprep.subr.mxu0 0.0
    %1321 = vmatpush1.msra.mxu0 0.0
    %1322 = vmatprep.subr.mxu0 0.0
    %1323 = vmatpush1.msra.mxu0 0.0
    %1324 = vmatprep.subr.mxu0 0.0
    %1325 = vmatpush1.msra.mxu0 0.0
    %1326 = vmatprep.subr.mxu0 0.0
    %1327 = vmatpush1.msra.mxu0 0.0
    %1328 = vmatprep.subr.mxu0 0.0
    %1329 = vmatpush1.msra.mxu0 0.0
    %1330 = vmatprep.subr.mxu0 0.0
    %1331 = vmatpush1.msra.mxu0 0.0
    %1332 = vmatprep.subr.mxu0 0.0
    %1333 = vmatpush1.msra.mxu0 0.0
    %1334 = vmatprep.subr.mxu0 0.0
    %1335 = vmatpush1.msra.mxu0 0.0
    %1336 = vmatprep.subr.mxu0 0.0
    %1337 = vmatpush1.msra.mxu0 0.0
    %1338 = vmatprep.subr.mxu0 0.0
    %1339 = vmatpush1.msra.mxu0 0.0
    %1340 = vmatprep.mubr.f32.mxu0 0.0
    %1341 = vmatmul.mubr.f32.gmra.mrb[0].mxu0 %v1275
    %v1342 = vpop.f32.mrb[0].mxu0
    %v1343 = vadd.f32 0.0, %v1342
    %v1344 = vpop.f32.mrb[0].mxu0
    %v1345 = vadd.f32 0.0, %v1344
    %1346 = vdwg.mxu0
    %v1347 = vadd.f32 %v1343, %v1186
    %1348 = vmatprep.subr.mxu0 0.0
    %1349 = vmatpush1.msra.mxu0 %v1088
    %1350 = vmatprep.subr.mxu0 0.0
    %1351 = vmatpush1.msra.mxu0 %v1089
    %1352 = vmatprep.subr.mxu0 0.0
    %1353 = vmatpush1.msra.mxu0 %v1090
    %1354 = vmatprep.subr.mxu0 0.0
    %1355 = vmatpush1.msra.mxu0 %v1091
    %1356 = vmatprep.subr.mxu0 0.0
    %1357 = vmatpush1.msra.mxu0 0.0
    %1358 = vmatprep.subr.mxu0 0.0
    %1359 = vmatpush1.msra.mxu0 0.0
    %1360 = vmatprep.subr.mxu0 0.0
    %1361 = vmatpush1.msra.mxu0 0.0
    %1362 = vmatprep.subr.mxu0 0.0
    %1363 = vmatpush1.msra.mxu0 0.0
    %1364 = vmatprep.subr.mxu0 0.0
    %1365 = vmatpush1.msra.mxu0 0.0
    %1366 = vmatprep.subr.mxu0 0.0
    %1367 = vmatpush1.msra.mxu0 0.0
    %1368 = vmatprep.subr.mxu0 0.0
    %1369 = vmatpush1.msra.mxu0 0.0
    %1370 = vmatprep.subr.mxu0 0.0
    %1371 = vmatpush1.msra.mxu0 0.0
    %1372 = vmatprep.subr.mxu0 0.0
    %1373 = vmatpush1.msra.mxu0 0.0
    %1374 = vmatprep.subr.mxu0 0.0
    %1375 = vmatpush1.msra.mxu0 0.0
    %1376 = vmatprep.subr.mxu0 0.0
    %1377 = vmatpush1.msra.mxu0 0.0
    %1378 = vmatprep.subr.mxu0 0.0
    %1379 = vmatpush1.msra.mxu0 0.0
    %1380 = vmatprep.subr.mxu0 0.0
    %1381 = vmatpush1.msra.mxu0 0.0
    %1382 = vmatprep.subr.mxu0 0.0
    %1383 = vmatpush1.msra.mxu0 0.0
    %1384 = vmatprep.subr.mxu0 0.0
    %1385 = vmatpush1.msra.mxu0 0.0
    %1386 = vmatprep.subr.mxu0 0.0
    %1387 = vmatpush1.msra.mxu0 0.0
    %1388 = vmatprep.subr.mxu0 0.0
    %1389 = vmatpush1.msra.mxu0 0.0
    %1390 = vmatprep.subr.mxu0 0.0
    %1391 = vmatpush1.msra.mxu0 0.0
    %1392 = vmatprep.subr.mxu0 0.0
    %1393 = vmatpush1.msra.mxu0 0.0
    %1394 = vmatprep.subr.mxu0 0.0
    %1395 = vmatpush1.msra.mxu0 0.0
    %1396 = vmatprep.subr.mxu0 0.0
    %1397 = vmatpush1.msra.mxu0 0.0
    %1398 = vmatprep.subr.mxu0 0.0
    %1399 = vmatpush1.msra.mxu0 0.0
    %1400 = vmatprep.subr.mxu0 0.0
    %1401 = vmatpush1.msra.mxu0 0.0
    %1402 = vmatprep.subr.mxu0 0.0
    %1403 = vmatpush1.msra.mxu0 0.0
    %1404 = vmatprep.subr.mxu0 0.0
    %1405 = vmatpush1.msra.mxu0 0.0
    %1406 = vmatprep.subr.mxu0 0.0
    %1407 = vmatpush1.msra.mxu0 0.0
    %1408 = vmatprep.subr.mxu0 0.0
    %1409 = vmatpush1.msra.mxu0 0.0
    %1410 = vmatprep.subr.mxu0 0.0
    %1411 = vmatpush1.msra.mxu0 0.0
    %1412 = vmatprep.mubr.f32.mxu0 0.0
    %1413 = vmatmul.mubr.f32.gmra.mrb[0].mxu0 %v1117
    %v1414 = vpop.f32.mrb[0].mxu0
    %v1415 = vadd.f32 %v1097, %v1414
    %v1416 = vpop.f32.mrb[0].mxu0
    %1417 = vdwg.mxu0
    %v1418 = vadd.f32 %v1347, %v1415
    %v1419 = vxor.u32 %v1418, 2147483648
    %v1420 = vmul.f32 %v1419, 1.442695
    %v1421 = vpow.pop %v1420
    %v1422 = vadd.f32 %v1421, 1.0
    %v1423 = vrcp.pop %v1422
    %v1424 = vmul.f32 1.0, %v1423
    %1426 = vrot.lane.b32.xlu0 %v1415, 64
    %v1427 = vpop.permute.xlu0 %1426
    %v1429 = vmul.f32 %v1424, %v1427
    %1431 = vrot.lane.b32.xlu0 %v1429, 64
    %v1432 = vpop.permute.xlu0 %1431
    %v1434 = vadd.f32 %v1347, %v1432
    %v1435 = vtanh.pop %v1434
    %v1436 = vsub.f32 1.0, %v1424
    %1438 = vrot.lane.b32.xlu0 %v1435, 96
    %v1439 = vpop.permute.xlu0 %1438
    %v1441 = vmul.f32 %v1436, %v1439
    %v1442 = vmul.f32 %v1424, %v1055
    %v1443 = vadd.f32 %v1441, %v1442
    %1445 = vrot.lane.b32.xlu0 %v1443, 96
    %v1446 = vpop.permute.xlu0 %1445
    %v1447 = vsel %vm109, %v1446, 0
    %1449 = vmatprep.subr.mxu0 0.0
    %1450 = vmatpush1.msra.mxu0 %v1099
    %1451 = vmatprep.subr.mxu0 0.0
    %1452 = vmatpush1.msra.mxu0 %v1100
    %1453 = vmatprep.subr.mxu0 0.0
    %1454 = vmatpush1.msra.mxu0 %v1101
    %1455 = vmatprep.subr.mxu0 0.0
    %1456 = vmatpush1.msra.mxu0 %v1102
    %1457 = vmatprep.subr.mxu0 0.0
    %1458 = vmatpush1.msra.mxu0 0.0
    %1459 = vmatprep.subr.mxu0 0.0
    %1460 = vmatpush1.msra.mxu0 0.0
    %1461 = vmatprep.subr.mxu0 0.0
    %1462 = vmatpush1.msra.mxu0 0.0
    %1463 = vmatprep.subr.mxu0 0.0
    %1464 = vmatpush1.msra.mxu0 0.0
    %1465 = vmatprep.subr.mxu0 0.0
    %1466 = vmatpush1.msra.mxu0 0.0
    %1467 = vmatprep.subr.mxu0 0.0
    %1468 = vmatpush1.msra.mxu0 0.0
    %1469 = vmatprep.subr.mxu0 0.0
    %1470 = vmatpush1.msra.mxu0 0.0
    %1471 = vmatprep.subr.mxu0 0.0
    %1472 = vmatpush1.msra.mxu0 0.0
    %1473 = vmatprep.subr.mxu0 0.0
    %1474 = vmatpush1.msra.mxu0 0.0
    %1475 = vmatprep.subr.mxu0 0.0
    %1476 = vmatpush1.msra.mxu0 0.0
    %1477 = vmatprep.subr.mxu0 0.0
    %1478 = vmatpush1.msra.mxu0 0.0
    %1479 = vmatprep.subr.mxu0 0.0
    %1480 = vmatpush1.msra.mxu0 0.0
    %1481 = vmatprep.subr.mxu0 0.0
    %1482 = vmatpush1.msra.mxu0 0.0
    %1483 = vmatprep.subr.mxu0 0.0
    %1484 = vmatpush1.msra.mxu0 0.0
    %1485 = vmatprep.subr.mxu0 0.0
    %1486 = vmatpush1.msra.mxu0 0.0
    %1487 = vmatprep.subr.mxu0 0.0
    %1488 = vmatpush1.msra.mxu0 0.0
    %1489 = vmatprep.subr.mxu0 0.0
    %1490 = vmatpush1.msra.mxu0 0.0
    %1491 = vmatprep.subr.mxu0 0.0
    %1492 = vmatpush1.msra.mxu0 0.0
    %1493 = vmatprep.subr.mxu0 0.0
    %1494 = vmatpush1.msra.mxu0 0.0
    %1495 = vmatprep.subr.mxu0 0.0
    %1496 = vmatpush1.msra.mxu0 0.0
    %1497 = vmatprep.subr.mxu0 0.0
    %1498 = vmatpush1.msra.mxu0 0.0
    %1499 = vmatprep.subr.mxu0 0.0
    %1500 = vmatpush1.msra.mxu0 0.0
    %1501 = vmatprep.subr.mxu0 0.0
    %1502 = vmatpush1.msra.mxu0 0.0
    %1503 = vmatprep.subr.mxu0 0.0
    %1504 = vmatpush1.msra.mxu0 0.0
    %1505 = vmatprep.subr.mxu0 0.0
    %1506 = vmatpush1.msra.mxu0 0.0
    %1507 = vmatprep.subr.mxu0 0.0
    %1508 = vmatpush1.msra.mxu0 0.0
    %1509 = vmatprep.subr.mxu0 0.0
    %1510 = vmatpush1.msra.mxu0 0.0
    %1511 = vmatprep.subr.mxu0 0.0
    %1512 = vmatpush1.msra.mxu0 0.0
    %1513 = vmatprep.mubr.f32.mxu0 0.0
    %1514 = vmatmul.mubr.f32.gmra.mrb[0].mxu0 %v1447
    %v1515 = vpop.f32.mrb[0].mxu0
    %v1516 = vadd.f32 0.0, %v1515
    %v1517 = vpop.f32.mrb[0].mxu0
    %1518 = vdwg.mxu0
    %v1519 = vadd.f32 %v1345, %v1516
    %v1520 = vadd.f32 %v1519, %v1267
    %s1521 = scalar_lea.vmem [#allocation9], 8
    %1522 = vst [vmem:[%s1521] sm:$0xff] %v1520
    %v1523 = vadd.f32 %v1520, %v1273
    %1524 = vmax.xlane.f32.xlu0 %v1523
    %v1525 = vpop.xlane.xlu0 %1524
    %vm1526 = vcmp.ge.f32.partialorder %v1523, %v1525
    %v1527 = vsel %vm1526, %v1271, 128
    %v1528 = vand.u32 %v1527, 65535
    %v1529 = vshra.s32 %v1527, 16
    %v1530 = vcvt.s32.f32 %v1528
    %v1531 = vcvt.s32.f32 %v1529
    %1532 = vmin.xlane.f32.xlu0 %v1531
    %v1533 = vpop.xlane.xlu0 %1532
    %vm1534 = vcmp.eq.f32.partialorder %v1531, %v1533
    %v1535 = vsel %vm1534, %v1530, inf
    %1536 = vmin.xlane.f32.xlu0 %v1535
    %v1537 = vpop.xlane.xlu0 %1536
    %v1538 = vcvt.f32.s32 %v1537
    %v1539 = vcvt.f32.s32 %v1533
    %v1540 = vshll.u32 %v1539, 16
    %v1541 = vadd.s32 %v1540, %v1538
    %vm1542 = vcmp.eq.s32.totalorder %v1271, %v1541
    %v1543 = vsel %vm1542, 1, 0
    %v1544 = vcvt.s32.f32 %v1543
    %s1545 = sld [smem:[#allocation2 + $0x1]]
    %v1546 = vstv %s1545
    %vm1547 = vcmp.eq.s32.totalorder %v1546, 1
    %s1548 = scalar_lea.vmem %s1, 8
    %v1549 = vld [vmem:[%s1548] sm:$0xff]
    %v1550 = vsel %vm1547, %v1549, %v1544
    %1551 = vmatprep.subr.mxu0 %v1057
    %1552 = vmatpush1.msra.mxu0 %v1056
    %1553 = vmatprep.subr.mxu0 %v1059
    %1554 = vmatpush1.msra.mxu0 %v1058
    %1555 = vmatprep.subr.mxu0 %v1061
    %1556 = vmatpush1.msra.mxu0 %v1060
    %1557 = vmatprep.subr.mxu0 %v1063
    %1558 = vmatpush1.msra.mxu0 %v1062
    %1559 = vmatprep.subr.mxu0 %v1065
    %1560 = vmatpush1.msra.mxu0 %v1064
    %1561 = vmatprep.subr.mxu0 %v1067
    %1562 = vmatpush1.msra.mxu0 %v1066
    %1563 = vmatprep.subr.mxu0 %v1069
    %1564 = vmatpush1.msra.mxu0 %v1068
    %1565 = vmatprep.subr.mxu0 %v1071
    %1566 = vmatpush1.msra.mxu0 %v1070
    %1567 = vmatprep.subr.mxu0 %v1073
    %1568 = vmatpush1.msra.mxu0 %v1072
    %1569 = vmatprep.subr.mxu0 %v1075
    %1570 = vmatpush1.msra.mxu0 %v1074
    %1571 = vmatprep.subr.mxu0 %v1077
    %1572 = vmatpush1.msra.mxu0 %v1076
    %1573 = vmatprep.subr.mxu0 %v1079
    %1574 = vmatpush1.msra.mxu0 %v1078
    %1575 = vmatprep.subr.mxu0 %v1081
    %1576 = vmatpush1.msra.mxu0 %v1080
    %1577 = vmatprep.subr.mxu0 %v1083
    %1578 = vmatpush1.msra.mxu0 %v1082
    %1579 = vmatprep.subr.mxu0 %v1085
    %1580 = vmatpush1.msra.mxu0 %v1084
    %1581 = vmatprep.subr.mxu0 %v1087
    %1582 = vmatpush1.msra.mxu0 %v1086
    %1583 = vmatprep.subr.mxu0 0.0
    %1584 = vmatpush1.msra.mxu0 0.0
    %1585 = vmatprep.subr.mxu0 0.0
    %1586 = vmatpush1.msra.mxu0 0.0
    %1587 = vmatprep.subr.mxu0 0.0
    %1588 = vmatpush1.msra.mxu0 0.0
    %1589 = vmatprep.subr.mxu0 0.0
    %1590 = vmatpush1.msra.mxu0 0.0
    %1591 = vmatprep.subr.mxu0 0.0
    %1592 = vmatpush1.msra.mxu0 0.0
    %1593 = vmatprep.subr.mxu0 0.0
    %1594 = vmatpush1.msra.mxu0 0.0
    %1595 = vmatprep.subr.mxu0 0.0
    %1596 = vmatpush1.msra.mxu0 0.0
    %1597 = vmatprep.subr.mxu0 0.0
    %1598 = vmatpush1.msra.mxu0 0.0
    %1599 = vmatprep.subr.mxu0 0.0
    %1600 = vmatpush1.msra.mxu0 0.0
    %1601 = vmatprep.subr.mxu0 0.0
    %1602 = vmatpush1.msra.mxu0 0.0
    %1603 = vmatprep.subr.mxu0 0.0
    %1604 = vmatpush1.msra.mxu0 0.0
    %1605 = vmatprep.subr.mxu0 0.0
    %1606 = vmatpush1.msra.mxu0 0.0
    %1607 = vmatprep.subr.mxu0 0.0
    %1608 = vmatpush1.msra.mxu0 0.0
    %1609 = vmatprep.subr.mxu0 0.0
    %1610 = vmatpush1.msra.mxu0 0.0
    %1611 = vmatprep.subr.mxu0 0.0
    %1612 = vmatpush1.msra.mxu0 0.0
    %1613 = vmatprep.subr.mxu0 0.0
    %1614 = vmatpush1.msra.mxu0 0.0
    %1615 = vmatprep.mubr.f32.mxu0 0.0
    %1616 = vmatmul.mubr.f32.gmra.mrb[0].mxu0 %v1550
    %v1617 = vpop.f32.mrb[0].mxu0
    %v1618 = vadd.f32 0.0, %v1617
    %v1619 = vpop.f32.mrb[0].mxu0
    %v1620 = vadd.f32 0.0, %v1619
    %1621 = vdwg.mxu0
    %v1622 = vadd.f32 %v1618, %v1186
    %1623 = vmatprep.subr.mxu0 0.0
    %1624 = vmatpush1.msra.mxu0 %v1088
    %1625 = vmatprep.subr.mxu0 0.0
    %1626 = vmatpush1.msra.mxu0 %v1089
    %1627 = vmatprep.subr.mxu0 0.0
    %1628 = vmatpush1.msra.mxu0 %v1090
    %1629 = vmatprep.subr.mxu0 0.0
    %1630 = vmatpush1.msra.mxu0 %v1091
    %1631 = vmatprep.subr.mxu0 0.0
    %1632 = vmatpush1.msra.mxu0 0.0
    %1633 = vmatprep.subr.mxu0 0.0
    %1634 = vmatpush1.msra.mxu0 0.0
    %1635 = vmatprep.subr.mxu0 0.0
    %1636 = vmatpush1.msra.mxu0 0.0
    %1637 = vmatprep.subr.mxu0 0.0
    %1638 = vmatpush1.msra.mxu0 0.0
    %1639 = vmatprep.subr.mxu0 0.0
    %1640 = vmatpush1.msra.mxu0 0.0
    %1641 = vmatprep.subr.mxu0 0.0
    %1642 = vmatpush1.msra.mxu0 0.0
    %1643 = vmatprep.subr.mxu0 0.0
    %1644 = vmatpush1.msra.mxu0 0.0
    %1645 = vmatprep.subr.mxu0 0.0
    %1646 = vmatpush1.msra.mxu0 0.0
    %1647 = vmatprep.subr.mxu0 0.0
    %1648 = vmatpush1.msra.mxu0 0.0
    %1649 = vmatprep.subr.mxu0 0.0
    %1650 = vmatpush1.msra.mxu0 0.0
    %1651 = vmatprep.subr.mxu0 0.0
    %1652 = vmatpush1.msra.mxu0 0.0
    %1653 = vmatprep.subr.mxu0 0.0
    %1654 = vmatpush1.msra.mxu0 0.0
    %1655 = vmatprep.subr.mxu0 0.0
    %1656 = vmatpush1.msra.mxu0 0.0
    %1657 = vmatprep.subr.mxu0 0.0
    %1658 = vmatpush1.msra.mxu0 0.0
    %1659 = vmatprep.subr.mxu0 0.0
    %1660 = vmatpush1.msra.mxu0 0.0
    %1661 = vmatprep.subr.mxu0 0.0
    %1662 = vmatpush1.msra.mxu0 0.0
    %1663 = vmatprep.subr.mxu0 0.0
    %1664 = vmatpush1.msra.mxu0 0.0
    %1665 = vmatprep.subr.mxu0 0.0
    %1666 = vmatpush1.msra.mxu0 0.0
    %1667 = vmatprep.subr.mxu0 0.0
    %1668 = vmatpush1.msra.mxu0 0.0
    %1669 = vmatprep.subr.mxu0 0.0
    %1670 = vmatpush1.msra.mxu0 0.0
    %1671 = vmatprep.subr.mxu0 0.0
    %1672 = vmatpush1.msra.mxu0 0.0
    %1673 = vmatprep.subr.mxu0 0.0
    %1674 = vmatpush1.msra.mxu0 0.0
    %1675 = vmatprep.subr.mxu0 0.0
    %1676 = vmatpush1.msra.mxu0 0.0
    %1677 = vmatprep.subr.mxu0 0.0
    %1678 = vmatpush1.msra.mxu0 0.0
    %1679 = vmatprep.subr.mxu0 0.0
    %1680 = vmatpush1.msra.mxu0 0.0
    %1681 = vmatprep.subr.mxu0 0.0
    %1682 = vmatpush1.msra.mxu0 0.0
    %1683 = vmatprep.subr.mxu0 0.0
    %1684 = vmatpush1.msra.mxu0 0.0
    %1685 = vmatprep.subr.mxu0 0.0
    %1686 = vmatpush1.msra.mxu0 0.0
    %1687 = vmatprep.mubr.f32.mxu0 0.0
    %1688 = vmatmul.mubr.f32.gmra.mrb[0].mxu0 %v1447
    %v1689 = vpop.f32.mrb[0].mxu0
    %v1690 = vadd.f32 %v1097, %v1689
    %v1691 = vpop.f32.mrb[0].mxu0
    %1692 = vdwg.mxu0
    %v1693 = vadd.f32 %v1622, %v1690
    %v1694 = vxor.u32 %v1693, 2147483648
    %v1695 = vmul.f32 %v1694, 1.442695
    %v1696 = vpow.pop %v1695
    %v1697 = vadd.f32 %v1696, 1.0
    %v1698 = vrcp.pop %v1697
    %v1699 = vmul.f32 1.0, %v1698
    %1701 = vrot.lane.b32.xlu0 %v1690, 64
    %v1702 = vpop.permute.xlu0 %1701
    %v1704 = vmul.f32 %v1699, %v1702
    %1706 = vrot.lane.b32.xlu0 %v1704, 64
    %v1707 = vpop.permute.xlu0 %1706
    %v1709 = vadd.f32 %v1622, %v1707
    %v1710 = vtanh.pop %v1709
    %v1711 = vsub.f32 1.0, %v1699
    %1713 = vrot.lane.b32.xlu0 %v1710, 96
    %v1714 = vpop.permute.xlu0 %1713
    %v1716 = vmul.f32 %v1711, %v1714
    %v1717 = vmul.f32 %v1699, %v1443
    %v1718 = vadd.f32 %v1716, %v1717
    %1720 = vrot.lane.b32.xlu0 %v1718, 96
    %v1721 = vpop.permute.xlu0 %1720
    %v1722 = vsel %vm109, %v1721, 0
    %1724 = vmatprep.subr.mxu0 0.0
    %1725 = vmatpush1.msra.mxu0 %v1099
    %1726 = vmatprep.subr.mxu0 0.0
    %1727 = vmatpush1.msra.mxu0 %v1100
    %1728 = vmatprep.subr.mxu0 0.0
    %1729 = vmatpush1.msra.mxu0 %v1101
    %1730 = vmatprep.subr.mxu0 0.0
    %1731 = vmatpush1.msra.mxu0 %v1102
    %1732 = vmatprep.subr.mxu0 0.0
    %1733 = vmatpush1.msra.mxu0 0.0
    %1734 = vmatprep.subr.mxu0 0.0
    %1735 = vmatpush1.msra.mxu0 0.0
    %1736 = vmatprep.subr.mxu0 0.0
    %1737 = vmatpush1.msra.mxu0 0.0
    %1738 = vmatprep.subr.mxu0 0.0
    %1739 = vmatpush1.msra.mxu0 0.0
    %1740 = vmatprep.subr.mxu0 0.0
    %1741 = vmatpush1.msra.mxu0 0.0
    %1742 = vmatprep.subr.mxu0 0.0
    %1743 = vmatpush1.msra.mxu0 0.0
    %1744 = vmatprep.subr.mxu0 0.0
    %1745 = vmatpush1.msra.mxu0 0.0
    %1746 = vmatprep.subr.mxu0 0.0
    %1747 = vmatpush1.msra.mxu0 0.0
    %1748 = vmatprep.subr.mxu0 0.0
    %1749 = vmatpush1.msra.mxu0 0.0
    %1750 = vmatprep.subr.mxu0 0.0
    %1751 = vmatpush1.msra.mxu0 0.0
    %1752 = vmatprep.subr.mxu0 0.0
    %1753 = vmatpush1.msra.mxu0 0.0
    %1754 = vmatprep.subr.mxu0 0.0
    %1755 = vmatpush1.msra.mxu0 0.0
    %1756 = vmatprep.subr.mxu0 0.0
    %1757 = vmatpush1.msra.mxu0 0.0
    %1758 = vmatprep.subr.mxu0 0.0
    %1759 = vmatpush1.msra.mxu0 0.0
    %1760 = vmatprep.subr.mxu0 0.0
    %1761 = vmatpush1.msra.mxu0 0.0
    %1762 = vmatprep.subr.mxu0 0.0
    %1763 = vmatpush1.msra.mxu0 0.0
    %1764 = vmatprep.subr.mxu0 0.0
    %1765 = vmatpush1.msra.mxu0 0.0
    %1766 = vmatprep.subr.mxu0 0.0
    %1767 = vmatpush1.msra.mxu0 0.0
    %1768 = vmatprep.subr.mxu0 0.0
    %1769 = vmatpush1.msra.mxu0 0.0
    %1770 = vmatprep.subr.mxu0 0.0
    %1771 = vmatpush1.msra.mxu0 0.0
    %1772 = vmatprep.subr.mxu0 0.0
    %1773 = vmatpush1.msra.mxu0 0.0
    %1774 = vmatprep.subr.mxu0 0.0
    %1775 = vmatpush1.msra.mxu0 0.0
    %1776 = vmatprep.subr.mxu0 0.0
    %1777 = vmatpush1.msra.mxu0 0.0
    %1778 = vmatprep.subr.mxu0 0.0
    %1779 = vmatpush1.msra.mxu0 0.0
    %1780 = vmatprep.subr.mxu0 0.0
    %1781 = vmatpush1.msra.mxu0 0.0
    %1782 = vmatprep.subr.mxu0 0.0
    %1783 = vmatpush1.msra.mxu0 0.0
    %1784 = vmatprep.subr.mxu0 0.0
    %1785 = vmatpush1.msra.mxu0 0.0
    %1786 = vmatprep.subr.mxu0 0.0
    %1787 = vmatpush1.msra.mxu0 0.0
    %1788 = vmatprep.mubr.f32.mxu0 0.0
    %1789 = vmatmul.mubr.f32.gmra.mrb[0].mxu0 %v1722
    %v1790 = vpop.f32.mrb[0].mxu0
    %v1791 = vadd.f32 0.0, %v1790
    %v1792 = vpop.f32.mrb[0].mxu0
    %1793 = vdwg.mxu0
    %v1794 = vadd.f32 %v1620, %v1791
    %v1795 = vadd.f32 %v1794, %v1267
    %s1796 = scalar_lea.vmem [#allocation9], 16
    %1797 = vst [vmem:[%s1796] sm:$0xff] %v1795
    %v1798 = vadd.f32 %v1795, %v1273
    %1799 = vmax.xlane.f32.xlu0 %v1798
    %v1800 = vpop.xlane.xlu0 %1799
    %vm1801 = vcmp.ge.f32.partialorder %v1798, %v1800
    %v1802 = vsel %vm1801, %v1271, 128
    %v1803 = vand.u32 %v1802, 65535
    %v1804 = vshra.s32 %v1802, 16
    %v1805 = vcvt.s32.f32 %v1803
    %v1806 = vcvt.s32.f32 %v1804
    %1807 = vmin.xlane.f32.xlu0 %v1806
    %v1808 = vpop.xlane.xlu0 %1807
    %vm1809 = vcmp.eq.f32.partialorder %v1806, %v1808
    %v1810 = vsel %vm1809, %v1805, inf
    %1811 = vmin.xlane.f32.xlu0 %v1810
    %v1812 = vpop.xlane.xlu0 %1811
    %v1813 = vcvt.f32.s32 %v1812
    %v1814 = vcvt.f32.s32 %v1808
    %v1815 = vshll.u32 %v1814, 16
    %v1816 = vadd.s32 %v1815, %v1813
    %vm1817 = vcmp.eq.s32.totalorder %v1271, %v1816
    %v1818 = vsel %vm1817, 1, 0
    %v1819 = vcvt.s32.f32 %v1818
    %s1820 = sld [smem:[#allocation2 + $0x2]]
    %v1821 = vstv %s1820
    %vm1822 = vcmp.eq.s32.totalorder %v1821, 1
    %s1823 = scalar_lea.vmem %s1, 16
    %v1824 = vld [vmem:[%s1823] sm:$0xff]
    %v1825 = vsel %vm1822, %v1824, %v1819
    %1826 = vmatprep.subr.mxu0 %v1057
    %1827 = vmatpush1.msra.mxu0 %v1056
    %1828 = vmatprep.subr.mxu0 %v1059
    %1829 = vmatpush1.msra.mxu0 %v1058
    %1830 = vmatprep.subr.mxu0 %v1061
    %1831 = vmatpush1.msra.mxu0 %v1060
    %1832 = vmatprep.subr.mxu0 %v1063
    %1833 = vmatpush1.msra.mxu0 %v1062
    %1834 = vmatprep.subr.mxu0 %v1065
    %1835 = vmatpush1.msra.mxu0 %v1064
    %1836 = vmatprep.subr.mxu0 %v1067
    %1837 = vmatpush1.msra.mxu0 %v1066
    %1838 = vmatprep.subr.mxu0 %v1069
    %1839 = vmatpush1.msra.mxu0 %v1068
    %1840 = vmatprep.subr.mxu0 %v1071
    %1841 = vmatpush1.msra.mxu0 %v1070
    %1842 = vmatprep.subr.mxu0 %v1073
    %1843 = vmatpush1.msra.mxu0 %v1072
    %1844 = vmatprep.subr.mxu0 %v1075
    %1845 = vmatpush1.msra.mxu0 %v1074
    %1846 = vmatprep.subr.mxu0 %v1077
    %1847 = vmatpush1.msra.mxu0 %v1076
    %1848 = vmatprep.subr.mxu0 %v1079
    %1849 = vmatpush1.msra.mxu0 %v1078
    %1850 = vmatprep.subr.mxu0 %v1081
    %1851 = vmatpush1.msra.mxu0 %v1080
    %1852 = vmatprep.subr.mxu0 %v1083
    %1853 = vmatpush1.msra.mxu0 %v1082
    %1854 = vmatprep.subr.mxu0 %v1085
    %1855 = vmatpush1.msra.mxu0 %v1084
    %1856 = vmatprep.subr.mxu0 %v1087
    %1857 = vmatpush1.msra.mxu0 %v1086
    %1858 = vmatprep.subr.mxu0 0.0
    %1859 = vmatpush1.msra.mxu0 0.0
    %1860 = vmatprep.subr.mxu0 0.0
    %1861 = vmatpush1.msra.mxu0 0.0
    %1862 = vmatprep.subr.mxu0 0.0
    %1863 = vmatpush1.msra.mxu0 0.0
    %1864 = vmatprep.subr.mxu0 0.0
    %1865 = vmatpush1.msra.mxu0 0.0
    %1866 = vmatprep.subr.mxu0 0.0
    %1867 = vmatpush1.msra.mxu0 0.0
    %1868 = vmatprep.subr.mxu0 0.0
    %1869 = vmatpush1.msra.mxu0 0.0
    %1870 = vmatprep.subr.mxu0 0.0
    %1871 = vmatpush1.msra.mxu0 0.0
    %1872 = vmatprep.subr.mxu0 0.0
    %1873 = vmatpush1.msra.mxu0 0.0
    %1874 = vmatprep.subr.mxu0 0.0
    %1875 = vmatpush1.msra.mxu0 0.0
    %1876 = vmatprep.subr.mxu0 0.0
    %1877 = vmatpush1.msra.mxu0 0.0
    %1878 = vmatprep.subr.mxu0 0.0
    %1879 = vmatpush1.msra.mxu0 0.0
    %1880 = vmatprep.subr.mxu0 0.0
    %1881 = vmatpush1.msra.mxu0 0.0
    %1882 = vmatprep.subr.mxu0 0.0
    %1883 = vmatpush1.msra.mxu0 0.0
    %1884 = vmatprep.subr.mxu0 0.0
    %1885 = vmatpush1.msra.mxu0 0.0
    %1886 = vmatprep.subr.mxu0 0.0
    %1887 = vmatpush1.msra.mxu0 0.0
    %1888 = vmatprep.subr.mxu0 0.0
    %1889 = vmatpush1.msra.mxu0 0.0
    %1890 = vmatprep.mubr.f32.mxu0 0.0
    %1891 = vmatmul.mubr.f32.gmra.mrb[0].mxu0 %v1825
    %v1892 = vpop.f32.mrb[0].mxu0
    %v1893 = vadd.f32 0.0, %v1892
    %v1894 = vpop.f32.mrb[0].mxu0
    %v1895 = vadd.f32 0.0, %v1894
    %1896 = vdwg.mxu0
    %v1897 = vadd.f32 %v1893, %v1186
    %1898 = vmatprep.subr.mxu0 0.0
    %1899 = vmatpush1.msra.mxu0 %v1088
    %1900 = vmatprep.subr.mxu0 0.0
    %1901 = vmatpush1.msra.mxu0 %v1089
    %1902 = vmatprep.subr.mxu0 0.0
    %1903 = vmatpush1.msra.mxu0 %v1090
    %1904 = vmatprep.subr.mxu0 0.0
    %1905 = vmatpush1.msra.mxu0 %v1091
    %1906 = vmatprep.subr.mxu0 0.0
    %1907 = vmatpush1.msra.mxu0 0.0
    %1908 = vmatprep.subr.mxu0 0.0
    %1909 = vmatpush1.msra.mxu0 0.0
    %1910 = vmatprep.subr.mxu0 0.0
    %1911 = vmatpush1.msra.mxu0 0.0
    %1912 = vmatprep.subr.mxu0 0.0
    %1913 = vmatpush1.msra.mxu0 0.0
    %1914 = vmatprep.subr.mxu0 0.0
    %1915 = vmatpush1.msra.mxu0 0.0
    %1916 = vmatprep.subr.mxu0 0.0
    %1917 = vmatpush1.msra.mxu0 0.0
    %1918 = vmatprep.subr.mxu0 0.0
    %1919 = vmatpush1.msra.mxu0 0.0
    %1920 = vmatprep.subr.mxu0 0.0
    %1921 = vmatpush1.msra.mxu0 0.0
    %1922 = vmatprep.subr.mxu0 0.0
    %1923 = vmatpush1.msra.mxu0 0.0
    %1924 = vmatprep.subr.mxu0 0.0
    %1925 = vmatpush1.msra.mxu0 0.0
    %1926 = vmatprep.subr.mxu0 0.0
    %1927 = vmatpush1.msra.mxu0 0.0
    %1928 = vmatprep.subr.mxu0 0.0
    %1929 = vmatpush1.msra.mxu0 0.0
    %1930 = vmatprep.subr.mxu0 0.0
    %1931 = vmatpush1.msra.mxu0 0.0
    %1932 = vmatprep.subr.mxu0 0.0
    %1933 = vmatpush1.msra.mxu0 0.0
    %1934 = vmatprep.subr.mxu0 0.0
    %1935 = vmatpush1.msra.mxu0 0.0
    %1936 = vmatprep.subr.mxu0 0.0
    %1937 = vmatpush1.msra.mxu0 0.0
    %1938 = vmatprep.subr.mxu0 0.0
    %1939 = vmatpush1.msra.mxu0 0.0
    %1940 = vmatprep.subr.mxu0 0.0
    %1941 = vmatpush1.msra.mxu0 0.0
    %1942 = vmatprep.subr.mxu0 0.0
    %1943 = vmatpush1.msra.mxu0 0.0
    %1944 = vmatprep.subr.mxu0 0.0
    %1945 = vmatpush1.msra.mxu0 0.0
    %1946 = vmatprep.subr.mxu0 0.0
    %1947 = vmatpush1.msra.mxu0 0.0
    %1948 = vmatprep.subr.mxu0 0.0
    %1949 = vmatpush1.msra.mxu0 0.0
    %1950 = vmatprep.subr.mxu0 0.0
    %1951 = vmatpush1.msra.mxu0 0.0
    %1952 = vmatprep.subr.mxu0 0.0
    %1953 = vmatpush1.msra.mxu0 0.0
    %1954 = vmatprep.subr.mxu0 0.0
    %1955 = vmatpush1.msra.mxu0 0.0
    %1956 = vmatprep.subr.mxu0 0.0
    %1957 = vmatpush1.msra.mxu0 0.0
    %1958 = vmatprep.subr.mxu0 0.0
    %1959 = vmatpush1.msra.mxu0 0.0
    %1960 = vmatprep.subr.mxu0 0.0
    %1961 = vmatpush1.msra.mxu0 0.0
    %1962 = vmatprep.mubr.f32.mxu0 0.0
    %1963 = vmatmul.mubr.f32.gmra.mrb[0].mxu0 %v1722
    %v1964 = vpop.f32.mrb[0].mxu0
    %v1965 = vadd.f32 %v1097, %v1964
    %v1966 = vpop.f32.mrb[0].mxu0
    %1967 = vdwg.mxu0
    %v1968 = vadd.f32 %v1897, %v1965
    %v1969 = vxor.u32 %v1968, 2147483648
    %v1970 = vmul.f32 %v1969, 1.442695
    %v1971 = vpow.pop %v1970
    %v1972 = vadd.f32 %v1971, 1.0
    %v1973 = vrcp.pop %v1972
    %v1974 = vmul.f32 1.0, %v1973
    %1976 = vrot.lane.b32.xlu0 %v1965, 64
    %v1977 = vpop.permute.xlu0 %1976
    %v1979 = vmul.f32 %v1974, %v1977
    %1981 = vrot.lane.b32.xlu0 %v1979, 64
    %v1982 = vpop.permute.xlu0 %1981
    %v1984 = vadd.f32 %v1897, %v1982
    %v1985 = vtanh.pop %v1984
    %v1986 = vsub.f32 1.0, %v1974
    %1988 = vrot.lane.b32.xlu0 %v1985, 96
    %v1989 = vpop.permute.xlu0 %1988
    %v1991 = vmul.f32 %v1986, %v1989
    %v1992 = vmul.f32 %v1974, %v1718
    %v1993 = vadd.f32 %v1991, %v1992
    %1995 = vrot.lane.b32.xlu0 %v1993, 96
    %v1996 = vpop.permute.xlu0 %1995
    %v1997 = vsel %vm109, %v1996, 0
    %1999 = vmatprep.subr.mxu0 0.0
    %2000 = vmatpush1.msra.mxu0 %v1099
    %2001 = vmatprep.subr.mxu0 0.0
    %2002 = vmatpush1.msra.mxu0 %v1100
    %2003 = vmatprep.subr.mxu0 0.0
    %2004 = vmatpush1.msra.mxu0 %v1101
    %2005 = vmatprep.subr.mxu0 0.0
    %2006 = vmatpush1.msra.mxu0 %v1102
    %2007 = vmatprep.subr.mxu0 0.0
    %2008 = vmatpush1.msra.mxu0 0.0
    %2009 = vmatprep.subr.mxu0 0.0
    %2010 = vmatpush1.msra.mxu0 0.0
    %2011 = vmatprep.subr.mxu0 0.0
    %2012 = vmatpush1.msra.mxu0 0.0
    %2013 = vmatprep.subr.mxu0 0.0
    %2014 = vmatpush1.msra.mxu0 0.0
    %2015 = vmatprep.subr.mxu0 0.0
    %2016 = vmatpush1.msra.mxu0 0.0
    %2017 = vmatprep.subr.mxu0 0.0
    %2018 = vmatpush1.msra.mxu0 0.0
    %2019 = vmatprep.subr.mxu0 0.0
    %2020 = vmatpush1.msra.mxu0 0.0
    %2021 = vmatprep.subr.mxu0 0.0
    %2022 = vmatpush1.msra.mxu0 0.0
    %2023 = vmatprep.subr.mxu0 0.0
    %2024 = vmatpush1.msra.mxu0 0.0
    %2025 = vmatprep.subr.mxu0 0.0
    %2026 = vmatpush1.msra.mxu0 0.0
    %2027 = vmatprep.subr.mxu0 0.0
    %2028 = vmatpush1.msra.mxu0 0.0
    %2029 = vmatprep.subr.mxu0 0.0
    %2030 = vmatpush1.msra.mxu0 0.0
    %2031 = vmatprep.subr.mxu0 0.0
    %2032 = vmatpush1.msra.mxu0 0.0
    %2033 = vmatprep.subr.mxu0 0.0
    %2034 = vmatpush1.msra.mxu0 0.0
    %2035 = vmatprep.subr.mxu0 0.0
    %2036 = vmatpush1.msra.mxu0 0.0
    %2037 = vmatprep.subr.mxu0 0.0
    %2038 = vmatpush1.msra.mxu0 0.0
    %2039 = vmatprep.subr.mxu0 0.0
    %2040 = vmatpush1.msra.mxu0 0.0
    %2041 = vmatprep.subr.mxu0 0.0
    %2042 = vmatpush1.msra.mxu0 0.0
    %2043 = vmatprep.subr.mxu0 0.0
    %2044 = vmatpush1.msra.mxu0 0.0
    %2045 = vmatprep.subr.mxu0 0.0
    %2046 = vmatpush1.msra.mxu0 0.0
    %2047 = vmatprep.subr.mxu0 0.0
    %2048 = vmatpush1.msra.mxu0 0.0
    %2049 = vmatprep.subr.mxu0 0.0
    %2050 = vmatpush1.msra.mxu0 0.0
    %2051 = vmatprep.subr.mxu0 0.0
    %2052 = vmatpush1.msra.mxu0 0.0
    %2053 = vmatprep.subr.mxu0 0.0
    %2054 = vmatpush1.msra.mxu0 0.0
    %2055 = vmatprep.subr.mxu0 0.0
    %2056 = vmatpush1.msra.mxu0 0.0
    %2057 = vmatprep.subr.mxu0 0.0
    %2058 = vmatpush1.msra.mxu0 0.0
    %2059 = vmatprep.subr.mxu0 0.0
    %2060 = vmatpush1.msra.mxu0 0.0
    %2061 = vmatprep.subr.mxu0 0.0
    %2062 = vmatpush1.msra.mxu0 0.0
    %2063 = vmatprep.mubr.f32.mxu0 0.0
    %2064 = vmatmul.mubr.f32.gmra.mrb[0].mxu0 %v1997
    %v2065 = vpop.f32.mrb[0].mxu0
    %v2066 = vadd.f32 0.0, %v2065
    %v2067 = vpop.f32.mrb[0].mxu0
    %2068 = vdwg.mxu0
    %v2069 = vadd.f32 %v1895, %v2066
    %v2070 = vadd.f32 %v2069, %v1267
    %s2071 = scalar_lea.vmem [#allocation9], 24
    %2072 = vst [vmem:[%s2071] sm:$0xff] %v2070
    %v2073 = vadd.f32 %v2070, %v1273
    %2074 = vmax.xlane.f32.xlu0 %v2073
    %v2075 = vpop.xlane.xlu0 %2074
    %vm2076 = vcmp.ge.f32.partialorder %v2073, %v2075
    %v2077 = vsel %vm2076, %v1271, 128
    %v2078 = vand.u32 %v2077, 65535
    %v2079 = vshra.s32 %v2077, 16
    %v2080 = vcvt.s32.f32 %v2078
    %v2081 = vcvt.s32.f32 %v2079
    %2082 = vmin.xlane.f32.xlu0 %v2081
    %v2083 = vpop.xlane.xlu0 %2082
    %vm2084 = vcmp.eq.f32.partialorder %v2081, %v2083
    %v2085 = vsel %vm2084, %v2080, inf
    %2086 = vmin.xlane.f32.xlu0 %v2085
    %v2087 = vpop.xlane.xlu0 %2086
    %v2088 = vcvt.f32.s32 %v2087
    %v2089 = vcvt.f32.s32 %v2083
    %v2090 = vshll.u32 %v2089, 16
    %v2091 = vadd.s32 %v2090, %v2088
    %vm2092 = vcmp.eq.s32.totalorder %v1271, %v2091
    %v2093 = vsel %vm2092, 1, 0
    %v2094 = vcvt.s32.f32 %v2093
    %s2095 = sld [smem:[#allocation2 + $0x3]]
    %v2096 = vstv %s2095
    %vm2097 = vcmp.eq.s32.totalorder %v2096, 1
    %s2098 = scalar_lea.vmem %s1, 24
    %v2099 = vld [vmem:[%s2098] sm:$0xff]
    %v2100 = vsel %vm2097, %v2099, %v2094
    %2101 = vmatprep.subr.mxu0 %v1057
    %2102 = vmatpush1.msra.mxu0 %v1056
    %2103 = vmatprep.subr.mxu0 %v1059
    %2104 = vmatpush1.msra.mxu0 %v1058
    %2105 = vmatprep.subr.mxu0 %v1061
    %2106 = vmatpush1.msra.mxu0 %v1060
    %2107 = vmatprep.subr.mxu0 %v1063
    %2108 = vmatpush1.msra.mxu0 %v1062
    %2109 = vmatprep.subr.mxu0 %v1065
    %2110 = vmatpush1.msra.mxu0 %v1064
    %2111 = vmatprep.subr.mxu0 %v1067
    %2112 = vmatpush1.msra.mxu0 %v1066
    %2113 = vmatprep.subr.mxu0 %v1069
    %2114 = vmatpush1.msra.mxu0 %v1068
    %2115 = vmatprep.subr.mxu0 %v1071
    %2116 = vmatpush1.msra.mxu0 %v1070
    %2117 = vmatprep.subr.mxu0 %v1073
    %2118 = vmatpush1.msra.mxu0 %v1072
    %2119 = vmatprep.subr.mxu0 %v1075
    %2120 = vmatpush1.msra.mxu0 %v1074
    %2121 = vmatprep.subr.mxu0 %v1077
    %2122 = vmatpush1.msra.mxu0 %v1076
    %2123 = vmatprep.subr.mxu0 %v1079
    %2124 = vmatpush1.msra.mxu0 %v1078
    %2125 = vmatprep.subr.mxu0 %v1081
    %2126 = vmatpush1.msra.mxu0 %v1080
    %2127 = vmatprep.subr.mxu0 %v1083
    %2128 = vmatpush1.msra.mxu0 %v1082
    %2129 = vmatprep.subr.mxu0 %v1085
    %2130 = vmatpush1.msra.mxu0 %v1084
    %2131 = vmatprep.subr.mxu0 %v1087
    %2132 = vmatpush1.msra.mxu0 %v1086
    %2133 = vmatprep.subr.mxu0 0.0
    %2134 = vmatpush1.msra.mxu0 0.0
    %2135 = vmatprep.subr.mxu0 0.0
    %2136 = vmatpush1.msra.mxu0 0.0
    %2137 = vmatprep.subr.mxu0 0.0
    %2138 = vmatpush1.msra.mxu0 0.0
    %2139 = vmatprep.subr.mxu0 0.0
    %2140 = vmatpush1.msra.mxu0 0.0
    %2141 = vmatprep.subr.mxu0 0.0
    %2142 = vmatpush1.msra.mxu0 0.0
    %2143 = vmatprep.subr.mxu0 0.0
    %2144 = vmatpush1.msra.mxu0 0.0
    %2145 = vmatprep.subr.mxu0 0.0
    %2146 = vmatpush1.msra.mxu0 0.0
    %2147 = vmatprep.subr.mxu0 0.0
    %2148 = vmatpush1.msra.mxu0 0.0
    %2149 = vmatprep.subr.mxu0 0.0
    %2150 = vmatpush1.msra.mxu0 0.0
    %2151 = vmatprep.subr.mxu0 0.0
    %2152 = vmatpush1.msra.mxu0 0.0
    %2153 = vmatprep.subr.mxu0 0.0
    %2154 = vmatpush1.msra.mxu0 0.0
    %2155 = vmatprep.subr.mxu0 0.0
    %2156 = vmatpush1.msra.mxu0 0.0
    %2157 = vmatprep.subr.mxu0 0.0
    %2158 = vmatpush1.msra.mxu0 0.0
    %2159 = vmatprep.subr.mxu0 0.0
    %2160 = vmatpush1.msra.mxu0 0.0
    %2161 = vmatprep.subr.mxu0 0.0
    %2162 = vmatpush1.msra.mxu0 0.0
    %2163 = vmatprep.subr.mxu0 0.0
    %2164 = vmatpush1.msra.mxu0 0.0
    %2165 = vmatprep.mubr.f32.mxu0 0.0
    %2166 = vmatmul.mubr.f32.gmra.mrb[0].mxu0 %v2100
    %v2167 = vpop.f32.mrb[0].mxu0
    %v2168 = vadd.f32 0.0, %v2167
    %v2169 = vpop.f32.mrb[0].mxu0
    %v2170 = vadd.f32 0.0, %v2169
    %2171 = vdwg.mxu0
    %v2172 = vadd.f32 %v2168, %v1186
    %2173 = vmatprep.subr.mxu0 0.0
    %2174 = vmatpush1.msra.mxu0 %v1088
    %2175 = vmatprep.subr.mxu0 0.0
    %2176 = vmatpush1.msra.mxu0 %v1089
    %2177 = vmatprep.subr.mxu0 0.0
    %2178 = vmatpush1.msra.mxu0 %v1090
    %2179 = vmatprep.subr.mxu0 0.0
    %2180 = vmatpush1.msra.mxu0 %v1091
    %2181 = vmatprep.subr.mxu0 0.0
    %2182 = vmatpush1.msra.mxu0 0.0
    %2183 = vmatprep.subr.mxu0 0.0
    %2184 = vmatpush1.msra.mxu0 0.0
    %2185 = vmatprep.subr.mxu0 0.0
    %2186 = vmatpush1.msra.mxu0 0.0
    %2187 = vmatprep.subr.mxu0 0.0
    %2188 = vmatpush1.msra.mxu0 0.0
    %2189 = vmatprep.subr.mxu0 0.0
    %2190 = vmatpush1.msra.mxu0 0.0
    %2191 = vmatprep.subr.mxu0 0.0
    %2192 = vmatpush1.msra.mxu0 0.0
    %2193 = vmatprep.subr.mxu0 0.0
    %2194 = vmatpush1.msra.mxu0 0.0
    %2195 = vmatprep.subr.mxu0 0.0
    %2196 = vmatpush1.msra.mxu0 0.0
    %2197 = vmatprep.subr.mxu0 0.0
    %2198 = vmatpush1.msra.mxu0 0.0
    %2199 = vmatprep.subr.mxu0 0.0
    %2200 = vmatpush1.msra.mxu0 0.0
    %2201 = vmatprep.subr.mxu0 0.0
    %2202 = vmatpush1.msra.mxu0 0.0
    %2203 = vmatprep.subr.mxu0 0.0
    %2204 = vmatpush1.msra.mxu0 0.0
    %2205 = vmatprep.subr.mxu0 0.0
    %2206 = vmatpush1.msra.mxu0 0.0
    %2207 = vmatprep.subr.mxu0 0.0
    %2208 = vmatpush1.msra.mxu0 0.0
    %2209 = vmatprep.subr.mxu0 0.0
    %2210 = vmatpush1.msra.mxu0 0.0
    %2211 = vmatprep.subr.mxu0 0.0
    %2212 = vmatpush1.msra.mxu0 0.0
    %2213 = vmatprep.subr.mxu0 0.0
    %2214 = vmatpush1.msra.mxu0 0.0
    %2215 = vmatprep.subr.mxu0 0.0
    %2216 = vmatpush1.msra.mxu0 0.0
    %2217 = vmatprep.subr.mxu0 0.0
    %2218 = vmatpush1.msra.mxu0 0.0
    %2219 = vmatprep.subr.mxu0 0.0
    %2220 = vmatpush1.msra.mxu0 0.0
    %2221 = vmatprep.subr.mxu0 0.0
    %2222 = vmatpush1.msra.mxu0 0.0
    %2223 = vmatprep.subr.mxu0 0.0
    %2224 = vmatpush1.msra.mxu0 0.0
    %2225 = vmatprep.subr.mxu0 0.0
    %2226 = vmatpush1.msra.mxu0 0.0
    %2227 = vmatprep.subr.mxu0 0.0
    %2228 = vmatpush1.msra.mxu0 0.0
    %2229 = vmatprep.subr.mxu0 0.0
    %2230 = vmatpush1.msra.mxu0 0.0
    %2231 = vmatprep.subr.mxu0 0.0
    %2232 = vmatpush1.msra.mxu0 0.0
    %2233 = vmatprep.subr.mxu0 0.0
    %2234 = vmatpush1.msra.mxu0 0.0
    %2235 = vmatprep.subr.mxu0 0.0
    %2236 = vmatpush1.msra.mxu0 0.0
    %2237 = vmatprep.mubr.f32.mxu0 0.0
    %2238 = vmatmul.mubr.f32.gmra.mrb[0].mxu0 %v1997
    %v2239 = vpop.f32.mrb[0].mxu0
    %v2240 = vadd.f32 %v1097, %v2239
    %v2241 = vpop.f32.mrb[0].mxu0
    %2242 = vdwg.mxu0
    %v2243 = vadd.f32 %v2172, %v2240
    %v2244 = vxor.u32 %v2243, 2147483648
    %v2245 = vmul.f32 %v2244, 1.442695
    %v2246 = vpow.pop %v2245
    %v2247 = vadd.f32 %v2246, 1.0
    %v2248 = vrcp.pop %v2247
    %v2249 = vmul.f32 1.0, %v2248
    %2251 = vrot.lane.b32.xlu0 %v2240, 64
    %v2252 = vpop.permute.xlu0 %2251
    %v2254 = vmul.f32 %v2249, %v2252
    %2256 = vrot.lane.b32.xlu0 %v2254, 64
    %v2257 = vpop.permute.xlu0 %2256
    %v2259 = vadd.f32 %v2172, %v2257
    %v2260 = vtanh.pop %v2259
    %v2261 = vsub.f32 1.0, %v2249
    %2263 = vrot.lane.b32.xlu0 %v2260, 96
    %v2264 = vpop.permute.xlu0 %2263
    %v2266 = vmul.f32 %v2261, %v2264
    %v2267 = vmul.f32 %v2249, %v1993
    %v2268 = vadd.f32 %v2266, %v2267
    %2270 = vrot.lane.b32.xlu0 %v2268, 96
    %v2271 = vpop.permute.xlu0 %2270
    %v2272 = vsel %vm109, %v2271, 0
    %2274 = vmatprep.subr.mxu0 0.0
    %2275 = vmatpush1.msra.mxu0 %v1099
    %2276 = vmatprep.subr.mxu0 0.0
    %2277 = vmatpush1.msra.mxu0 %v1100
    %2278 = vmatprep.subr.mxu0 0.0
    %2279 = vmatpush1.msra.mxu0 %v1101
    %2280 = vmatprep.subr.mxu0 0.0
    %2281 = vmatpush1.msra.mxu0 %v1102
    %2282 = vmatprep.subr.mxu0 0.0
    %2283 = vmatpush1.msra.mxu0 0.0
    %2284 = vmatprep.subr.mxu0 0.0
    %2285 = vmatpush1.msra.mxu0 0.0
    %2286 = vmatprep.subr.mxu0 0.0
    %2287 = vmatpush1.msra.mxu0 0.0
    %2288 = vmatprep.subr.mxu0 0.0
    %2289 = vmatpush1.msra.mxu0 0.0
    %2290 = vmatprep.subr.mxu0 0.0
    %2291 = vmatpush1.msra.mxu0 0.0
    %2292 = vmatprep.subr.mxu0 0.0
    %2293 = vmatpush1.msra.mxu0 0.0
    %2294 = vmatprep.subr.mxu0 0.0
    %2295 = vmatpush1.msra.mxu0 0.0
    %2296 = vmatprep.subr.mxu0 0.0
    %2297 = vmatpush1.msra.mxu0 0.0
    %2298 = vmatprep.subr.mxu0 0.0
    %2299 = vmatpush1.msra.mxu0 0.0
    %2300 = vmatprep.subr.mxu0 0.0
    %2301 = vmatpush1.msra.mxu0 0.0
    %2302 = vmatprep.subr.mxu0 0.0
    %2303 = vmatpush1.msra.mxu0 0.0
    %2304 = vmatprep.subr.mxu0 0.0
    %2305 = vmatpush1.msra.mxu0 0.0
    %2306 = vmatprep.subr.mxu0 0.0
    %2307 = vmatpush1.msra.mxu0 0.0
    %2308 = vmatprep.subr.mxu0 0.0
    %2309 = vmatpush1.msra.mxu0 0.0
    %2310 = vmatprep.subr.mxu0 0.0
    %2311 = vmatpush1.msra.mxu0 0.0
    %2312 = vmatprep.subr.mxu0 0.0
    %2313 = vmatpush1.msra.mxu0 0.0
    %2314 = vmatprep.subr.mxu0 0.0
    %2315 = vmatpush1.msra.mxu0 0.0
    %2316 = vmatprep.subr.mxu0 0.0
    %2317 = vmatpush1.msra.mxu0 0.0
    %2318 = vmatprep.subr.mxu0 0.0
    %2319 = vmatpush1.msra.mxu0 0.0
    %2320 = vmatprep.subr.mxu0 0.0
    %2321 = vmatpush1.msra.mxu0 0.0
    %2322 = vmatprep.subr.mxu0 0.0
    %2323 = vmatpush1.msra.mxu0 0.0
    %2324 = vmatprep.subr.mxu0 0.0
    %2325 = vmatpush1.msra.mxu0 0.0
    %2326 = vmatprep.subr.mxu0 0.0
    %2327 = vmatpush1.msra.mxu0 0.0
    %2328 = vmatprep.subr.mxu0 0.0
    %2329 = vmatpush1.msra.mxu0 0.0
    %2330 = vmatprep.subr.mxu0 0.0
    %2331 = vmatpush1.msra.mxu0 0.0
    %2332 = vmatprep.subr.mxu0 0.0
    %2333 = vmatpush1.msra.mxu0 0.0
    %2334 = vmatprep.subr.mxu0 0.0
    %2335 = vmatpush1.msra.mxu0 0.0
    %2336 = vmatprep.subr.mxu0 0.0
    %2337 = vmatpush1.msra.mxu0 0.0
    %2338 = vmatprep.mubr.f32.mxu0 0.0
    %2339 = vmatmul.mubr.f32.gmra.mrb[0].mxu0 %v2272
    %v2340 = vpop.f32.mrb[0].mxu0
    %v2341 = vadd.f32 0.0, %v2340
    %v2342 = vpop.f32.mrb[0].mxu0
    %2343 = vdwg.mxu0
    %v2344 = vadd.f32 %v2170, %v2341
    %v2345 = vadd.f32 %v2344, %v1267
    %s2346 = scalar_lea.vmem [#allocation9], 32
    %2347 = vst [vmem:[%s2346] sm:$0xff] %v2345
    %v2348 = vadd.f32 %v2345, %v1273
    %2349 = vmax.xlane.f32.xlu0 %v2348
    %v2350 = vpop.xlane.xlu0 %2349
    %vm2351 = vcmp.ge.f32.partialorder %v2348, %v2350
    %v2352 = vsel %vm2351, %v1271, 128
    %v2353 = vand.u32 %v2352, 65535
    %v2354 = vshra.s32 %v2352, 16
    %v2355 = vcvt.s32.f32 %v2353
    %v2356 = vcvt.s32.f32 %v2354
    %2357 = vmin.xlane.f32.xlu0 %v2356
    %v2358 = vpop.xlane.xlu0 %2357
    %vm2359 = vcmp.eq.f32.partialorder %v2356, %v2358
    %v2360 = vsel %vm2359, %v2355, inf
    %2361 = vmin.xlane.f32.xlu0 %v2360
    %v2362 = vpop.xlane.xlu0 %2361
    %v2363 = vcvt.f32.s32 %v2362
    %v2364 = vcvt.f32.s32 %v2358
    %v2365 = vshll.u32 %v2364, 16
    %v2366 = vadd.s32 %v2365, %v2363
    %vm2367 = vcmp.eq.s32.totalorder %v1271, %v2366
    %v2368 = vsel %vm2367, 1, 0
    %v2369 = vcvt.s32.f32 %v2368
    %s2370 = sld [smem:[#allocation2 + $0x4]]
    %v2371 = vstv %s2370
    %vm2372 = vcmp.eq.s32.totalorder %v2371, 1
    %s2373 = scalar_lea.vmem %s1, 32
    %v2374 = vld [vmem:[%s2373] sm:$0xff]
    %v2375 = vsel %vm2372, %v2374, %v2369
    %2376 = vmatprep.subr.mxu0 %v1057
    %2377 = vmatpush1.msra.mxu0 %v1056
    %2378 = vmatprep.subr.mxu0 %v1059
    %2379 = vmatpush1.msra.mxu0 %v1058
    %2380 = vmatprep.subr.mxu0 %v1061
    %2381 = vmatpush1.msra.mxu0 %v1060
    %2382 = vmatprep.subr.mxu0 %v1063
    %2383 = vmatpush1.msra.mxu0 %v1062
    %2384 = vmatprep.subr.mxu0 %v1065
    %2385 = vmatpush1.msra.mxu0 %v1064
    %2386 = vmatprep.subr.mxu0 %v1067
    %2387 = vmatpush1.msra.mxu0 %v1066
    %2388 = vmatprep.subr.mxu0 %v1069
    %2389 = vmatpush1.msra.mxu0 %v1068
    %2390 = vmatprep.subr.mxu0 %v1071
    %2391 = vmatpush1.msra.mxu0 %v1070
    %2392 = vmatprep.subr.mxu0 %v1073
    %2393 = vmatpush1.msra.mxu0 %v1072
    %2394 = vmatprep.subr.mxu0 %v1075
    %2395 = vmatpush1.msra.mxu0 %v1074
    %2396 = vmatprep.subr.mxu0 %v1077
    %2397 = vmatpush1.msra.mxu0 %v1076
    %2398 = vmatprep.subr.mxu0 %v1079
    %2399 = vmatpush1.msra.mxu0 %v1078
    %2400 = vmatprep.subr.mxu0 %v1081
    %2401 = vmatpush1.msra.mxu0 %v1080
    %2402 = vmatprep.subr.mxu0 %v1083
    %2403 = vmatpush1.msra.mxu0 %v1082
    %2404 = vmatprep.subr.mxu0 %v1085
    %2405 = vmatpush1.msra.mxu0 %v1084
    %2406 = vmatprep.subr.mxu0 %v1087
    %2407 = vmatpush1.msra.mxu0 %v1086
    %2408 = vmatprep.subr.mxu0 0.0
    %2409 = vmatpush1.msra.mxu0 0.0
    %2410 = vmatprep.subr.mxu0 0.0
    %2411 = vmatpush1.msra.mxu0 0.0
    %2412 = vmatprep.subr.mxu0 0.0
    %2413 = vmatpush1.msra.mxu0 0.0
    %2414 = vmatprep.subr.mxu0 0.0
    %2415 = vmatpush1.msra.mxu0 0.0
    %2416 = vmatprep.subr.mxu0 0.0
    %2417 = vmatpush1.msra.mxu0 0.0
    %2418 = vmatprep.subr.mxu0 0.0
    %2419 = vmatpush1.msra.mxu0 0.0
    %2420 = vmatprep.subr.mxu0 0.0
    %2421 = vmatpush1.msra.mxu0 0.0
    %2422 = vmatprep.subr.mxu0 0.0
    %2423 = vmatpush1.msra.mxu0 0.0
    %2424 = vmatprep.subr.mxu0 0.0
    %2425 = vmatpush1.msra.mxu0 0.0
    %2426 = vmatprep.subr.mxu0 0.0
    %2427 = vmatpush1.msra.mxu0 0.0
    %2428 = vmatprep.subr.mxu0 0.0
    %2429 = vmatpush1.msra.mxu0 0.0
    %2430 = vmatprep.subr.mxu0 0.0
    %2431 = vmatpush1.msra.mxu0 0.0
    %2432 = vmatprep.subr.mxu0 0.0
    %2433 = vmatpush1.msra.mxu0 0.0
    %2434 = vmatprep.subr.mxu0 0.0
    %2435 = vmatpush1.msra.mxu0 0.0
    %2436 = vmatprep.subr.mxu0 0.0
    %2437 = vmatpush1.msra.mxu0 0.0
    %2438 = vmatprep.subr.mxu0 0.0
    %2439 = vmatpush1.msra.mxu0 0.0
    %2440 = vmatprep.mubr.f32.mxu0 0.0
    %2441 = vmatmul.mubr.f32.gmra.mrb[0].mxu0 %v2375
    %v2442 = vpop.f32.mrb[0].mxu0
    %v2443 = vadd.f32 0.0, %v2442
    %v2444 = vpop.f32.mrb[0].mxu0
    %v2445 = vadd.f32 0.0, %v2444
    %2446 = vdwg.mxu0
    %v2447 = vadd.f32 %v2443, %v1186
    %2448 = vmatprep.subr.mxu0 0.0
    %2449 = vmatpush1.msra.mxu0 %v1088
    %2450 = vmatprep.subr.mxu0 0.0
    %2451 = vmatpush1.msra.mxu0 %v1089
    %2452 = vmatprep.subr.mxu0 0.0
    %2453 = vmatpush1.msra.mxu0 %v1090
    %2454 = vmatprep.subr.mxu0 0.0
    %2455 = vmatpush1.msra.mxu0 %v1091
    %2456 = vmatprep.subr.mxu0 0.0
    %2457 = vmatpush1.msra.mxu0 0.0
    %2458 = vmatprep.subr.mxu0 0.0
    %2459 = vmatpush1.msra.mxu0 0.0
    %2460 = vmatprep.subr.mxu0 0.0
    %2461 = vmatpush1.msra.mxu0 0.0
    %2462 = vmatprep.subr.mxu0 0.0
    %2463 = vmatpush1.msra.mxu0 0.0
    %2464 = vmatprep.subr.mxu0 0.0
    %2465 = vmatpush1.msra.mxu0 0.0
    %2466 = vmatprep.subr.mxu0 0.0
    %2467 = vmatpush1.msra.mxu0 0.0
    %2468 = vmatprep.subr.mxu0 0.0
    %2469 = vmatpush1.msra.mxu0 0.0
    %2470 = vmatprep.subr.mxu0 0.0
    %2471 = vmatpush1.msra.mxu0 0.0
    %2472 = vmatprep.subr.mxu0 0.0
    %2473 = vmatpush1.msra.mxu0 0.0
    %2474 = vmatprep.subr.mxu0 0.0
    %2475 = vmatpush1.msra.mxu0 0.0
    %2476 = vmatprep.subr.mxu0 0.0
    %2477 = vmatpush1.msra.mxu0 0.0
    %2478 = vmatprep.subr.mxu0 0.0
    %2479 = vmatpush1.msra.mxu0 0.0
    %2480 = vmatprep.subr.mxu0 0.0
    %2481 = vmatpush1.msra.mxu0 0.0
    %2482 = vmatprep.subr.mxu0 0.0
    %2483 = vmatpush1.msra.mxu0 0.0
    %2484 = vmatprep.subr.mxu0 0.0
    %2485 = vmatpush1.msra.mxu0 0.0
    %2486 = vmatprep.subr.mxu0 0.0
    %2487 = vmatpush1.msra.mxu0 0.0
    %2488 = vmatprep.subr.mxu0 0.0
    %2489 = vmatpush1.msra.mxu0 0.0
    %2490 = vmatprep.subr.mxu0 0.0
    %2491 = vmatpush1.msra.mxu0 0.0
    %2492 = vmatprep.subr.mxu0 0.0
    %2493 = vmatpush1.msra.mxu0 0.0
    %2494 = vmatprep.subr.mxu0 0.0
    %2495 = vmatpush1.msra.mxu0 0.0
    %2496 = vmatprep.subr.mxu0 0.0
    %2497 = vmatpush1.msra.mxu0 0.0
    %2498 = vmatprep.subr.mxu0 0.0
    %2499 = vmatpush1.msra.mxu0 0.0
    %2500 = vmatprep.subr.mxu0 0.0
    %2501 = vmatpush1.msra.mxu0 0.0
    %2502 = vmatprep.subr.mxu0 0.0
    %2503 = vmatpush1.msra.mxu0 0.0
    %2504 = vmatprep.subr.mxu0 0.0
    %2505 = vmatpush1.msra.mxu0 0.0
    %2506 = vmatprep.subr.mxu0 0.0
    %2507 = vmatpush1.msra.mxu0 0.0
    %2508 = vmatprep.subr.mxu0 0.0
    %2509 = vmatpush1.msra.mxu0 0.0
    %2510 = vmatprep.subr.mxu0 0.0
    %2511 = vmatpush1.msra.mxu0 0.0
    %2512 = vmatprep.mubr.f32.mxu0 0.0
    %2513 = vmatmul.mubr.f32.gmra.mrb[0].mxu0 %v2272
    %v2514 = vpop.f32.mrb[0].mxu0
    %v2515 = vadd.f32 %v1097, %v2514
    %v2516 = vpop.f32.mrb[0].mxu0
    %2517 = vdwg.mxu0
    %v2518 = vadd.f32 %v2447, %v2515
    %v2519 = vxor.u32 %v2518, 2147483648
    %v2520 = vmul.f32 %v2519, 1.442695
    %v2521 = vpow.pop %v2520
    %v2522 = vadd.f32 %v2521, 1.0
    %v2523 = vrcp.pop %v2522
    %v2524 = vmul.f32 1.0, %v2523
    %2526 = vrot.lane.b32.xlu0 %v2515, 64
    %v2527 = vpop.permute.xlu0 %2526
    %v2529 = vmul.f32 %v2524, %v2527
    %2531 = vrot.lane.b32.xlu0 %v2529, 64
    %v2532 = vpop.permute.xlu0 %2531
    %v2534 = vadd.f32 %v2447, %v2532
    %v2535 = vtanh.pop %v2534
    %v2536 = vsub.f32 1.0, %v2524
    %2538 = vrot.lane.b32.xlu0 %v2535, 96
    %v2539 = vpop.permute.xlu0 %2538
    %v2541 = vmul.f32 %v2536, %v2539
    %v2542 = vmul.f32 %v2524, %v2268
    %v2543 = vadd.f32 %v2541, %v2542
    %2545 = vrot.lane.b32.xlu0 %v2543, 96
    %v2546 = vpop.permute.xlu0 %2545
    %v2547 = vsel %vm109, %v2546, 0
    %2549 = vmatprep.subr.mxu0 0.0
    %2550 = vmatpush1.msra.mxu0 %v1099
    %2551 = vmatprep.subr.mxu0 0.0
    %2552 = vmatpush1.msra.mxu0 %v1100
    %2553 = vmatprep.subr.mxu0 0.0
    %2554 = vmatpush1.msra.mxu0 %v1101
    %2555 = vmatprep.subr.mxu0 0.0
    %2556 = vmatpush1.msra.mxu0 %v1102
    %2557 = vmatprep.subr.mxu0 0.0
    %2558 = vmatpush1.msra.mxu0 0.0
    %2559 = vmatprep.subr.mxu0 0.0
    %2560 = vmatpush1.msra.mxu0 0.0
    %2561 = vmatprep.subr.mxu0 0.0
    %2562 = vmatpush1.msra.mxu0 0.0
    %2563 = vmatprep.subr.mxu0 0.0
    %2564 = vmatpush1.msra.mxu0 0.0
    %2565 = vmatprep.subr.mxu0 0.0
    %2566 = vmatpush1.msra.mxu0 0.0
    %2567 = vmatprep.subr.mxu0 0.0
    %2568 = vmatpush1.msra.mxu0 0.0
    %2569 = vmatprep.subr.mxu0 0.0
    %2570 = vmatpush1.msra.mxu0 0.0
    %2571 = vmatprep.subr.mxu0 0.0
    %2572 = vmatpush1.msra.mxu0 0.0
    %2573 = vmatprep.subr.mxu0 0.0
    %2574 = vmatpush1.msra.mxu0 0.0
    %2575 = vmatprep.subr.mxu0 0.0
    %2576 = vmatpush1.msra.mxu0 0.0
    %2577 = vmatprep.subr.mxu0 0.0
    %2578 = vmatpush1.msra.mxu0 0.0
    %2579 = vmatprep.subr.mxu0 0.0
    %2580 = vmatpush1.msra.mxu0 0.0
    %2581 = vmatprep.subr.mxu0 0.0
    %2582 = vmatpush1.msra.mxu0 0.0
    %2583 = vmatprep.subr.mxu0 0.0
    %2584 = vmatpush1.msra.mxu0 0.0
    %2585 = vmatprep.subr.mxu0 0.0
    %2586 = vmatpush1.msra.mxu0 0.0
    %2587 = vmatprep.subr.mxu0 0.0
    %2588 = vmatpush1.msra.mxu0 0.0
    %2589 = vmatprep.subr.mxu0 0.0
    %2590 = vmatpush1.msra.mxu0 0.0
    %2591 = vmatprep.subr.mxu0 0.0
    %2592 = vmatpush1.msra.mxu0 0.0
    %2593 = vmatprep.subr.mxu0 0.0
    %2594 = vmatpush1.msra.mxu0 0.0
    %2595 = vmatprep.subr.mxu0 0.0
    %2596 = vmatpush1.msra.mxu0 0.0
    %2597 = vmatprep.subr.mxu0 0.0
    %2598 = vmatpush1.msra.mxu0 0.0
    %2599 = vmatprep.subr.mxu0 0.0
    %2600 = vmatpush1.msra.mxu0 0.0
    %2601 = vmatprep.subr.mxu0 0.0
    %2602 = vmatpush1.msra.mxu0 0.0
    %2603 = vmatprep.subr.mxu0 0.0
    %2604 = vmatpush1.msra.mxu0 0.0
    %2605 = vmatprep.subr.mxu0 0.0
    %2606 = vmatpush1.msra.mxu0 0.0
    %2607 = vmatprep.subr.mxu0 0.0
    %2608 = vmatpush1.msra.mxu0 0.0
    %2609 = vmatprep.subr.mxu0 0.0
    %2610 = vmatpush1.msra.mxu0 0.0
    %2611 = vmatprep.subr.mxu0 0.0
    %2612 = vmatpush1.msra.mxu0 0.0
    %2613 = vmatprep.mubr.f32.mxu0 0.0
    %2614 = vmatmul.mubr.f32.gmra.mrb[0].mxu0 %v2547
    %v2615 = vpop.f32.mrb[0].mxu0
    %v2616 = vadd.f32 0.0, %v2615
    %v2617 = vpop.f32.mrb[0].mxu0
    %2618 = vdwg.mxu0
    %v2619 = vadd.f32 %v2445, %v2616
    %v2620 = vadd.f32 %v2619, %v1267
    %s2621 = scalar_lea.vmem [#allocation9], 40
    %2622 = vst [vmem:[%s2621] sm:$0xff] %v2620
    %v2623 = vadd.f32 %v2620, %v1273
    %2624 = vmax.xlane.f32.xlu0 %v2623
    %v2625 = vpop.xlane.xlu0 %2624
    %vm2626 = vcmp.ge.f32.partialorder %v2623, %v2625
    %v2627 = vsel %vm2626, %v1271, 128
    %v2628 = vand.u32 %v2627, 65535
    %v2629 = vshra.s32 %v2627, 16
    %v2630 = vcvt.s32.f32 %v2628
    %v2631 = vcvt.s32.f32 %v2629
    %2632 = vmin.xlane.f32.xlu0 %v2631
    %v2633 = vpop.xlane.xlu0 %2632
    %vm2634 = vcmp.eq.f32.partialorder %v2631, %v2633
    %v2635 = vsel %vm2634, %v2630, inf
    %2636 = vmin.xlane.f32.xlu0 %v2635
    %v2637 = vpop.xlane.xlu0 %2636
    %v2638 = vcvt.f32.s32 %v2637
    %v2639 = vcvt.f32.s32 %v2633
    %v2640 = vshll.u32 %v2639, 16
    %v2641 = vadd.s32 %v2640, %v2638
    %vm2642 = vcmp.eq.s32.totalorder %v1271, %v2641
    %v2643 = vsel %vm2642, 1, 0
    %v2644 = vcvt.s32.f32 %v2643
    %s2645 = sld [smem:[#allocation2 + $0x5]]
    %v2646 = vstv %s2645
    %vm2647 = vcmp.eq.s32.totalorder %v2646, 1
    %s2648 = scalar_lea.vmem %s1, 40
    %v2649 = vld [vmem:[%s2648] sm:$0xff]
    %v2650 = vsel %vm2647, %v2649, %v2644
    %2651 = vmatprep.subr.mxu0 %v1057
    %2652 = vmatpush1.msra.mxu0 %v1056
    %2653 = vmatprep.subr.mxu0 %v1059
    %2654 = vmatpush1.msra.mxu0 %v1058
    %2655 = vmatprep.subr.mxu0 %v1061
    %2656 = vmatpush1.msra.mxu0 %v1060
    %2657 = vmatprep.subr.mxu0 %v1063
    %2658 = vmatpush1.msra.mxu0 %v1062
    %2659 = vmatprep.subr.mxu0 %v1065
    %2660 = vmatpush1.msra.mxu0 %v1064
    %2661 = vmatprep.subr.mxu0 %v1067
    %2662 = vmatpush1.msra.mxu0 %v1066
    %2663 = vmatprep.subr.mxu0 %v1069
    %2664 = vmatpush1.msra.mxu0 %v1068
    %2665 = vmatprep.subr.mxu0 %v1071
    %2666 = vmatpush1.msra.mxu0 %v1070
    %2667 = vmatprep.subr.mxu0 %v1073
    %2668 = vmatpush1.msra.mxu0 %v1072
    %2669 = vmatprep.subr.mxu0 %v1075
    %2670 = vmatpush1.msra.mxu0 %v1074
    %2671 = vmatprep.subr.mxu0 %v1077
    %2672 = vmatpush1.msra.mxu0 %v1076
    %2673 = vmatprep.subr.mxu0 %v1079
    %2674 = vmatpush1.msra.mxu0 %v1078
    %2675 = vmatprep.subr.mxu0 %v1081
    %2676 = vmatpush1.msra.mxu0 %v1080
    %2677 = vmatprep.subr.mxu0 %v1083
    %2678 = vmatpush1.msra.mxu0 %v1082
    %2679 = vmatprep.subr.mxu0 %v1085
    %2680 = vmatpush1.msra.mxu0 %v1084
    %2681 = vmatprep.subr.mxu0 %v1087
    %2682 = vmatpush1.msra.mxu0 %v1086
    %2683 = vmatprep.subr.mxu0 0.0
    %2684 = vmatpush1.msra.mxu0 0.0
    %2685 = vmatprep.subr.mxu0 0.0
    %2686 = vmatpush1.msra.mxu0 0.0
    %2687 = vmatprep.subr.mxu0 0.0
    %2688 = vmatpush1.msra.mxu0 0.0
    %2689 = vmatprep.subr.mxu0 0.0
    %2690 = vmatpush1.msra.mxu0 0.0
    %2691 = vmatprep.subr.mxu0 0.0
    %2692 = vmatpush1.msra.mxu0 0.0
    %2693 = vmatprep.subr.mxu0 0.0
    %2694 = vmatpush1.msra.mxu0 0.0
    %2695 = vmatprep.subr.mxu0 0.0
    %2696 = vmatpush1.msra.mxu0 0.0
    %2697 = vmatprep.subr.mxu0 0.0
    %2698 = vmatpush1.msra.mxu0 0.0
    %2699 = vmatprep.subr.mxu0 0.0
    %2700 = vmatpush1.msra.mxu0 0.0
    %2701 = vmatprep.subr.mxu0 0.0
    %2702 = vmatpush1.msra.mxu0 0.0
    %2703 = vmatprep.subr.mxu0 0.0
    %2704 = vmatpush1.msra.mxu0 0.0
    %2705 = vmatprep.subr.mxu0 0.0
    %2706 = vmatpush1.msra.mxu0 0.0
    %2707 = vmatprep.subr.mxu0 0.0
    %2708 = vmatpush1.msra.mxu0 0.0
    %2709 = vmatprep.subr.mxu0 0.0
    %2710 = vmatpush1.msra.mxu0 0.0
    %2711 = vmatprep.subr.mxu0 0.0
    %2712 = vmatpush1.msra.mxu0 0.0
    %2713 = vmatprep.subr.mxu0 0.0
    %2714 = vmatpush1.msra.mxu0 0.0
    %2715 = vmatprep.mubr.f32.mxu0 0.0
    %2716 = vmatmul.mubr.f32.gmra.mrb[0].mxu0 %v2650
    %v2717 = vpop.f32.mrb[0].mxu0
    %v2718 = vadd.f32 0.0, %v2717
    %v2719 = vpop.f32.mrb[0].mxu0
    %v2720 = vadd.f32 0.0, %v2719
    %2721 = vdwg.mxu0
    %v2722 = vadd.f32 %v2718, %v1186
    %2723 = vmatprep.subr.mxu0 0.0
    %2724 = vmatpush1.msra.mxu0 %v1088
    %2725 = vmatprep.subr.mxu0 0.0
    %2726 = vmatpush1.msra.mxu0 %v1089
    %2727 = vmatprep.subr.mxu0 0.0
    %2728 = vmatpush1.msra.mxu0 %v1090
    %2729 = vmatprep.subr.mxu0 0.0
    %2730 = vmatpush1.msra.mxu0 %v1091
    %2731 = vmatprep.subr.mxu0 0.0
    %2732 = vmatpush1.msra.mxu0 0.0
    %2733 = vmatprep.subr.mxu0 0.0
    %2734 = vmatpush1.msra.mxu0 0.0
    %2735 = vmatprep.subr.mxu0 0.0
    %2736 = vmatpush1.msra.mxu0 0.0
    %2737 = vmatprep.subr.mxu0 0.0
    %2738 = vmatpush1.msra.mxu0 0.0
    %2739 = vmatprep.subr.mxu0 0.0
    %2740 = vmatpush1.msra.mxu0 0.0
    %2741 = vmatprep.subr.mxu0 0.0
    %2742 = vmatpush1.msra.mxu0 0.0
    %2743 = vmatprep.subr.mxu0 0.0
    %2744 = vmatpush1.msra.mxu0 0.0
    %2745 = vmatprep.subr.mxu0 0.0
    %2746 = vmatpush1.msra.mxu0 0.0
    %2747 = vmatprep.subr.mxu0 0.0
    %2748 = vmatpush1.msra.mxu0 0.0
    %2749 = vmatprep.subr.mxu0 0.0
    %2750 = vmatpush1.msra.mxu0 0.0
    %2751 = vmatprep.subr.mxu0 0.0
    %2752 = vmatpush1.msra.mxu0 0.0
    %2753 = vmatprep.subr.mxu0 0.0
    %2754 = vmatpush1.msra.mxu0 0.0
    %2755 = vmatprep.subr.mxu0 0.0
    %2756 = vmatpush1.msra.mxu0 0.0
    %2757 = vmatprep.subr.mxu0 0.0
    %2758 = vmatpush1.msra.mxu0 0.0
    %2759 = vmatprep.subr.mxu0 0.0
    %2760 = vmatpush1.msra.mxu0 0.0
    %2761 = vmatprep.subr.mxu0 0.0
    %2762 = vmatpush1.msra.mxu0 0.0
    %2763 = vmatprep.subr.mxu0 0.0
    %2764 = vmatpush1.msra.mxu0 0.0
    %2765 = vmatprep.subr.mxu0 0.0
    %2766 = vmatpush1.msra.mxu0 0.0
    %2767 = vmatprep.subr.mxu0 0.0
    %2768 = vmatpush1.msra.mxu0 0.0
    %2769 = vmatprep.subr.mxu0 0.0
    %2770 = vmatpush1.msra.mxu0 0.0
    %2771 = vmatprep.subr.mxu0 0.0
    %2772 = vmatpush1.msra.mxu0 0.0
    %2773 = vmatprep.subr.mxu0 0.0
    %2774 = vmatpush1.msra.mxu0 0.0
    %2775 = vmatprep.subr.mxu0 0.0
    %2776 = vmatpush1.msra.mxu0 0.0
    %2777 = vmatprep.subr.mxu0 0.0
    %2778 = vmatpush1.msra.mxu0 0.0
    %2779 = vmatprep.subr.mxu0 0.0
    %2780 = vmatpush1.msra.mxu0 0.0
    %2781 = vmatprep.subr.mxu0 0.0
    %2782 = vmatpush1.msra.mxu0 0.0
    %2783 = vmatprep.subr.mxu0 0.0
    %2784 = vmatpush1.msra.mxu0 0.0
    %2785 = vmatprep.subr.mxu0 0.0
    %2786 = vmatpush1.msra.mxu0 0.0
    %2787 = vmatprep.mubr.f32.mxu0 0.0
    %2788 = vmatmul.mubr.f32.gmra.mrb[0].mxu0 %v2547
    %v2789 = vpop.f32.mrb[0].mxu0
    %v2790 = vadd.f32 %v1097, %v2789
    %v2791 = vpop.f32.mrb[0].mxu0
    %2792 = vdwg.mxu0
    %v2793 = vadd.f32 %v2722, %v2790
    %v2794 = vxor.u32 %v2793, 2147483648
    %v2795 = vmul.f32 %v2794, 1.442695
    %v2796 = vpow.pop %v2795
    %v2797 = vadd.f32 %v2796, 1.0
    %v2798 = vrcp.pop %v2797
    %v2799 = vmul.f32 1.0, %v2798
    %2801 = vrot.lane.b32.xlu0 %v2790, 64
    %v2802 = vpop.permute.xlu0 %2801
    %v2804 = vmul.f32 %v2799, %v2802
    %2806 = vrot.lane.b32.xlu0 %v2804, 64
    %v2807 = vpop.permute.xlu0 %2806
    %v2809 = vadd.f32 %v2722, %v2807
    %v2810 = vtanh.pop %v2809
    %v2811 = vsub.f32 1.0, %v2799
    %2813 = vrot.lane.b32.xlu0 %v2810, 96
    %v2814 = vpop.permute.xlu0 %2813
    %v2816 = vmul.f32 %v2811, %v2814
    %v2817 = vmul.f32 %v2799, %v2543
    %v2818 = vadd.f32 %v2816, %v2817
    %2820 = vrot.lane.b32.xlu0 %v2818, 96
    %v2821 = vpop.permute.xlu0 %2820
    %v2822 = vsel %vm109, %v2821, 0
    %2824 = vmatprep.subr.mxu0 0.0
    %2825 = vmatpush1.msra.mxu0 %v1099
    %2826 = vmatprep.subr.mxu0 0.0
    %2827 = vmatpush1.msra.mxu0 %v1100
    %2828 = vmatprep.subr.mxu0 0.0
    %2829 = vmatpush1.msra.mxu0 %v1101
    %2830 = vmatprep.subr.mxu0 0.0
    %2831 = vmatpush1.msra.mxu0 %v1102
    %2832 = vmatprep.subr.mxu0 0.0
    %2833 = vmatpush1.msra.mxu0 0.0
    %2834 = vmatprep.subr.mxu0 0.0
    %2835 = vmatpush1.msra.mxu0 0.0
    %2836 = vmatprep.subr.mxu0 0.0
    %2837 = vmatpush1.msra.mxu0 0.0
    %2838 = vmatprep.subr.mxu0 0.0
    %2839 = vmatpush1.msra.mxu0 0.0
    %2840 = vmatprep.subr.mxu0 0.0
    %2841 = vmatpush1.msra.mxu0 0.0
    %2842 = vmatprep.subr.mxu0 0.0
    %2843 = vmatpush1.msra.mxu0 0.0
    %2844 = vmatprep.subr.mxu0 0.0
    %2845 = vmatpush1.msra.mxu0 0.0
    %2846 = vmatprep.subr.mxu0 0.0
    %2847 = vmatpush1.msra.mxu0 0.0
    %2848 = vmatprep.subr.mxu0 0.0
    %2849 = vmatpush1.msra.mxu0 0.0
    %2850 = vmatprep.subr.mxu0 0.0
    %2851 = vmatpush1.msra.mxu0 0.0
    %2852 = vmatprep.subr.mxu0 0.0
    %2853 = vmatpush1.msra.mxu0 0.0
    %2854 = vmatprep.subr.mxu0 0.0
    %2855 = vmatpush1.msra.mxu0 0.0
    %2856 = vmatprep.subr.mxu0 0.0
    %2857 = vmatpush1.msra.mxu0 0.0
    %2858 = vmatprep.subr.mxu0 0.0
    %2859 = vmatpush1.msra.mxu0 0.0
    %2860 = vmatprep.subr.mxu0 0.0
    %2861 = vmatpush1.msra.mxu0 0.0
    %2862 = vmatprep.subr.mxu0 0.0
    %2863 = vmatpush1.msra.mxu0 0.0
    %2864 = vmatprep.subr.mxu0 0.0
    %2865 = vmatpush1.msra.mxu0 0.0
    %2866 = vmatprep.subr.mxu0 0.0
    %2867 = vmatpush1.msra.mxu0 0.0
    %2868 = vmatprep.subr.mxu0 0.0
    %2869 = vmatpush1.msra.mxu0 0.0
    %2870 = vmatprep.subr.mxu0 0.0
    %2871 = vmatpush1.msra.mxu0 0.0
    %2872 = vmatprep.subr.mxu0 0.0
    %2873 = vmatpush1.msra.mxu0 0.0
    %2874 = vmatprep.subr.mxu0 0.0
    %2875 = vmatpush1.msra.mxu0 0.0
    %2876 = vmatprep.subr.mxu0 0.0
    %2877 = vmatpush1.msra.mxu0 0.0
    %2878 = vmatprep.subr.mxu0 0.0
    %2879 = vmatpush1.msra.mxu0 0.0
    %2880 = vmatprep.subr.mxu0 0.0
    %2881 = vmatpush1.msra.mxu0 0.0
    %2882 = vmatprep.subr.mxu0 0.0
    %2883 = vmatpush1.msra.mxu0 0.0
    %2884 = vmatprep.subr.mxu0 0.0
    %2885 = vmatpush1.msra.mxu0 0.0
    %2886 = vmatprep.subr.mxu0 0.0
    %2887 = vmatpush1.msra.mxu0 0.0
    %2888 = vmatprep.mubr.f32.mxu0 0.0
    %2889 = vmatmul.mubr.f32.gmra.mrb[0].mxu0 %v2822
    %v2890 = vpop.f32.mrb[0].mxu0
    %v2891 = vadd.f32 0.0, %v2890
    %v2892 = vpop.f32.mrb[0].mxu0
    %2893 = vdwg.mxu0
    %v2894 = vadd.f32 %v2720, %v2891
    %v2895 = vadd.f32 %v2894, %v1267
    %s2896 = scalar_lea.vmem [#allocation9], 48
    %2897 = vst [vmem:[%s2896] sm:$0xff] %v2895
    %v2898 = vadd.f32 %v2895, %v1273
    %2899 = vmax.xlane.f32.xlu0 %v2898
    %v2900 = vpop.xlane.xlu0 %2899
    %vm2901 = vcmp.ge.f32.partialorder %v2898, %v2900
    %v2902 = vsel %vm2901, %v1271, 128
    %v2903 = vand.u32 %v2902, 65535
    %v2904 = vshra.s32 %v2902, 16
    %v2905 = vcvt.s32.f32 %v2903
    %v2906 = vcvt.s32.f32 %v2904
    %2907 = vmin.xlane.f32.xlu0 %v2906
    %v2908 = vpop.xlane.xlu0 %2907
    %vm2909 = vcmp.eq.f32.partialorder %v2906, %v2908
    %v2910 = vsel %vm2909, %v2905, inf
    %2911 = vmin.xlane.f32.xlu0 %v2910
    %v2912 = vpop.xlane.xlu0 %2911
    %v2913 = vcvt.f32.s32 %v2912
    %v2914 = vcvt.f32.s32 %v2908
    %v2915 = vshll.u32 %v2914, 16
    %v2916 = vadd.s32 %v2915, %v2913
    %vm2917 = vcmp.eq.s32.totalorder %v1271, %v2916
    %v2918 = vsel %vm2917, 1, 0
    %v2919 = vcvt.s32.f32 %v2918
    %s2920 = sld [smem:[#allocation2 + $0x6]]
    %v2921 = vstv %s2920
    %vm2922 = vcmp.eq.s32.totalorder %v2921, 1
    %s2923 = scalar_lea.vmem %s1, 48
    %v2924 = vld [vmem:[%s2923] sm:$0xff]
    %v2925 = vsel %vm2922, %v2924, %v2919
    %2926 = vmatprep.subr.mxu0 %v1057
    %2927 = vmatpush1.msra.mxu0 %v1056
    %2928 = vmatprep.subr.mxu0 %v1059
    %2929 = vmatpush1.msra.mxu0 %v1058
    %2930 = vmatprep.subr.mxu0 %v1061
    %2931 = vmatpush1.msra.mxu0 %v1060
    %2932 = vmatprep.subr.mxu0 %v1063
    %2933 = vmatpush1.msra.mxu0 %v1062
    %2934 = vmatprep.subr.mxu0 %v1065
    %2935 = vmatpush1.msra.mxu0 %v1064
    %2936 = vmatprep.subr.mxu0 %v1067
    %2937 = vmatpush1.msra.mxu0 %v1066
    %2938 = vmatprep.subr.mxu0 %v1069
    %2939 = vmatpush1.msra.mxu0 %v1068
    %2940 = vmatprep.subr.mxu0 %v1071
    %2941 = vmatpush1.msra.mxu0 %v1070
    %2942 = vmatprep.subr.mxu0 %v1073
    %2943 = vmatpush1.msra.mxu0 %v1072
    %2944 = vmatprep.subr.mxu0 %v1075
    %2945 = vmatpush1.msra.mxu0 %v1074
    %2946 = vmatprep.subr.mxu0 %v1077
    %2947 = vmatpush1.msra.mxu0 %v1076
    %2948 = vmatprep.subr.mxu0 %v1079
    %2949 = vmatpush1.msra.mxu0 %v1078
    %2950 = vmatprep.subr.mxu0 %v1081
    %2951 = vmatpush1.msra.mxu0 %v1080
    %2952 = vmatprep.subr.mxu0 %v1083
    %2953 = vmatpush1.msra.mxu0 %v1082
    %2954 = vmatprep.subr.mxu0 %v1085
    %2955 = vmatpush1.msra.mxu0 %v1084
    %2956 = vmatprep.subr.mxu0 %v1087
    %2957 = vmatpush1.msra.mxu0 %v1086
    %2958 = vmatprep.subr.mxu0 0.0
    %2959 = vmatpush1.msra.mxu0 0.0
    %2960 = vmatprep.subr.mxu0 0.0
    %2961 = vmatpush1.msra.mxu0 0.0
    %2962 = vmatprep.subr.mxu0 0.0
    %2963 = vmatpush1.msra.mxu0 0.0
    %2964 = vmatprep.subr.mxu0 0.0
    %2965 = vmatpush1.msra.mxu0 0.0
    %2966 = vmatprep.subr.mxu0 0.0
    %2967 = vmatpush1.msra.mxu0 0.0
    %2968 = vmatprep.subr.mxu0 0.0
    %2969 = vmatpush1.msra.mxu0 0.0
    %2970 = vmatprep.subr.mxu0 0.0
    %2971 = vmatpush1.msra.mxu0 0.0
    %2972 = vmatprep.subr.mxu0 0.0
    %2973 = vmatpush1.msra.mxu0 0.0
    %2974 = vmatprep.subr.mxu0 0.0
    %2975 = vmatpush1.msra.mxu0 0.0
    %2976 = vmatprep.subr.mxu0 0.0
    %2977 = vmatpush1.msra.mxu0 0.0
    %2978 = vmatprep.subr.mxu0 0.0
    %2979 = vmatpush1.msra.mxu0 0.0
    %2980 = vmatprep.subr.mxu0 0.0
    %2981 = vmatpush1.msra.mxu0 0.0
    %2982 = vmatprep.subr.mxu0 0.0
    %2983 = vmatpush1.msra.mxu0 0.0
    %2984 = vmatprep.subr.mxu0 0.0
    %2985 = vmatpush1.msra.mxu0 0.0
    %2986 = vmatprep.subr.mxu0 0.0
    %2987 = vmatpush1.msra.mxu0 0.0
    %2988 = vmatprep.subr.mxu0 0.0
    %2989 = vmatpush1.msra.mxu0 0.0
    %2990 = vmatprep.mubr.f32.mxu0 0.0
    %2991 = vmatmul.mubr.f32.gmra.mrb[0].mxu0 %v2925
    %v2992 = vpop.f32.mrb[0].mxu0
    %v2993 = vadd.f32 0.0, %v2992
    %v2994 = vpop.f32.mrb[0].mxu0
    %v2995 = vadd.f32 0.0, %v2994
    %2996 = vdwg.mxu0
    %v2997 = vadd.f32 %v2993, %v1186
    %2998 = vmatprep.subr.mxu0 0.0
    %2999 = vmatpush1.msra.mxu0 %v1088
    %3000 = vmatprep.subr.mxu0 0.0
    %3001 = vmatpush1.msra.mxu0 %v1089
    %3002 = vmatprep.subr.mxu0 0.0
    %3003 = vmatpush1.msra.mxu0 %v1090
    %3004 = vmatprep.subr.mxu0 0.0
    %3005 = vmatpush1.msra.mxu0 %v1091
    %3006 = vmatprep.subr.mxu0 0.0
    %3007 = vmatpush1.msra.mxu0 0.0
    %3008 = vmatprep.subr.mxu0 0.0
    %3009 = vmatpush1.msra.mxu0 0.0
    %3010 = vmatprep.subr.mxu0 0.0
    %3011 = vmatpush1.msra.mxu0 0.0
    %3012 = vmatprep.subr.mxu0 0.0
    %3013 = vmatpush1.msra.mxu0 0.0
    %3014 = vmatprep.subr.mxu0 0.0
    %3015 = vmatpush1.msra.mxu0 0.0
    %3016 = vmatprep.subr.mxu0 0.0
    %3017 = vmatpush1.msra.mxu0 0.0
    %3018 = vmatprep.subr.mxu0 0.0
    %3019 = vmatpush1.msra.mxu0 0.0
    %3020 = vmatprep.subr.mxu0 0.0
    %3021 = vmatpush1.msra.mxu0 0.0
    %3022 = vmatprep.subr.mxu0 0.0
    %3023 = vmatpush1.msra.mxu0 0.0
    %3024 = vmatprep.subr.mxu0 0.0
    %3025 = vmatpush1.msra.mxu0 0.0
    %3026 = vmatprep.subr.mxu0 0.0
    %3027 = vmatpush1.msra.mxu0 0.0
    %3028 = vmatprep.subr.mxu0 0.0
    %3029 = vmatpush1.msra.mxu0 0.0
    %3030 = vmatprep.subr.mxu0 0.0
    %3031 = vmatpush1.msra.mxu0 0.0
    %3032 = vmatprep.subr.mxu0 0.0
    %3033 = vmatpush1.msra.mxu0 0.0
    %3034 = vmatprep.subr.mxu0 0.0
    %3035 = vmatpush1.msra.mxu0 0.0
    %3036 = vmatprep.subr.mxu0 0.0
    %3037 = vmatpush1.msra.mxu0 0.0
    %3038 = vmatprep.subr.mxu0 0.0
    %3039 = vmatpush1.msra.mxu0 0.0
    %3040 = vmatprep.subr.mxu0 0.0
    %3041 = vmatpush1.msra.mxu0 0.0
    %3042 = vmatprep.subr.mxu0 0.0
    %3043 = vmatpush1.msra.mxu0 0.0
    %3044 = vmatprep.subr.mxu0 0.0
    %3045 = vmatpush1.msra.mxu0 0.0
    %3046 = vmatprep.subr.mxu0 0.0
    %3047 = vmatpush1.msra.mxu0 0.0
    %3048 = vmatprep.subr.mxu0 0.0
    %3049 = vmatpush1.msra.mxu0 0.0
    %3050 = vmatprep.subr.mxu0 0.0
    %3051 = vmatpush1.msra.mxu0 0.0
    %3052 = vmatprep.subr.mxu0 0.0
    %3053 = vmatpush1.msra.mxu0 0.0
    %3054 = vmatprep.subr.mxu0 0.0
    %3055 = vmatpush1.msra.mxu0 0.0
    %3056 = vmatprep.subr.mxu0 0.0
    %3057 = vmatpush1.msra.mxu0 0.0
    %3058 = vmatprep.subr.mxu0 0.0
    %3059 = vmatpush1.msra.mxu0 0.0
    %3060 = vmatprep.subr.mxu0 0.0
    %3061 = vmatpush1.msra.mxu0 0.0
    %3062 = vmatprep.mubr.f32.mxu0 0.0
    %3063 = vmatmul.mubr.f32.gmra.mrb[0].mxu0 %v2822
    %v3064 = vpop.f32.mrb[0].mxu0
    %v3065 = vadd.f32 %v1097, %v3064
    %v3066 = vpop.f32.mrb[0].mxu0
    %3067 = vdwg.mxu0
    %v3068 = vadd.f32 %v2997, %v3065
    %v3069 = vxor.u32 %v3068, 2147483648
    %v3070 = vmul.f32 %v3069, 1.442695
    %v3071 = vpow.pop %v3070
    %v3072 = vadd.f32 %v3071, 1.0
    %v3073 = vrcp.pop %v3072
    %v3074 = vmul.f32 1.0, %v3073
    %3076 = vrot.lane.b32.xlu0 %v3065, 64
    %v3077 = vpop.permute.xlu0 %3076
    %v3079 = vmul.f32 %v3074, %v3077
    %3081 = vrot.lane.b32.xlu0 %v3079, 64
    %v3082 = vpop.permute.xlu0 %3081
    %v3084 = vadd.f32 %v2997, %v3082
    %v3085 = vtanh.pop %v3084
    %v3086 = vsub.f32 1.0, %v3074
    %3088 = vrot.lane.b32.xlu0 %v3085, 96
    %v3089 = vpop.permute.xlu0 %3088
    %v3091 = vmul.f32 %v3086, %v3089
    %v3092 = vmul.f32 %v3074, %v2818
    %v3093 = vadd.f32 %v3091, %v3092
    %3095 = vrot.lane.b32.xlu0 %v3093, 96
    %v3096 = vpop.permute.xlu0 %3095
    %v3097 = vsel %vm109, %v3096, 0
    %3099 = vmatprep.subr.mxu0 0.0
    %3100 = vmatpush1.msra.mxu0 %v1099
    %3101 = vmatprep.subr.mxu0 0.0
    %3102 = vmatpush1.msra.mxu0 %v1100
    %3103 = vmatprep.subr.mxu0 0.0
    %3104 = vmatpush1.msra.mxu0 %v1101
    %3105 = vmatprep.subr.mxu0 0.0
    %3106 = vmatpush1.msra.mxu0 %v1102
    %3107 = vmatprep.subr.mxu0 0.0
    %3108 = vmatpush1.msra.mxu0 0.0
    %3109 = vmatprep.subr.mxu0 0.0
    %3110 = vmatpush1.msra.mxu0 0.0
    %3111 = vmatprep.subr.mxu0 0.0
    %3112 = vmatpush1.msra.mxu0 0.0
    %3113 = vmatprep.subr.mxu0 0.0
    %3114 = vmatpush1.msra.mxu0 0.0
    %3115 = vmatprep.subr.mxu0 0.0
    %3116 = vmatpush1.msra.mxu0 0.0
    %3117 = vmatprep.subr.mxu0 0.0
    %3118 = vmatpush1.msra.mxu0 0.0
    %3119 = vmatprep.subr.mxu0 0.0
    %3120 = vmatpush1.msra.mxu0 0.0
    %3121 = vmatprep.subr.mxu0 0.0
    %3122 = vmatpush1.msra.mxu0 0.0
    %3123 = vmatprep.subr.mxu0 0.0
    %3124 = vmatpush1.msra.mxu0 0.0
    %3125 = vmatprep.subr.mxu0 0.0
    %3126 = vmatpush1.msra.mxu0 0.0
    %3127 = vmatprep.subr.mxu0 0.0
    %3128 = vmatpush1.msra.mxu0 0.0
    %3129 = vmatprep.subr.mxu0 0.0
    %3130 = vmatpush1.msra.mxu0 0.0
    %3131 = vmatprep.subr.mxu0 0.0
    %3132 = vmatpush1.msra.mxu0 0.0
    %3133 = vmatprep.subr.mxu0 0.0
    %3134 = vmatpush1.msra.mxu0 0.0
    %3135 = vmatprep.subr.mxu0 0.0
    %3136 = vmatpush1.msra.mxu0 0.0
    %3137 = vmatprep.subr.mxu0 0.0
    %3138 = vmatpush1.msra.mxu0 0.0
    %3139 = vmatprep.subr.mxu0 0.0
    %3140 = vmatpush1.msra.mxu0 0.0
    %3141 = vmatprep.subr.mxu0 0.0
    %3142 = vmatpush1.msra.mxu0 0.0
    %3143 = vmatprep.subr.mxu0 0.0
    %3144 = vmatpush1.msra.mxu0 0.0
    %3145 = vmatprep.subr.mxu0 0.0
    %3146 = vmatpush1.msra.mxu0 0.0
    %3147 = vmatprep.subr.mxu0 0.0
    %3148 = vmatpush1.msra.mxu0 0.0
    %3149 = vmatprep.subr.mxu0 0.0
    %3150 = vmatpush1.msra.mxu0 0.0
    %3151 = vmatprep.subr.mxu0 0.0
    %3152 = vmatpush1.msra.mxu0 0.0
    %3153 = vmatprep.subr.mxu0 0.0
    %3154 = vmatpush1.msra.mxu0 0.0
    %3155 = vmatprep.subr.mxu0 0.0
    %3156 = vmatpush1.msra.mxu0 0.0
    %3157 = vmatprep.subr.mxu0 0.0
    %3158 = vmatpush1.msra.mxu0 0.0
    %3159 = vmatprep.subr.mxu0 0.0
    %3160 = vmatpush1.msra.mxu0 0.0
    %3161 = vmatprep.subr.mxu0 0.0
    %3162 = vmatpush1.msra.mxu0 0.0
    %3163 = vmatprep.mubr.f32.mxu0 0.0
    %3164 = vmatmul.mubr.f32.gmra.mrb[0].mxu0 %v3097
    %v3165 = vpop.f32.mrb[0].mxu0
    %v3166 = vadd.f32 0.0, %v3165
    %v3167 = vpop.f32.mrb[0].mxu0
    %3168 = vdwg.mxu0
    %v3169 = vadd.f32 %v2995, %v3166
    %v3170 = vadd.f32 %v3169, %v1267
    %s3171 = scalar_lea.vmem [#allocation9], 56
    %3172 = vst [vmem:[%s3171] sm:$0xff] %v3170
    // Predicated region
    $region74: #{seq2seq_forward.1} parent=1 // pred_check
      _
    $region75: #{seq2seq_forward.1} parent=1 // pred_check_branch
      %3174 = sbr.rel (0) target = $region77
    $region76: #{seq2seq_forward.1} parent=1 // pred_region
      %s3176 = ssub.s32 1024, 1024
      %3177 = vsyncadd [#allocation4], %s3176
      %s3178 = sshll.u32 [#allocation9], 4
      %s3179 = int_to_ptr.vmem [resolvable:$true] %s3178
      %3184 = dma.vmem_to_hbm [thread:$0]  %s3179, 1024, %s15, [#allocation4], 128, 128, 8
    $region77: #{seq2seq_forward.1} parent=1 // pred_fallthru
      _
    // Predicated region
    $region78: #{seq2seq_forward.1} parent=1 // pred_check
      _
    $region79: #{seq2seq_forward.1} parent=1 // pred_check_branch
      %3186 = sbr.rel (0) target = $region81
    $region80: #{seq2seq_forward.1} parent=1 // pred_region
      %3187 = dma.done [#allocation4], 1024
    $region81: #{seq2seq_forward.1} parent=1 // pred_fallthru
      _
    %3188 = vsyncpa [#allocation3], 1
    %3189 = vsyncpa [#allocation8], 1
    %3190 = vsyncpa [#allocation4], 1
    %3191 = vsyncpa [#allocation5], 1

</llo_original>
